<compile_context>
chip_gen: v5e
topology: v5e:2x2
jax: 0.10.0
libtpu: 0.0.40
codegen_flags: <defaults>
</compile_context>

<pallas_src>
import functools
import math

import jax
import jax.numpy as jnp
from jax.experimental import pallas as pl
from jax.experimental.pallas import tpu as pltpu


# ----------------------------------------------------------------------------
# Fused Pallas kernel (one batch element per grid step)
# ----------------------------------------------------------------------------
def _fused_upblock_kernel(x_ref, skip_ref, pshuf_ref,
                          wu_ref, bu_ref, wc1_ref, bc1_ref,
                          wr1_ref, br1_ref, wr2_ref, br2_ref,
                          o_ref, *, H, W, r, bc):
    """Whole Kernel_UpBlock forward for one batch element, fully in VMEM."""
    rH, rW = H * r, W * r
    Cs = skip_ref.shape[-1]

    def pad_hw(v):
        # (h, w, c) -> (h+2, w+2, c) with a zero halo, built in VMEM.
        h, w, c = v.shape
        zc = jnp.zeros((h, 1, c), v.dtype)
        v = jnp.concatenate([zc, v, zc], axis=1)
        zr = jnp.zeros((1, w + 2, c), v.dtype)
        return jnp.concatenate([zr, v, zr], axis=0)

    def conv3x3(v, w_ref, b_ref, act):
        # 3x3 'same' conv as ONE im2col matmul on the MXU.
        # v: (h, w, c) f32  ->  (h*w, cout) f32
        h, w, c = v.shape
        vp = pad_hw(v)
        taps = [vp[dy:dy + h, dx:dx + w, :] for dy in range(3) for dx in range(3)]
        patches = jnp.concatenate(taps, axis=-1)             # (h, w, 9c)
        patches = patches.reshape(h * w, 9 * c)              # layout no-op (w % 8 == 0)
        acc = jnp.dot(patches.astype(jnp.bfloat16), w_ref[...],
                      preferred_element_type=jnp.float32)    # (h*w, cout) f32
        acc = acc + b_ref[...]
        if act == "relu":
            acc = jnp.maximum(acc, 0.0)
        elif act == "lrelu":
            acc = jnp.where(acc >= 0.0, acc, 0.1 * acc)
        return acc

    # ---- upconv: conv3x3 (+ReLU; ReLU commutes with the pixel shuffle) -----
    x = x_ref[0]                                             # (H, W, Cin)
    up = conv3x3(x, wu_ref, bu_ref, act="relu")              # (H*W, r*r*bc)

    # ---- PixelShuffle(r): exact 0/1 permutation matmul on the MXU ----------
    # (weight columns were pre-permuted to (iy, ix, c) order in the wrapper)
    u_stack = jnp.concatenate(
        [up[:, g * bc:(g + 1) * bc] for g in range(r * r)], axis=0)  # (r*r*H*W, bc)
    shuf = jnp.dot(pshuf_ref[...], u_stack,
                   preferred_element_type=jnp.float32)       # (rH*rW, bc)
    shuf3 = shuf.reshape(rH, rW, bc)                         # layout no-op (rW % 8 == 0)

    # ---- skip branch: spatial mean, broadcast only inside VMEM -------------
    sk = jnp.mean(skip_ref[0], axis=(0, 1), keepdims=True)   # (1, 1, Cs)
    skb = jnp.broadcast_to(sk, (rH, rW, Cs))
    cat = jnp.concatenate([shuf3, skb], axis=-1)             # (rH, rW, bc+Cs)

    # ---- conv_1 + LeakyReLU(0.1) --------------------------------------------
    c1 = conv3x3(cat, wc1_ref, bc1_ref, act="lrelu")         # (rH*rW, bc)

    # ---- conv_2 = ResBlock: x + conv2(lrelu(conv1(x))), res_scale = 1 -------
    r1 = conv3x3(c1.reshape(rH, rW, bc), wr1_ref, br1_ref, act="lrelu")
    r2 = conv3x3(r1.reshape(rH, rW, bc), wr2_ref, br2_ref, act="none")

    o_ref[0] = (c1 + r2).astype(o_ref.dtype)                 # (rH*rW, bc)


# ----------------------------------------------------------------------------
# Wrapper
# ----------------------------------------------------------------------------
def _pixel_shuffle_perm(H, W, r, dtype=jnp.float32):
    """0/1 matrix P (rH*rW, r*r*H*W): shuffled = P @ [U_00; U_01; ...; U_rr]."""
    N = H * W
    M = N * r * r
    rW = W * r
    p = jnp.arange(N)
    yo, xo = p // W, p % W
    cols = []
    for iy in range(r):
        for ix in range(r):
            tgt = (r * yo + iy) * rW + (r * xo + ix)                 # (N,)
            cols.append(jax.nn.one_hot(tgt, M, dtype=dtype).T)       # (M, N)
    return jnp.concatenate(cols, axis=1)                             # (M, r*r*N)


def kernel_upblock_forward(params, x_nchw, skip_nchw, upscale_factor=2):
    """Pallas implementation of Kernel_UpBlock.forward. Inputs/outputs NCHW."""
    r = upscale_factor
    x = jnp.transpose(x_nchw, (0, 2, 3, 1)).astype(jnp.float32)        # NHWC
    skip = jnp.transpose(skip_nchw, (0, 2, 3, 1)).astype(jnp.float32)  # NHWC
    B, H, W, Cin = x.shape
    Cs = skip.shape[-1]
    bc = params["up_w"].shape[-1] // (r * r)
    rH, rW = H * r, W * r
    N, M = H * W, rH * rW
    if W % 8 != 0:
        raise NotImplementedError("this Pallas implementation assumes W % 8 == 0")

    # --- pack weights for the in-kernel im2col matmuls (tiny, done in XLA) ---
    # upconv output channels are reordered from PyTorch's (c, iy, ix) to
    # (iy, ix, c) so the in-kernel shuffle uses contiguous lane slices.
    wu = params["up_w"].reshape(3, 3, Cin, bc, r, r)
    wu = jnp.transpose(wu, (0, 1, 2, 4, 5, 3)).reshape(9 * Cin, r * r * bc)
    bu = jnp.transpose(params["up_b"].reshape(bc, r, r), (1, 2, 0)).reshape(1, r * r * bc)
    wc1 = params["c1_w"].reshape(9 * (bc + Cs), bc)
    wr1 = params["rb1_w"].reshape(9 * bc, bc)
    wr2 = params["rb2_w"].reshape(9 * bc, bc)

    bf16 = jnp.bfloat16
    f32 = jnp.float32
    args = (
        x, skip, _pixel_shuffle_perm(H, W, r),
        wu.astype(bf16), bu.astype(f32),
        wc1.astype(bf16), params["c1_b"].reshape(1, bc).astype(f32),
        wr1.astype(bf16), params["rb1_b"].reshape(1, bc).astype(f32),
        wr2.astype(bf16), params["rb2_b"].reshape(1, bc).astype(f32),
    )

    def whole(*s):
        return pl.BlockSpec(s, lambda i: (0,) * len(s))

    in_specs = [
        pl.BlockSpec((1, H, W, Cin), lambda i: (i, 0, 0, 0)),
        pl.BlockSpec((1, rH, rW, Cs), lambda i: (i, 0, 0, 0)),
        whole(M, r * r * N),
        whole(9 * Cin, r * r * bc), whole(1, r * r * bc),
        whole(9 * (bc + Cs), bc), whole(1, bc),
        whole(9 * bc, bc), whole(1, bc),
        whole(9 * bc, bc), whole(1, bc),
    ]

    out = pl.pallas_call(
        functools.partial(_fused_upblock_kernel, H=H, W=W, r=r, bc=bc),
        out_shape=jax.ShapeDtypeStruct((B, M, bc), jnp.float32),
        grid_spec=pltpu.PrefetchScalarGridSpec(
            num_scalar_prefetch=0,
            grid=(B,),
            in_specs=in_specs,
            out_specs=pl.BlockSpec((1, M, bc), lambda i: (i, 0, 0)),
        ),
        compiler_params=pltpu.CompilerParams(dimension_semantics=("parallel",)),
    )(*args)

    out = out.reshape(B, rH, rW, bc)          # free metadata reshape in HBM
    return jnp.transpose(out, (0, 3, 1, 2))   # back to NCHW


# ----------------------------------------------------------------------------
# Pure-JAX reference (lax.conv, same bf16 MXU operands) for correctness check
# ----------------------------------------------------------------------------
def _conv3x3_ref(x, w, b):
    y = jax.lax.conv_general_dilated(
        x.astype(jnp.bfloat16), w.astype(jnp.bfloat16),
        window_strides=(1, 1), padding="SAME",
        dimension_numbers=("NHWC", "HWIO", "NHWC"),
        preferred_element_type=jnp.float32)
    return y + b.reshape(1, 1, 1, -1)


def reference_forward(params, x_nchw, skip_nchw, upscale_factor=2):
    r = upscale_factor
    x = jnp.transpose(x_nchw, (0, 2, 3, 1))
    skip = jnp.transpose(skip_nchw, (0, 2, 3, 1))
    B, H, W, _ = x.shape
    up = jnp.maximum(_conv3x3_ref(x, params["up_w"], params["up_b"]), 0.0)
    bc = params["up_w"].shape[-1] // (r * r)
    up = up.reshape(B, H, W, bc, r, r)
    up = jnp.transpose(up, (0, 1, 4, 2, 5, 3)).reshape(B, H * r, W * r, bc)
    sk = jnp.mean(skip, axis=(1, 2), keepdims=True)
    sk = jnp.broadcast_to(sk, (B, r * H, r * W, skip.shape[-1]))
    cat = jnp.concatenate([up, sk], axis=-1)

    def lrelu(v):
        return jnp.where(v >= 0.0, v, 0.1 * v)

    c1 = lrelu(_conv3x3_ref(cat, params["c1_w"], params["c1_b"]))
    r1 = lrelu(_conv3x3_ref(c1, params["rb1_w"], params["rb1_b"]))
    out = c1 + _conv3x3_ref(r1, params["rb2_w"], params["rb2_b"])
    return jnp.transpose(out, (0, 3, 1, 2))


# ----------------------------------------------------------------------------
# Deterministic parameter init (synthetic; mirrors shapes of the PyTorch module)
# ----------------------------------------------------------------------------
def _kaiming(key, shape, scale=1.0):
    fan_in = shape[0] * shape[1] * shape[2]     # kh * kw * Cin (HWIO layout)
    std = math.sqrt(2.0 / fan_in)
    return scale * std * jax.random.normal(key, shape, dtype=jnp.float32)


def init_params(key, channel_in, block_channels, upscale_factor=2):
    r = upscale_factor
    ks = jax.random.split(key, 6)
    return {
        # upconv conv: channel_in -> block_channels * r^2
        "up_w": _kaiming(ks[0], (3, 3, channel_in, block_channels * r * r)),
        "up_b": 0.01 * jax.random.normal(ks[1], (block_channels * r * r,), jnp.float32),
        # conv_1: (block_channels + channel_in) -> block_channels
        "c1_w": _kaiming(ks[2], (3, 3, block_channels + channel_in, block_channels)),
        "c1_b": 0.01 * jax.random.normal(ks[3], (block_channels,), jnp.float32),
        # ResBlock convs (default_init_weights scale=0.1, bias=0)
        "rb1_w": _kaiming(ks[4], (3, 3, block_channels, block_channels), scale=0.1),
        "rb1_b": jnp.zeros((block_channels,), jnp.float32),
        "rb2_w": _kaiming(ks[5], (3, 3, block_channels, block_channels), scale=0.1),
        "rb2_b": jnp.zeros((block_channels,), jnp.float32),
    }


# ----------------------------------------------------------------------------
if __name__ == "__main__":
    key = jax.random.PRNGKey(0)
    channel_in, block_channels, r = 8, 16, 2
    B, H, W = 2, 8, 8

    kp, kx, ks = jax.random.split(key, 3)
    params = init_params(kp, channel_in, block_channels, r)

    x = jax.random.normal(kx, (B, channel_in, H, W), jnp.float32)             # NCHW
    skip = jax.random.normal(ks, (B, channel_in, r * H, r * W), jnp.float32)  # NCHW

    fwd = jax.jit(functools.partial(kernel_upblock_forward, upscale_factor=r))
    out = jax.block_until_ready(fwd(params, x, skip))
    assert out.shape == (B, block_channels, r * H, r * W), out.shape

    ref = jax.block_until_ready(reference_forward(params, x, skip, upscale_factor=r))
    max_err = float(jnp.max(jnp.abs(out - ref)))
    assert jnp.allclose(out, ref, atol=1e-2, rtol=1e-2), max_err

    print("KERNEL_OK")
</pallas_src>

<mosaic_0001>
module attributes {stable_mosaic.version = 11 : i64} {
  func.func @_fused_upblock_kernel(%arg0: i32, %arg1: memref<1x8x8x8xf32, #tpu.memory_space<vmem>>, %arg2: memref<1x16x16x8xf32, #tpu.memory_space<vmem>>, %arg3: memref<256x256xf32, #tpu.memory_space<vmem>>, %arg4: memref<72x64xbf16, #tpu.memory_space<vmem>>, %arg5: memref<1x64xf32, #tpu.memory_space<vmem>>, %arg6: memref<216x16xbf16, #tpu.memory_space<vmem>>, %arg7: memref<1x16xf32, #tpu.memory_space<vmem>>, %arg8: memref<144x16xbf16, #tpu.memory_space<vmem>>, %arg9: memref<1x16xf32, #tpu.memory_space<vmem>>, %arg10: memref<144x16xbf16, #tpu.memory_space<vmem>>, %arg11: memref<1x16xf32, #tpu.memory_space<vmem>>, %arg12: memref<1x256x16xf32, #tpu.memory_space<vmem>>) attributes {dimension_semantics = [#tpu.dimension_semantics<parallel>], iteration_bounds = array<i64: 2>, scalar_prefetch = 0 : i64, scratch_operands = 0 : i64, tpu.core_type = #tpu.core_type<tc>, window_params = [{transform_indices = @transform_0, window_bounds = array<i64: 1, 8, 8, 8>}, {transform_indices = @transform_1, window_bounds = array<i64: 1, 16, 16, 8>}, {pipeline_mode = #tpu.pipeline_mode<synchronous>, transform_indices = @transform_2, window_bounds = array<i64: 256, 256>}, {pipeline_mode = #tpu.pipeline_mode<synchronous>, transform_indices = @transform_3, window_bounds = array<i64: 72, 64>}, {pipeline_mode = #tpu.pipeline_mode<synchronous>, transform_indices = @transform_4, window_bounds = array<i64: 1, 64>}, {pipeline_mode = #tpu.pipeline_mode<synchronous>, transform_indices = @transform_5, window_bounds = array<i64: 216, 16>}, {pipeline_mode = #tpu.pipeline_mode<synchronous>, transform_indices = @transform_6, window_bounds = array<i64: 1, 16>}, {pipeline_mode = #tpu.pipeline_mode<synchronous>, transform_indices = @transform_7, window_bounds = array<i64: 144, 16>}, {pipeline_mode = #tpu.pipeline_mode<synchronous>, transform_indices = @transform_8, window_bounds = array<i64: 1, 16>}, {pipeline_mode = #tpu.pipeline_mode<synchronous>, transform_indices = @transform_9, window_bounds = array<i64: 144, 16>}, {pipeline_mode = #tpu.pipeline_mode<synchronous>, transform_indices = @transform_10, window_bounds = array<i64: 1, 16>}, {transform_indices = @transform_11, window_bounds = array<i64: 1, 256, 16>}]} {
    %c0 = arith.constant 0 : index
    %c0_0 = arith.constant 0 : index
    %c0_1 = arith.constant 0 : index
    %c0_2 = arith.constant 0 : index
    %0 = vector.load %arg1[%c0, %c0_0, %c0_1, %c0_2] : memref<1x8x8x8xf32, #tpu.memory_space<vmem>>, vector<1x8x8x8xf32>
    %1 = vector.shape_cast %0 : vector<1x8x8x8xf32> to vector<8x8x8xf32>
    %cst = arith.constant 0.000000e+00 : f32
    %2 = vector.broadcast %cst : f32 to vector<8x1x8xf32>
    %3 = tpu.concatenate %2, %1, %2 in 1 : vector<8x1x8xf32>, vector<8x8x8xf32>, vector<8x1x8xf32> -> vector<8x10x8xf32>
    %cst_3 = arith.constant 0.000000e+00 : f32
    %4 = vector.broadcast %cst_3 : f32 to vector<1x10x8xf32>
    %5 = tpu.concatenate %4, %3, %4 in 0 : vector<1x10x8xf32>, vector<8x10x8xf32>, vector<1x10x8xf32> -> vector<10x10x8xf32>
    %6 = vector.extract_strided_slice %5 {offsets = [0, 0, 0], sizes = [8, 8, 8], strides = [1, 1, 1]} : vector<10x10x8xf32> to vector<8x8x8xf32>
    %7 = vector.extract_strided_slice %5 {offsets = [0, 1, 0], sizes = [8, 8, 8], strides = [1, 1, 1]} : vector<10x10x8xf32> to vector<8x8x8xf32>
    %8 = vector.extract_strided_slice %5 {offsets = [0, 2, 0], sizes = [8, 8, 8], strides = [1, 1, 1]} : vector<10x10x8xf32> to vector<8x8x8xf32>
    %9 = vector.extract_strided_slice %5 {offsets = [1, 0, 0], sizes = [8, 8, 8], strides = [1, 1, 1]} : vector<10x10x8xf32> to vector<8x8x8xf32>
    %10 = vector.extract_strided_slice %5 {offsets = [1, 1, 0], sizes = [8, 8, 8], strides = [1, 1, 1]} : vector<10x10x8xf32> to vector<8x8x8xf32>
    %11 = vector.extract_strided_slice %5 {offsets = [1, 2, 0], sizes = [8, 8, 8], strides = [1, 1, 1]} : vector<10x10x8xf32> to vector<8x8x8xf32>
    %12 = vector.extract_strided_slice %5 {offsets = [2, 0, 0], sizes = [8, 8, 8], strides = [1, 1, 1]} : vector<10x10x8xf32> to vector<8x8x8xf32>
    %13 = vector.extract_strided_slice %5 {offsets = [2, 1, 0], sizes = [8, 8, 8], strides = [1, 1, 1]} : vector<10x10x8xf32> to vector<8x8x8xf32>
    %14 = vector.extract_strided_slice %5 {offsets = [2, 2, 0], sizes = [8, 8, 8], strides = [1, 1, 1]} : vector<10x10x8xf32> to vector<8x8x8xf32>
    %15 = tpu.concatenate %6, %7, %8, %9, %10, %11, %12, %13, %14 in 2 : vector<8x8x8xf32>, vector<8x8x8xf32>, vector<8x8x8xf32>, vector<8x8x8xf32>, vector<8x8x8xf32>, vector<8x8x8xf32>, vector<8x8x8xf32>, vector<8x8x8xf32>, vector<8x8x8xf32> -> vector<8x8x72xf32>
    %16 = vector.shape_cast %15 : vector<8x8x72xf32> to vector<64x72xf32>
    %17 = arith.truncf %16 : vector<64x72xf32> to vector<64x72xbf16>
    %c0_4 = arith.constant 0 : index
    %c0_5 = arith.constant 0 : index
    %18 = vector.load %arg4[%c0_4, %c0_5] : memref<72x64xbf16, #tpu.memory_space<vmem>>, vector<72x64xbf16>
    %cst_6 = arith.constant dense<0.000000e+00> : vector<64x64xf32>
    %19 = tpu.matmul %17, %18, %cst_6 {dimension_numbers = #tpu.dot_dimension_numbers<[1], [0], [0], [1], [0, 0, 1, 1], [], []>} : vector<64x72xbf16>, vector<72x64xbf16>, vector<64x64xf32> -> vector<64x64xf32>
    %c0_7 = arith.constant 0 : index
    %c0_8 = arith.constant 0 : index
    %20 = vector.load %arg5[%c0_7, %c0_8] : memref<1x64xf32, #tpu.memory_space<vmem>>, vector<1x64xf32>
    %21 = vector.broadcast %20 : vector<1x64xf32> to vector<64x64xf32>
    %22 = arith.addf %19, %21 : vector<64x64xf32>
    %cst_9 = arith.constant 0.000000e+00 : f32
    %23 = vector.broadcast %cst_9 : f32 to vector<64x64xf32>
    %24 = arith.maximumf %22, %23 : vector<64x64xf32>
    %25 = vector.extract_strided_slice %24 {offsets = [0, 0], sizes = [64, 16], strides = [1, 1]} : vector<64x64xf32> to vector<64x16xf32>
    %26 = vector.extract_strided_slice %24 {offsets = [0, 16], sizes = [64, 16], strides = [1, 1]} : vector<64x64xf32> to vector<64x16xf32>
    %27 = vector.extract_strided_slice %24 {offsets = [0, 32], sizes = [64, 16], strides = [1, 1]} : vector<64x64xf32> to vector<64x16xf32>
    %28 = vector.extract_strided_slice %24 {offsets = [0, 48], sizes = [64, 16], strides = [1, 1]} : vector<64x64xf32> to vector<64x16xf32>
    %29 = tpu.concatenate %25, %26, %27, %28 in 0 : vector<64x16xf32>, vector<64x16xf32>, vector<64x16xf32>, vector<64x16xf32> -> vector<256x16xf32>
    %c0_10 = arith.constant 0 : index
    %c0_11 = arith.constant 0 : index
    %30 = vector.load %arg3[%c0_10, %c0_11] : memref<256x256xf32, #tpu.memory_space<vmem>>, vector<256x256xf32>
    %cst_12 = arith.constant dense<0.000000e+00> : vector<256x16xf32>
    %31 = tpu.matmul %30, %29, %cst_12 {dimension_numbers = #tpu.dot_dimension_numbers<[1], [0], [0], [1], [0, 0, 1, 1], [], []>} : vector<256x256xf32>, vector<256x16xf32>, vector<256x16xf32> -> vector<256x16xf32>
    %32 = vector.shape_cast %31 : vector<256x16xf32> to vector<16x16x16xf32>
    %c0_13 = arith.constant 0 : index
    %c0_14 = arith.constant 0 : index
    %c0_15 = arith.constant 0 : index
    %c0_16 = arith.constant 0 : index
    %33 = vector.load %arg2[%c0_13, %c0_14, %c0_15, %c0_16] : memref<1x16x16x8xf32, #tpu.memory_space<vmem>>, vector<1x16x16x8xf32>
    %34 = vector.shape_cast %33 : vector<1x16x16x8xf32> to vector<16x16x8xf32>
    %cst_17 = arith.constant dense<0.000000e+00> : vector<8xf32>
    %35 = vector.multi_reduction <add>, %34, %cst_17 [0, 1] : vector<16x16x8xf32> to vector<8xf32>
    %36 = vector.shape_cast %35 : vector<8xf32> to vector<1x1x8xf32>
    %cst_18 = arith.constant 2.560000e+02 : f32
    %37 = vector.broadcast %cst_18 : f32 to vector<1x1x8xf32>
    %38 = arith.divf %36, %37 : vector<1x1x8xf32>
    %39 = vector.shape_cast %38 : vector<1x1x8xf32> to vector<1x1x8xf32>
    %40 = vector.broadcast %39 : vector<1x1x8xf32> to vector<16x16x8xf32>
    %41 = tpu.concatenate %32, %40 in 2 : vector<16x16x16xf32>, vector<16x16x8xf32> -> vector<16x16x24xf32>
    %cst_19 = arith.constant 0.000000e+00 : f32
    %42 = vector.broadcast %cst_19 : f32 to vector<16x1x24xf32>
    %43 = tpu.concatenate %42, %41, %42 in 1 : vector<16x1x24xf32>, vector<16x16x24xf32>, vector<16x1x24xf32> -> vector<16x18x24xf32>
    %cst_20 = arith.constant 0.000000e+00 : f32
    %44 = vector.broadcast %cst_20 : f32 to vector<1x18x24xf32>
    %45 = tpu.concatenate %44, %43, %44 in 0 : vector<1x18x24xf32>, vector<16x18x24xf32>, vector<1x18x24xf32> -> vector<18x18x24xf32>
    %46 = vector.extract_strided_slice %45 {offsets = [0, 0, 0], sizes = [16, 16, 24], strides = [1, 1, 1]} : vector<18x18x24xf32> to vector<16x16x24xf32>
    %47 = vector.extract_strided_slice %45 {offsets = [0, 1, 0], sizes = [16, 16, 24], strides = [1, 1, 1]} : vector<18x18x24xf32> to vector<16x16x24xf32>
    %48 = vector.extract_strided_slice %45 {offsets = [0, 2, 0], sizes = [16, 16, 24], strides = [1, 1, 1]} : vector<18x18x24xf32> to vector<16x16x24xf32>
    %49 = vector.extract_strided_slice %45 {offsets = [1, 0, 0], sizes = [16, 16, 24], strides = [1, 1, 1]} : vector<18x18x24xf32> to vector<16x16x24xf32>
    %50 = vector.extract_strided_slice %45 {offsets = [1, 1, 0], sizes = [16, 16, 24], strides = [1, 1, 1]} : vector<18x18x24xf32> to vector<16x16x24xf32>
    %51 = vector.extract_strided_slice %45 {offsets = [1, 2, 0], sizes = [16, 16, 24], strides = [1, 1, 1]} : vector<18x18x24xf32> to vector<16x16x24xf32>
    %52 = vector.extract_strided_slice %45 {offsets = [2, 0, 0], sizes = [16, 16, 24], strides = [1, 1, 1]} : vector<18x18x24xf32> to vector<16x16x24xf32>
    %53 = vector.extract_strided_slice %45 {offsets = [2, 1, 0], sizes = [16, 16, 24], strides = [1, 1, 1]} : vector<18x18x24xf32> to vector<16x16x24xf32>
    %54 = vector.extract_strided_slice %45 {offsets = [2, 2, 0], sizes = [16, 16, 24], strides = [1, 1, 1]} : vector<18x18x24xf32> to vector<16x16x24xf32>
    %55 = tpu.concatenate %46, %47, %48, %49, %50, %51, %52, %53, %54 in 2 : vector<16x16x24xf32>, vector<16x16x24xf32>, vector<16x16x24xf32>, vector<16x16x24xf32>, vector<16x16x24xf32>, vector<16x16x24xf32>, vector<16x16x24xf32>, vector<16x16x24xf32>, vector<16x16x24xf32> -> vector<16x16x216xf32>
    %56 = vector.shape_cast %55 : vector<16x16x216xf32> to vector<256x216xf32>
    %57 = arith.truncf %56 : vector<256x216xf32> to vector<256x216xbf16>
    %c0_21 = arith.constant 0 : index
    %c0_22 = arith.constant 0 : index
    %58 = vector.load %arg6[%c0_21, %c0_22] : memref<216x16xbf16, #tpu.memory_space<vmem>>, vector<216x16xbf16>
    %cst_23 = arith.constant dense<0.000000e+00> : vector<256x16xf32>
    %59 = tpu.matmul %57, %58, %cst_23 {dimension_numbers = #tpu.dot_dimension_numbers<[1], [0], [0], [1], [0, 0, 1, 1], [], []>} : vector<256x216xbf16>, vector<216x16xbf16>, vector<256x16xf32> -> vector<256x16xf32>
    %c0_24 = arith.constant 0 : index
    %c0_25 = arith.constant 0 : index
    %60 = vector.load %arg7[%c0_24, %c0_25] : memref<1x16xf32, #tpu.memory_space<vmem>>, vector<1x16xf32>
    %61 = vector.broadcast %60 : vector<1x16xf32> to vector<256x16xf32>
    %62 = arith.addf %59, %61 : vector<256x16xf32>
    %cst_26 = arith.constant 0.000000e+00 : f32
    %63 = vector.broadcast %cst_26 : f32 to vector<256x16xf32>
    %64 = arith.cmpf oge, %62, %63 : vector<256x16xf32>
    %cst_27 = arith.constant 1.000000e-01 : f32
    %65 = vector.broadcast %cst_27 : f32 to vector<256x16xf32>
    %66 = arith.mulf %65, %62 : vector<256x16xf32>
    %67 = arith.select %64, %62, %66 : vector<256x16xi1>, vector<256x16xf32>
    %68 = vector.shape_cast %67 : vector<256x16xf32> to vector<16x16x16xf32>
    %cst_28 = arith.constant 0.000000e+00 : f32
    %69 = vector.broadcast %cst_28 : f32 to vector<16x1x16xf32>
    %70 = tpu.concatenate %69, %68, %69 in 1 : vector<16x1x16xf32>, vector<16x16x16xf32>, vector<16x1x16xf32> -> vector<16x18x16xf32>
    %cst_29 = arith.constant 0.000000e+00 : f32
    %71 = vector.broadcast %cst_29 : f32 to vector<1x18x16xf32>
    %72 = tpu.concatenate %71, %70, %71 in 0 : vector<1x18x16xf32>, vector<16x18x16xf32>, vector<1x18x16xf32> -> vector<18x18x16xf32>
    %73 = vector.extract_strided_slice %72 {offsets = [0, 0, 0], sizes = [16, 16, 16], strides = [1, 1, 1]} : vector<18x18x16xf32> to vector<16x16x16xf32>
    %74 = vector.extract_strided_slice %72 {offsets = [0, 1, 0], sizes = [16, 16, 16], strides = [1, 1, 1]} : vector<18x18x16xf32> to vector<16x16x16xf32>
    %75 = vector.extract_strided_slice %72 {offsets = [0, 2, 0], sizes = [16, 16, 16], strides = [1, 1, 1]} : vector<18x18x16xf32> to vector<16x16x16xf32>
    %76 = vector.extract_strided_slice %72 {offsets = [1, 0, 0], sizes = [16, 16, 16], strides = [1, 1, 1]} : vector<18x18x16xf32> to vector<16x16x16xf32>
    %77 = vector.extract_strided_slice %72 {offsets = [1, 1, 0], sizes = [16, 16, 16], strides = [1, 1, 1]} : vector<18x18x16xf32> to vector<16x16x16xf32>
    %78 = vector.extract_strided_slice %72 {offsets = [1, 2, 0], sizes = [16, 16, 16], strides = [1, 1, 1]} : vector<18x18x16xf32> to vector<16x16x16xf32>
    %79 = vector.extract_strided_slice %72 {offsets = [2, 0, 0], sizes = [16, 16, 16], strides = [1, 1, 1]} : vector<18x18x16xf32> to vector<16x16x16xf32>
    %80 = vector.extract_strided_slice %72 {offsets = [2, 1, 0], sizes = [16, 16, 16], strides = [1, 1, 1]} : vector<18x18x16xf32> to vector<16x16x16xf32>
    %81 = vector.extract_strided_slice %72 {offsets = [2, 2, 0], sizes = [16, 16, 16], strides = [1, 1, 1]} : vector<18x18x16xf32> to vector<16x16x16xf32>
    %82 = tpu.concatenate %73, %74, %75, %76, %77, %78, %79, %80, %81 in 2 : vector<16x16x16xf32>, vector<16x16x16xf32>, vector<16x16x16xf32>, vector<16x16x16xf32>, vector<16x16x16xf32>, vector<16x16x16xf32>, vector<16x16x16xf32>, vector<16x16x16xf32>, vector<16x16x16xf32> -> vector<16x16x144xf32>
    %83 = vector.shape_cast %82 : vector<16x16x144xf32> to vector<256x144xf32>
    %84 = arith.truncf %83 : vector<256x144xf32> to vector<256x144xbf16>
    %c0_30 = arith.constant 0 : index
    %c0_31 = arith.constant 0 : index
    %85 = vector.load %arg8[%c0_30, %c0_31] : memref<144x16xbf16, #tpu.memory_space<vmem>>, vector<144x16xbf16>
    %cst_32 = arith.constant dense<0.000000e+00> : vector<256x16xf32>
    %86 = tpu.matmul %84, %85, %cst_32 {dimension_numbers = #tpu.dot_dimension_numbers<[1], [0], [0], [1], [0, 0, 1, 1], [], []>} : vector<256x144xbf16>, vector<144x16xbf16>, vector<256x16xf32> -> vector<256x16xf32>
    %c0_33 = arith.constant 0 : index
    %c0_34 = arith.constant 0 : index
    %87 = vector.load %arg9[%c0_33, %c0_34] : memref<1x16xf32, #tpu.memory_space<vmem>>, vector<1x16xf32>
    %88 = vector.broadcast %87 : vector<1x16xf32> to vector<256x16xf32>
    %89 = arith.addf %86, %88 : vector<256x16xf32>
    %cst_35 = arith.constant 0.000000e+00 : f32
    %90 = vector.broadcast %cst_35 : f32 to vector<256x16xf32>
    %91 = arith.cmpf oge, %89, %90 : vector<256x16xf32>
    %cst_36 = arith.constant 1.000000e-01 : f32
    %92 = vector.broadcast %cst_36 : f32 to vector<256x16xf32>
    %93 = arith.mulf %92, %89 : vector<256x16xf32>
    %94 = arith.select %91, %89, %93 : vector<256x16xi1>, vector<256x16xf32>
    %95 = vector.shape_cast %94 : vector<256x16xf32> to vector<16x16x16xf32>
    %cst_37 = arith.constant 0.000000e+00 : f32
    %96 = vector.broadcast %cst_37 : f32 to vector<16x1x16xf32>
    %97 = tpu.concatenate %96, %95, %96 in 1 : vector<16x1x16xf32>, vector<16x16x16xf32>, vector<16x1x16xf32> -> vector<16x18x16xf32>
    %cst_38 = arith.constant 0.000000e+00 : f32
    %98 = vector.broadcast %cst_38 : f32 to vector<1x18x16xf32>
    %99 = tpu.concatenate %98, %97, %98 in 0 : vector<1x18x16xf32>, vector<16x18x16xf32>, vector<1x18x16xf32> -> vector<18x18x16xf32>
    %100 = vector.extract_strided_slice %99 {offsets = [0, 0, 0], sizes = [16, 16, 16], strides = [1, 1, 1]} : vector<18x18x16xf32> to vector<16x16x16xf32>
    %101 = vector.extract_strided_slice %99 {offsets = [0, 1, 0], sizes = [16, 16, 16], strides = [1, 1, 1]} : vector<18x18x16xf32> to vector<16x16x16xf32>
    %102 = vector.extract_strided_slice %99 {offsets = [0, 2, 0], sizes = [16, 16, 16], strides = [1, 1, 1]} : vector<18x18x16xf32> to vector<16x16x16xf32>
    %103 = vector.extract_strided_slice %99 {offsets = [1, 0, 0], sizes = [16, 16, 16], strides = [1, 1, 1]} : vector<18x18x16xf32> to vector<16x16x16xf32>
    %104 = vector.extract_strided_slice %99 {offsets = [1, 1, 0], sizes = [16, 16, 16], strides = [1, 1, 1]} : vector<18x18x16xf32> to vector<16x16x16xf32>
    %105 = vector.extract_strided_slice %99 {offsets = [1, 2, 0], sizes = [16, 16, 16], strides = [1, 1, 1]} : vector<18x18x16xf32> to vector<16x16x16xf32>
    %106 = vector.extract_strided_slice %99 {offsets = [2, 0, 0], sizes = [16, 16, 16], strides = [1, 1, 1]} : vector<18x18x16xf32> to vector<16x16x16xf32>
    %107 = vector.extract_strided_slice %99 {offsets = [2, 1, 0], sizes = [16, 16, 16], strides = [1, 1, 1]} : vector<18x18x16xf32> to vector<16x16x16xf32>
    %108 = vector.extract_strided_slice %99 {offsets = [2, 2, 0], sizes = [16, 16, 16], strides = [1, 1, 1]} : vector<18x18x16xf32> to vector<16x16x16xf32>
    %109 = tpu.concatenate %100, %101, %102, %103, %104, %105, %106, %107, %108 in 2 : vector<16x16x16xf32>, vector<16x16x16xf32>, vector<16x16x16xf32>, vector<16x16x16xf32>, vector<16x16x16xf32>, vector<16x16x16xf32>, vector<16x16x16xf32>, vector<16x16x16xf32>, vector<16x16x16xf32> -> vector<16x16x144xf32>
    %110 = vector.shape_cast %109 : vector<16x16x144xf32> to vector<256x144xf32>
    %111 = arith.truncf %110 : vector<256x144xf32> to vector<256x144xbf16>
    %c0_39 = arith.constant 0 : index
    %c0_40 = arith.constant 0 : index
    %112 = vector.load %arg10[%c0_39, %c0_40] : memref<144x16xbf16, #tpu.memory_space<vmem>>, vector<144x16xbf16>
    %cst_41 = arith.constant dense<0.000000e+00> : vector<256x16xf32>
    %113 = tpu.matmul %111, %112, %cst_41 {dimension_numbers = #tpu.dot_dimension_numbers<[1], [0], [0], [1], [0, 0, 1, 1], [], []>} : vector<256x144xbf16>, vector<144x16xbf16>, vector<256x16xf32> -> vector<256x16xf32>
    %c0_42 = arith.constant 0 : index
    %c0_43 = arith.constant 0 : index
    %114 = vector.load %arg11[%c0_42, %c0_43] : memref<1x16xf32, #tpu.memory_space<vmem>>, vector<1x16xf32>
    %115 = vector.broadcast %114 : vector<1x16xf32> to vector<256x16xf32>
    %116 = arith.addf %113, %115 : vector<256x16xf32>
    %117 = arith.addf %67, %116 : vector<256x16xf32>
    %c0_44 = arith.constant 0 : index
    %c0_45 = arith.constant 0 : index
    %c0_46 = arith.constant 0 : index
    %118 = vector.load %arg12[%c0_44, %c0_45, %c0_46] : memref<1x256x16xf32, #tpu.memory_space<vmem>>, vector<1x256x16xf32>
    %119 = vector.shape_cast %118 : vector<1x256x16xf32> to vector<256x16xf32>
    %120 = vector.shape_cast %117 : vector<256x16xf32> to vector<1x256x16xf32>
    tpu.vector_store %arg12[%c0_44, %c0_45, %c0_46], %120 {strides = array<i32>} : memref<1x256x16xf32, #tpu.memory_space<vmem>>, vector<1x256x16xf32>,
    return
  }
  func.func @transform_0(%arg0: i32) -> (i32, i32, i32, i32) {
    %c0_i32 = arith.constant 0 : i32
    %c0_i32_0 = arith.constant 0 : i32
    %c0_i32_1 = arith.constant 0 : i32
    %c0_i32_2 = arith.constant 0 : i32
    return %arg0, %c0_i32, %c0_i32_0, %c0_i32_1 : i32, i32, i32, i32
  }
  func.func @transform_1(%arg0: i32) -> (i32, i32, i32, i32) {
    %c0_i32 = arith.constant 0 : i32
    %c0_i32_0 = arith.constant 0 : i32
    %c0_i32_1 = arith.constant 0 : i32
    %c0_i32_2 = arith.constant 0 : i32
    return %arg0, %c0_i32, %c0_i32_0, %c0_i32_1 : i32, i32, i32, i32
  }
  func.func @transform_2(%arg0: i32) -> (i32, i32) {
    %c0_i32 = arith.constant 0 : i32
    %c0_i32_0 = arith.constant 0 : i32
    %c0_i32_1 = arith.constant 0 : i32
    return %c0_i32, %c0_i32_0 : i32, i32
  }
  func.func @transform_3(%arg0: i32) -> (i32, i32) {
    %c0_i32 = arith.constant 0 : i32
    %c0_i32_0 = arith.constant 0 : i32
    %c0_i32_1 = arith.constant 0 : i32
    return %c0_i32, %c0_i32_0 : i32, i32
  }
  func.func @transform_4(%arg0: i32) -> (i32, i32) {
    %c0_i32 = arith.constant 0 : i32
    %c0_i32_0 = arith.constant 0 : i32
    %c0_i32_1 = arith.constant 0 : i32
    return %c0_i32, %c0_i32_0 : i32, i32
  }
  func.func @transform_5(%arg0: i32) -> (i32, i32) {
    %c0_i32 = arith.constant 0 : i32
    %c0_i32_0 = arith.constant 0 : i32
    %c0_i32_1 = arith.constant 0 : i32
    return %c0_i32, %c0_i32_0 : i32, i32
  }
  func.func @transform_6(%arg0: i32) -> (i32, i32) {
    %c0_i32 = arith.constant 0 : i32
    %c0_i32_0 = arith.constant 0 : i32
    %c0_i32_1 = arith.constant 0 : i32
    return %c0_i32, %c0_i32_0 : i32, i32
  }
  func.func @transform_7(%arg0: i32) -> (i32, i32) {
    %c0_i32 = arith.constant 0 : i32
    %c0_i32_0 = arith.constant 0 : i32
    %c0_i32_1 = arith.constant 0 : i32
    return %c0_i32, %c0_i32_0 : i32, i32
  }
  func.func @transform_8(%arg0: i32) -> (i32, i32) {
    %c0_i32 = arith.constant 0 : i32
    %c0_i32_0 = arith.constant 0 : i32
    %c0_i32_1 = arith.constant 0 : i32
    return %c0_i32, %c0_i32_0 : i32, i32
  }
  func.func @transform_9(%arg0: i32) -> (i32, i32) {
    %c0_i32 = arith.constant 0 : i32
    %c0_i32_0 = arith.constant 0 : i32
    %c0_i32_1 = arith.constant 0 : i32
    return %c0_i32, %c0_i32_0 : i32, i32
  }
  func.func @transform_10(%arg0: i32) -> (i32, i32) {
    %c0_i32 = arith.constant 0 : i32
    %c0_i32_0 = arith.constant 0 : i32
    %c0_i32_1 = arith.constant 0 : i32
    return %c0_i32, %c0_i32_0 : i32, i32
  }
  func.func @transform_11(%arg0: i32) -> (i32, i32, i32) {
    %c0_i32 = arith.constant 0 : i32
    %c0_i32_0 = arith.constant 0 : i32
    %c0_i32_1 = arith.constant 0 : i32
    return %arg0, %c0_i32, %c0_i32_0 : i32, i32, i32
  }
}

</mosaic_0001>

<llo_original>
// kernel: kernel_upblock_forward.1
$region0: #{kernel_upblock_forward.1}
  #allocation0 [shape = 'u32[]', space=smem, size = 0x4, offset = 0x4, fixed_abs, tag = 'smem constant byte address 0x4 - core index']
  #allocation1 [shape = 'u32[72,128]{1,0:T(1,128)}', space=vmem, size = 0x9000, scoped, tag = 'internal scratch']
  %s0 = inlined_call_operand.vmem [shape: f32[2,8,8,8], index: 0, kind: input, shape index: {}]
  %s1 = inlined_call_operand.vmem [shape: f32[2,16,16,8], index: 1, kind: input, shape index: {}]
  %s2 = inlined_call_operand.vmem [shape: f32[256,256], index: 2, kind: input, shape index: {}]
  %s3 = inlined_call_operand.vmem [shape: bf16[72,64], index: 3, kind: input, shape index: {}]
  %s4 = inlined_call_operand.vmem [shape: f32[1,64], index: 4, kind: input, shape index: {}]
  %s5 = inlined_call_operand.vmem [shape: bf16[216,16], index: 5, kind: input, shape index: {}]
  %s6 = inlined_call_operand.vmem [shape: f32[1,16], index: 6, kind: input, shape index: {}]
  %s7 = inlined_call_operand.vmem [shape: bf16[144,16], index: 7, kind: input, shape index: {}]
  %s8 = inlined_call_operand.vmem [shape: f32[1,16], index: 8, kind: input, shape index: {}]
  %s9 = inlined_call_operand.vmem [shape: bf16[144,16], index: 9, kind: input, shape index: {}]
  %s10 = inlined_call_operand.vmem [shape: f32[1,16], index: 10, kind: input, shape index: {}]
  %s11 = inlined_call_operand.vmem [shape: f32[2,256,16], index: 11, kind: output, shape index: {}]
  %s12 = sld [smem:[#allocation0]]
  $region77: #{kernel_upblock_forward.1} parent=0
    _
  %s14 = ssub.s32 1, %s12
  %s15 = scalar_select 0, %s14, %s12
  loop: start=0, step=1, limit=4
  $region2: #{kernel_upblock_forward.1} parent=0 // loop_pre_header
    _
  $region3: #{kernel_upblock_forward.1} parent=0 // loop_header
    %s17 = sphi 0, %s21
    %p18 = scmp.ge.s32.totalorder %s17, 4
    %s27 = sphi 0, %s29
    %s30 = sphi 0, %s27
    %s31 = sphi 0, %s30
    %s47 = sphi 0, %s31
    %s53 = sphi 0, %s55
    %s56 = sphi 0, %s53
    %s57 = sphi 0, %s56
    %s73 = sphi 0, %s57
    %s77 = sphi 0, %s77
    %s79 = sphi 0, %s77
    %s80 = sphi 0, %s79
    %s94 = sphi 0, %s80
    %s98 = sphi 0, %s98
    %s100 = sphi 0, %s98
    %s101 = sphi 0, %s100
    %s115 = sphi 0, %s101
    %s119 = sphi 0, %s119
    %s121 = sphi 0, %s119
    %s122 = sphi 0, %s121
    %s136 = sphi 0, %s122
    %s140 = sphi 0, %s140
    %s142 = sphi 0, %s140
    %s143 = sphi 0, %s142
    %s157 = sphi 0, %s143
    %s161 = sphi 0, %s161
    %s163 = sphi 0, %s161
    %s164 = sphi 0, %s163
    %s178 = sphi 0, %s164
    %s182 = sphi 0, %s182
    %s184 = sphi 0, %s182
    %s185 = sphi 0, %s184
    %s199 = sphi 0, %s185
    %s203 = sphi 0, %s203
    %s205 = sphi 0, %s203
    %s206 = sphi 0, %s205
    %s220 = sphi 0, %s206
    %s224 = sphi 0, %s224
    %s226 = sphi 0, %s224
    %s227 = sphi 0, %s226
    %s241 = sphi 0, %s227
    %s245 = sphi 0, %s245
    %s247 = sphi 0, %s245
    %s248 = sphi 0, %s247
    %s262 = sphi 0, %s248
    %s268 = sphi 0, %s270
    %s271 = sphi 0, %s268
    %s272 = sphi 0, %s271
    %s288 = sphi 0, %s272
  $region4: #{kernel_upblock_forward.1} parent=0 // loop_header_branch
    %20 = sbr.rel (%p18) target = $region8
  $region5: #{kernel_upblock_forward.1} parent=0 // loop_body
    %s22 = ssub.s32 %s17, 1
    %s23 = ssub.s32 %s17, 2
    %s24 = sadd.s32 %s17, 1
    %s25 = ssub.s32 %s17, %s24
    %p26 = scmp.eq.s32.totalorder %s25, 0
    %s28 = sadd.s32 %s27, 1
    %s29 = scalar_select %p26, %s27, %s28
    %p32 = pneg %p26
    %p33 = scmp.eq.s32.totalorder %s17, 1
    %p34 = por %p32, %p33
    %p35 = scmp.ne.s32.totalorder %s27, %s30
    %p36 = scmp.eq.s32.totalorder %s17, 0
    %p37 = por %p35, %p36
    %p38 = scmp.ne.s32.totalorder %s27, %s30
    %p39 = scmp.eq.s32.totalorder %s22, 1
    %p40 = por %p38, %p39
    %p41 = scmp.ne.s32.totalorder %s30, %s31
    %p42 = scmp.eq.s32.totalorder %s22, 0
    %p43 = por %p41, %p42
    %p44 = scmp.ne.s32.totalorder %s30, %s31
    %p45 = scmp.eq.s32.totalorder %s23, 1
    %p46 = por %p44, %p45
    %p48 = scmp.ne.s32.totalorder %s31, %s47
    %p49 = scmp.eq.s32.totalorder %s23, 0
    %p50 = por %p48, %p49
    %s51 = ssub.s32 %s17, %s24
    %p52 = scmp.eq.s32.totalorder %s51, 0
    %s54 = sadd.s32 %s53, 1
    %s55 = scalar_select %p52, %s53, %s54
    %p58 = pneg %p52
    %p59 = scmp.eq.s32.totalorder %s17, 1
    %p60 = por %p58, %p59
    %p61 = scmp.ne.s32.totalorder %s53, %s56
    %p62 = scmp.eq.s32.totalorder %s17, 0
    %p63 = por %p61, %p62
    %p64 = scmp.ne.s32.totalorder %s53, %s56
    %p65 = scmp.eq.s32.totalorder %s22, 1
    %p66 = por %p64, %p65
    %p67 = scmp.ne.s32.totalorder %s56, %s57
    %p68 = scmp.eq.s32.totalorder %s22, 0
    %p69 = por %p67, %p68
    %p70 = scmp.ne.s32.totalorder %s56, %s57
    %p71 = scmp.eq.s32.totalorder %s23, 1
    %p72 = por %p70, %p71
    %p74 = scmp.ne.s32.totalorder %s57, %s73
    %p75 = scmp.eq.s32.totalorder %s23, 0
    %p76 = por %p74, %p75
    %s78 = sadd.s32 %s77, 1
    %p81 = scmp.eq.s32.totalorder %s17, 1
    %p82 = scmp.ne.s32.totalorder %s77, %s79
    %p83 = scmp.eq.s32.totalorder %s17, 0
    %p84 = por %p82, %p83
    %p85 = scmp.ne.s32.totalorder %s77, %s79
    %p86 = scmp.eq.s32.totalorder %s22, 1
    %p87 = por %p85, %p86
    %p88 = scmp.ne.s32.totalorder %s79, %s80
    %p89 = scmp.eq.s32.totalorder %s22, 0
    %p90 = por %p88, %p89
    %p91 = scmp.ne.s32.totalorder %s79, %s80
    %p92 = scmp.eq.s32.totalorder %s23, 1
    %p93 = por %p91, %p92
    %p95 = scmp.ne.s32.totalorder %s80, %s94
    %p96 = scmp.eq.s32.totalorder %s23, 0
    %p97 = por %p95, %p96
    %s99 = sadd.s32 %s98, 1
    %p102 = scmp.eq.s32.totalorder %s17, 1
    %p103 = scmp.ne.s32.totalorder %s98, %s100
    %p104 = scmp.eq.s32.totalorder %s17, 0
    %p105 = por %p103, %p104
    %p106 = scmp.ne.s32.totalorder %s98, %s100
    %p107 = scmp.eq.s32.totalorder %s22, 1
    %p108 = por %p106, %p107
    %p109 = scmp.ne.s32.totalorder %s100, %s101
    %p110 = scmp.eq.s32.totalorder %s22, 0
    %p111 = por %p109, %p110
    %p112 = scmp.ne.s32.totalorder %s100, %s101
    %p113 = scmp.eq.s32.totalorder %s23, 1
    %p114 = por %p112, %p113
    %p116 = scmp.ne.s32.totalorder %s101, %s115
    %p117 = scmp.eq.s32.totalorder %s23, 0
    %p118 = por %p116, %p117
    %s120 = sadd.s32 %s119, 1
    %p123 = scmp.eq.s32.totalorder %s17, 1
    %p124 = scmp.ne.s32.totalorder %s119, %s121
    %p125 = scmp.eq.s32.totalorder %s17, 0
    %p126 = por %p124, %p125
    %p127 = scmp.ne.s32.totalorder %s119, %s121
    %p128 = scmp.eq.s32.totalorder %s22, 1
    %p129 = por %p127, %p128
    %p130 = scmp.ne.s32.totalorder %s121, %s122
    %p131 = scmp.eq.s32.totalorder %s22, 0
    %p132 = por %p130, %p131
    %p133 = scmp.ne.s32.totalorder %s121, %s122
    %p134 = scmp.eq.s32.totalorder %s23, 1
    %p135 = por %p133, %p134
    %p137 = scmp.ne.s32.totalorder %s122, %s136
    %p138 = scmp.eq.s32.totalorder %s23, 0
    %p139 = por %p137, %p138
    %s141 = sadd.s32 %s140, 1
    %p144 = scmp.eq.s32.totalorder %s17, 1
    %p145 = scmp.ne.s32.totalorder %s140, %s142
    %p146 = scmp.eq.s32.totalorder %s17, 0
    %p147 = por %p145, %p146
    %p148 = scmp.ne.s32.totalorder %s140, %s142
    %p149 = scmp.eq.s32.totalorder %s22, 1
    %p150 = por %p148, %p149
    %p151 = scmp.ne.s32.totalorder %s142, %s143
    %p152 = scmp.eq.s32.totalorder %s22, 0
    %p153 = por %p151, %p152
    %p154 = scmp.ne.s32.totalorder %s142, %s143
    %p155 = scmp.eq.s32.totalorder %s23, 1
    %p156 = por %p154, %p155
    %p158 = scmp.ne.s32.totalorder %s143, %s157
    %p159 = scmp.eq.s32.totalorder %s23, 0
    %p160 = por %p158, %p159
    %s162 = sadd.s32 %s161, 1
    %p165 = scmp.eq.s32.totalorder %s17, 1
    %p166 = scmp.ne.s32.totalorder %s161, %s163
    %p167 = scmp.eq.s32.totalorder %s17, 0
    %p168 = por %p166, %p167
    %p169 = scmp.ne.s32.totalorder %s161, %s163
    %p170 = scmp.eq.s32.totalorder %s22, 1
    %p171 = por %p169, %p170
    %p172 = scmp.ne.s32.totalorder %s163, %s164
    %p173 = scmp.eq.s32.totalorder %s22, 0
    %p174 = por %p172, %p173
    %p175 = scmp.ne.s32.totalorder %s163, %s164
    %p176 = scmp.eq.s32.totalorder %s23, 1
    %p177 = por %p175, %p176
    %p179 = scmp.ne.s32.totalorder %s164, %s178
    %p180 = scmp.eq.s32.totalorder %s23, 0
    %p181 = por %p179, %p180
    %s183 = sadd.s32 %s182, 1
    %p186 = scmp.eq.s32.totalorder %s17, 1
    %p187 = scmp.ne.s32.totalorder %s182, %s184
    %p188 = scmp.eq.s32.totalorder %s17, 0
    %p189 = por %p187, %p188
    %p190 = scmp.ne.s32.totalorder %s182, %s184
    %p191 = scmp.eq.s32.totalorder %s22, 1
    %p192 = por %p190, %p191
    %p193 = scmp.ne.s32.totalorder %s184, %s185
    %p194 = scmp.eq.s32.totalorder %s22, 0
    %p195 = por %p193, %p194
    %p196 = scmp.ne.s32.totalorder %s184, %s185
    %p197 = scmp.eq.s32.totalorder %s23, 1
    %p198 = por %p196, %p197
    %p200 = scmp.ne.s32.totalorder %s185, %s199
    %p201 = scmp.eq.s32.totalorder %s23, 0
    %p202 = por %p200, %p201
    %s204 = sadd.s32 %s203, 1
    %p207 = scmp.eq.s32.totalorder %s17, 1
    %p208 = scmp.ne.s32.totalorder %s203, %s205
    %p209 = scmp.eq.s32.totalorder %s17, 0
    %p210 = por %p208, %p209
    %p211 = scmp.ne.s32.totalorder %s203, %s205
    %p212 = scmp.eq.s32.totalorder %s22, 1
    %p213 = por %p211, %p212
    %p214 = scmp.ne.s32.totalorder %s205, %s206
    %p215 = scmp.eq.s32.totalorder %s22, 0
    %p216 = por %p214, %p215
    %p217 = scmp.ne.s32.totalorder %s205, %s206
    %p218 = scmp.eq.s32.totalorder %s23, 1
    %p219 = por %p217, %p218
    %p221 = scmp.ne.s32.totalorder %s206, %s220
    %p222 = scmp.eq.s32.totalorder %s23, 0
    %p223 = por %p221, %p222
    %s225 = sadd.s32 %s224, 1
    %p228 = scmp.eq.s32.totalorder %s17, 1
    %p229 = scmp.ne.s32.totalorder %s224, %s226
    %p230 = scmp.eq.s32.totalorder %s17, 0
    %p231 = por %p229, %p230
    %p232 = scmp.ne.s32.totalorder %s224, %s226
    %p233 = scmp.eq.s32.totalorder %s22, 1
    %p234 = por %p232, %p233
    %p235 = scmp.ne.s32.totalorder %s226, %s227
    %p236 = scmp.eq.s32.totalorder %s22, 0
    %p237 = por %p235, %p236
    %p238 = scmp.ne.s32.totalorder %s226, %s227
    %p239 = scmp.eq.s32.totalorder %s23, 1
    %p240 = por %p238, %p239
    %p242 = scmp.ne.s32.totalorder %s227, %s241
    %p243 = scmp.eq.s32.totalorder %s23, 0
    %p244 = por %p242, %p243
    %s246 = sadd.s32 %s245, 1
    %p249 = scmp.eq.s32.totalorder %s17, 1
    %p250 = scmp.ne.s32.totalorder %s245, %s247
    %p251 = scmp.eq.s32.totalorder %s17, 0
    %p252 = por %p250, %p251
    %p253 = scmp.ne.s32.totalorder %s245, %s247
    %p254 = scmp.eq.s32.totalorder %s22, 1
    %p255 = por %p253, %p254
    %p256 = scmp.ne.s32.totalorder %s247, %s248
    %p257 = scmp.eq.s32.totalorder %s22, 0
    %p258 = por %p256, %p257
    %p259 = scmp.ne.s32.totalorder %s247, %s248
    %p260 = scmp.eq.s32.totalorder %s23, 1
    %p261 = por %p259, %p260
    %p263 = scmp.ne.s32.totalorder %s248, %s262
    %p264 = scmp.eq.s32.totalorder %s23, 0
    %p265 = por %p263, %p264
    %s266 = ssub.s32 %s17, %s24
    %p267 = scmp.eq.s32.totalorder %s266, 0
    %s269 = sadd.s32 %s268, 1
    %s270 = scalar_select %p267, %s268, %s269
    %p273 = pneg %p267
    %p274 = scmp.eq.s32.totalorder %s17, 1
    %p275 = por %p273, %p274
    %p276 = scmp.ne.s32.totalorder %s268, %s271
    %p277 = scmp.eq.s32.totalorder %s17, 0
    %p278 = por %p276, %p277
    %p279 = scmp.ne.s32.totalorder %s268, %s271
    %p280 = scmp.eq.s32.totalorder %s22, 1
    %p281 = por %p279, %p280
    %p282 = scmp.ne.s32.totalorder %s271, %s272
    %p283 = scmp.eq.s32.totalorder %s22, 0
    %p284 = por %p282, %p283
    %p285 = scmp.ne.s32.totalorder %s271, %s272
    %p286 = scmp.eq.s32.totalorder %s23, 1
    %p287 = por %p285, %p286
    %p289 = scmp.ne.s32.totalorder %s272, %s288
    %p290 = scmp.eq.s32.totalorder %s23, 0
    %p291 = por %p289, %p290
    %p292 = scmp.le.s32.totalorder 1, %s17
    %p293 = scmp.lt.s32.totalorder %s17, 3
    %p294 = pnand %p292, %p293
    %p295 = pneg %p294
    // Predicated region
    $region9: #{kernel_upblock_forward.1} parent=5 // pred_check
      _
    $region10: #{kernel_upblock_forward.1} parent=5 // pred_check_branch
      %297 = sbr.rel (%p294) target = $region12
    $region11: #{kernel_upblock_forward.1} parent=5 // pred_region
      %s298 = ssub.s32 %s17, 1
      // Predicated region
      $region13: #{kernel_upblock_forward.1} parent=11 // pred_check
        %p299 = pneg %p90
      $region14: #{kernel_upblock_forward.1} parent=11 // pred_check_branch
        %301 = sbr.rel (%p299) target = $region16
      $region15: #{kernel_upblock_forward.1} parent=11 // pred_region
        _
      $region16: #{kernel_upblock_forward.1} parent=11 // pred_fallthru
        _
      // Predicated region
      $region17: #{kernel_upblock_forward.1} parent=11 // pred_check
        %p302 = pneg %p111
      $region18: #{kernel_upblock_forward.1} parent=11 // pred_check_branch
        %304 = sbr.rel (%p302) target = $region20
      $region19: #{kernel_upblock_forward.1} parent=11 // pred_region
        _
      $region20: #{kernel_upblock_forward.1} parent=11 // pred_fallthru
        _
      // Predicated region
      $region21: #{kernel_upblock_forward.1} parent=11 // pred_check
        %p305 = pneg %p132
      $region22: #{kernel_upblock_forward.1} parent=11 // pred_check_branch
        %307 = sbr.rel (%p305) target = $region24
      $region23: #{kernel_upblock_forward.1} parent=11 // pred_region
        _
      $region24: #{kernel_upblock_forward.1} parent=11 // pred_fallthru
        _
      // Predicated region
      $region25: #{kernel_upblock_forward.1} parent=11 // pred_check
        %p308 = pneg %p153
      $region26: #{kernel_upblock_forward.1} parent=11 // pred_check_branch
        %310 = sbr.rel (%p308) target = $region28
      $region27: #{kernel_upblock_forward.1} parent=11 // pred_region
        _
      $region28: #{kernel_upblock_forward.1} parent=11 // pred_fallthru
        _
      // Predicated region
      $region29: #{kernel_upblock_forward.1} parent=11 // pred_check
        %p311 = pneg %p174
      $region30: #{kernel_upblock_forward.1} parent=11 // pred_check_branch
        %313 = sbr.rel (%p311) target = $region32
      $region31: #{kernel_upblock_forward.1} parent=11 // pred_region
        _
      $region32: #{kernel_upblock_forward.1} parent=11 // pred_fallthru
        _
      // Predicated region
      $region33: #{kernel_upblock_forward.1} parent=11 // pred_check
        %p314 = pneg %p195
      $region34: #{kernel_upblock_forward.1} parent=11 // pred_check_branch
        %316 = sbr.rel (%p314) target = $region36
      $region35: #{kernel_upblock_forward.1} parent=11 // pred_region
        _
      $region36: #{kernel_upblock_forward.1} parent=11 // pred_fallthru
        _
      // Predicated region
      $region37: #{kernel_upblock_forward.1} parent=11 // pred_check
        %p317 = pneg %p216
      $region38: #{kernel_upblock_forward.1} parent=11 // pred_check_branch
        %319 = sbr.rel (%p317) target = $region40
      $region39: #{kernel_upblock_forward.1} parent=11 // pred_region
        _
      $region40: #{kernel_upblock_forward.1} parent=11 // pred_fallthru
        _
      // Predicated region
      $region41: #{kernel_upblock_forward.1} parent=11 // pred_check
        %p320 = pneg %p237
      $region42: #{kernel_upblock_forward.1} parent=11 // pred_check_branch
        %322 = sbr.rel (%p320) target = $region44
      $region43: #{kernel_upblock_forward.1} parent=11 // pred_region
        _
      $region44: #{kernel_upblock_forward.1} parent=11 // pred_fallthru
        _
      // Predicated region
      $region45: #{kernel_upblock_forward.1} parent=11 // pred_check
        %p323 = pneg %p258
      $region46: #{kernel_upblock_forward.1} parent=11 // pred_check_branch
        %325 = sbr.rel (%p323) target = $region48
      $region47: #{kernel_upblock_forward.1} parent=11 // pred_region
        _
      $region48: #{kernel_upblock_forward.1} parent=11 // pred_fallthru
        _
    $region12: #{kernel_upblock_forward.1} parent=5 // pred_fallthru
      _
    %p326 = scmp.lt.s32.totalorder %s17, 2
    // Predicated region
    $region49: #{kernel_upblock_forward.1} parent=5 // pred_check
      %p327 = pneg %p326
    $region50: #{kernel_upblock_forward.1} parent=5 // pred_check_branch
      %329 = sbr.rel (%p327) target = $region52
    $region51: #{kernel_upblock_forward.1} parent=5 // pred_region
      // Predicated region
      $region53: #{kernel_upblock_forward.1} parent=51 // pred_check
        %p330 = pneg %p37
      $region54: #{kernel_upblock_forward.1} parent=51 // pred_check_branch
        %332 = sbr.rel (%p330) target = $region56
      $region55: #{kernel_upblock_forward.1} parent=51 // pred_region
        %p333 = scmp.lt.s32.totalorder %s17, 1
        %s334 = scalar_select %p333, %s17, 1
        %s335 = smul.addr %s334, 8
        %s336 = smul.addr %s335, 8
        %s337 = scalar_lea.vmem %s0, %s336
      $region56: #{kernel_upblock_forward.1} parent=51 // pred_fallthru
        _
      // Predicated region
      $region57: #{kernel_upblock_forward.1} parent=51 // pred_check
        %p338 = pneg %p63
      $region58: #{kernel_upblock_forward.1} parent=51 // pred_check_branch
        %340 = sbr.rel (%p338) target = $region60
      $region59: #{kernel_upblock_forward.1} parent=51 // pred_region
        %p341 = scmp.lt.s32.totalorder %s17, 1
        %s342 = scalar_select %p341, %s17, 1
        %s343 = smul.addr %s342, 32
        %s344 = smul.addr %s343, 8
        %s345 = scalar_lea.vmem %s1, %s344
      $region60: #{kernel_upblock_forward.1} parent=51 // pred_fallthru
        _
    $region52: #{kernel_upblock_forward.1} parent=5 // pred_fallthru
      _
    %p346 = scmp.le.s32.totalorder 1, %s17
    %p347 = scmp.lt.s32.totalorder %s17, 3
    %p348 = pnand %p346, %p347
    %p349 = pneg %p348
    // Predicated region
    $region61: #{kernel_upblock_forward.1} parent=5 // pred_check
      _
    $region62: #{kernel_upblock_forward.1} parent=5 // pred_check_branch
      %351 = sbr.rel (%p348) target = $region64
    $region63: #{kernel_upblock_forward.1} parent=5 // pred_region
      %s352 = ssub.s32 %s17, 1
      %p353 = scmp.lt.s32.totalorder %s22, 1
      %s354 = scalar_select %p353, %s22, 1
      %s355 = smul.addr %s354, 8
      %s356 = smul.addr %s355, 8
      %s357 = scalar_lea.vmem %s0, %s356
      %p358 = pneg %p43
      %p359 = pneg %p40
      %p360 = scmp.lt.s32.totalorder %s22, 1
      %s361 = scalar_select %p360, %s22, 1
      %s362 = smul.addr %s361, 32
      %s363 = smul.addr %s362, 8
      %s364 = scalar_lea.vmem %s1, %s363
      %p365 = pneg %p69
      %p366 = pneg %p66
      %p367 = pneg %p90
      %p368 = pneg %p87
      %p369 = pneg %p111
      %p370 = pneg %p108
      %p371 = pneg %p132
      %p372 = pneg %p129
      %p373 = pneg %p153
      %p374 = pneg %p150
      %p375 = pneg %p174
      %p376 = pneg %p171
      %p377 = pneg %p195
      %p378 = pneg %p192
      %p379 = pneg %p216
      %p380 = pneg %p213
      %p381 = pneg %p237
      %p382 = pneg %p234
      %p383 = pneg %p258
      %p384 = pneg %p255
      %p385 = pneg %p284
      %p386 = pneg %p281
      %p387 = scmp.lt.s32.totalorder %s22, 1
      %s388 = scalar_select %p387, %s22, 1
      %s389 = smul.addr %s388, 32
      %s390 = smul.addr %s389, 8
      %s391 = scalar_lea.vmem %s11, %s390
      %p392 = scmp.lt.s32.totalorder %s22, 1
      %s393 = scalar_select %p392, %s22, 1
      %s394 = smul.addr %s393, 8
      %s395 = smul.addr %s394, 8
      %s396 = scalar_lea.vmem %s0, %s395
      %p397 = scmp.lt.s32.totalorder %s22, 1
      %s398 = scalar_select %p397, %s22, 1
      %s399 = smul.addr %s398, 32
      %s400 = smul.addr %s399, 8
      %s401 = scalar_lea.vmem %s1, %s400
      %p402 = scmp.lt.s32.totalorder %s22, 1
      %s403 = scalar_select %p402, %s22, 1
      %s404 = smul.addr %s403, 32
      %s405 = smul.addr %s404, 8
      %s406 = scalar_lea.vmem %s11, %s405
      %v408 = vld [vmem:[%s396] sm:$0xff]
      %v409 = vld [vmem:[%s396 + $0x8] sm:$0xff]
      %v410 = vld [vmem:[%s396 + $0x10] sm:$0xff]
      %v411 = vld [vmem:[%s396 + $0x18] sm:$0xff]
      %v412 = vld [vmem:[%s396 + $0x20] sm:$0xff]
      %v413 = vld [vmem:[%s396 + $0x28] sm:$0xff]
      %v414 = vld [vmem:[%s396 + $0x30] sm:$0xff]
      %v415 = vld [vmem:[%s396 + $0x38] sm:$0xff]
      %v424 = vrot.slane %v408, 7
      %v425 = vrot.slane %v409, 7
      %v426 = vrot.slane %v410, 7
      %v427 = vrot.slane %v411, 7
      %v428 = vrot.slane %v412, 7
      %v429 = vrot.slane %v413, 7
      %v430 = vrot.slane %v414, 7
      %v431 = vrot.slane %v415, 7
      %vm440 = vcmask 1040384
      %v441 = vsel %vm440, 0.0, %v424
      %v442 = vsel %vm440, 0.0, %v425
      %v443 = vsel %vm440, 0.0, %v426
      %v444 = vsel %vm440, 0.0, %v427
      %v445 = vsel %vm440, 0.0, %v428
      %v446 = vsel %vm440, 0.0, %v429
      %v447 = vsel %vm440, 0.0, %v430
      %v448 = vsel %vm440, 0.0, %v431
      %v449 = vsel %vm440, %v424, 0.0
      %v450 = vsel %vm440, %v425, 0.0
      %v451 = vsel %vm440, %v426, 0.0
      %v452 = vsel %vm440, %v427, 0.0
      %v453 = vsel %vm440, %v428, 0.0
      %v454 = vsel %vm440, %v429, 0.0
      %v455 = vsel %vm440, %v430, 0.0
      %v456 = vsel %vm440, %v431, 0.0
      %vm472 = vcmask 1046528
      %v473 = vrot.slane 0.0, 1
      %v474 = vsel %vm472, %v473, %v473
      %v475 = vrot.slane %v441, 1
      %v476 = vrot.slane %v449, 1
      %v477 = vsel %vm472, %v475, %v476
      %v478 = vrot.slane %v442, 1
      %v479 = vrot.slane %v450, 1
      %v480 = vsel %vm472, %v478, %v479
      %v481 = vrot.slane %v443, 1
      %v482 = vrot.slane %v451, 1
      %v483 = vsel %vm472, %v481, %v482
      %v484 = vrot.slane %v444, 1
      %v485 = vrot.slane %v452, 1
      %v486 = vsel %vm472, %v484, %v485
      %v487 = vrot.slane %v445, 1
      %v488 = vrot.slane %v453, 1
      %v489 = vsel %vm472, %v487, %v488
      %v490 = vrot.slane %v446, 1
      %v491 = vrot.slane %v454, 1
      %v492 = vsel %vm472, %v490, %v491
      %v493 = vrot.slane %v447, 1
      %v494 = vrot.slane %v455, 1
      %v495 = vsel %vm472, %v493, %v494
      %496 = vrot.lane.b32.xlu0 %v474, 8
      %v497 = vpop.permute.xlu0 %496
      %498 = vrot.lane.b32.xlu0 %v477, 8
      %v499 = vpop.permute.xlu0 %498
      %500 = vrot.lane.b32.xlu0 %v480, 8
      %v501 = vpop.permute.xlu0 %500
      %502 = vrot.lane.b32.xlu0 %v483, 8
      %v503 = vpop.permute.xlu0 %502
      %504 = vrot.lane.b32.xlu0 %v486, 8
      %v505 = vpop.permute.xlu0 %504
      %506 = vrot.lane.b32.xlu0 %v489, 8
      %v507 = vpop.permute.xlu0 %506
      %508 = vrot.lane.b32.xlu0 %v492, 8
      %v509 = vpop.permute.xlu0 %508
      %510 = vrot.lane.b32.xlu0 %v495, 8
      %v511 = vpop.permute.xlu0 %510
      %vm520 = vcmask 1045504
      %v521 = vrot.slane 0.0, 2
      %v522 = vsel %vm520, %v521, %v521
      %v523 = vrot.slane %v441, 2
      %v524 = vrot.slane %v449, 2
      %v525 = vsel %vm520, %v523, %v524
      %v526 = vrot.slane %v442, 2
      %v527 = vrot.slane %v450, 2
      %v528 = vsel %vm520, %v526, %v527
      %v529 = vrot.slane %v443, 2
      %v530 = vrot.slane %v451, 2
      %v531 = vsel %vm520, %v529, %v530
      %v532 = vrot.slane %v444, 2
      %v533 = vrot.slane %v452, 2
      %v534 = vsel %vm520, %v532, %v533
      %v535 = vrot.slane %v445, 2
      %v536 = vrot.slane %v453, 2
      %v537 = vsel %vm520, %v535, %v536
      %v538 = vrot.slane %v446, 2
      %v539 = vrot.slane %v454, 2
      %v540 = vsel %vm520, %v538, %v539
      %v541 = vrot.slane %v447, 2
      %v542 = vrot.slane %v455, 2
      %v543 = vsel %vm520, %v541, %v542
      %544 = vrot.lane.b32.xlu0 %v522, 16
      %v545 = vpop.permute.xlu0 %544
      %546 = vrot.lane.b32.xlu0 %v525, 16
      %v547 = vpop.permute.xlu0 %546
      %548 = vrot.lane.b32.xlu0 %v528, 16
      %v549 = vpop.permute.xlu0 %548
      %550 = vrot.lane.b32.xlu0 %v531, 16
      %v551 = vpop.permute.xlu0 %550
      %552 = vrot.lane.b32.xlu0 %v534, 16
      %v553 = vpop.permute.xlu0 %552
      %554 = vrot.lane.b32.xlu0 %v537, 16
      %v555 = vpop.permute.xlu0 %554
      %556 = vrot.lane.b32.xlu0 %v540, 16
      %v557 = vpop.permute.xlu0 %556
      %558 = vrot.lane.b32.xlu0 %v543, 16
      %v559 = vpop.permute.xlu0 %558
      %569 = vrot.lane.b32.xlu0 %v441, 24
      %v570 = vpop.permute.xlu0 %569
      %571 = vrot.lane.b32.xlu0 %v442, 24
      %v572 = vpop.permute.xlu0 %571
      %573 = vrot.lane.b32.xlu0 %v443, 24
      %v574 = vpop.permute.xlu0 %573
      %575 = vrot.lane.b32.xlu0 %v444, 24
      %v576 = vpop.permute.xlu0 %575
      %577 = vrot.lane.b32.xlu0 %v445, 24
      %v578 = vpop.permute.xlu0 %577
      %579 = vrot.lane.b32.xlu0 %v446, 24
      %v580 = vpop.permute.xlu0 %579
      %581 = vrot.lane.b32.xlu0 %v447, 24
      %v582 = vpop.permute.xlu0 %581
      %583 = vrot.lane.b32.xlu0 %v448, 24
      %v584 = vpop.permute.xlu0 %583
      %v594 = vrot.slane %v448, 1
      %v595 = vrot.slane %v456, 1
      %v596 = vsel %vm472, %v594, %v595
      %597 = vrot.lane.b32.xlu0 %v477, 32
      %v598 = vpop.permute.xlu0 %597
      %599 = vrot.lane.b32.xlu0 %v480, 32
      %v600 = vpop.permute.xlu0 %599
      %601 = vrot.lane.b32.xlu0 %v483, 32
      %v602 = vpop.permute.xlu0 %601
      %603 = vrot.lane.b32.xlu0 %v486, 32
      %v604 = vpop.permute.xlu0 %603
      %605 = vrot.lane.b32.xlu0 %v489, 32
      %v606 = vpop.permute.xlu0 %605
      %607 = vrot.lane.b32.xlu0 %v492, 32
      %v608 = vpop.permute.xlu0 %607
      %609 = vrot.lane.b32.xlu0 %v495, 32
      %v610 = vpop.permute.xlu0 %609
      %611 = vrot.lane.b32.xlu0 %v596, 32
      %v612 = vpop.permute.xlu0 %611
      %v621 = vrot.slane %v448, 2
      %v622 = vrot.slane %v456, 2
      %v623 = vsel %vm520, %v621, %v622
      %624 = vrot.lane.b32.xlu0 %v525, 40
      %v625 = vpop.permute.xlu0 %624
      %626 = vrot.lane.b32.xlu0 %v528, 40
      %v627 = vpop.permute.xlu0 %626
      %628 = vrot.lane.b32.xlu0 %v531, 40
      %v629 = vpop.permute.xlu0 %628
      %630 = vrot.lane.b32.xlu0 %v534, 40
      %v631 = vpop.permute.xlu0 %630
      %632 = vrot.lane.b32.xlu0 %v537, 40
      %v633 = vpop.permute.xlu0 %632
      %634 = vrot.lane.b32.xlu0 %v540, 40
      %v635 = vpop.permute.xlu0 %634
      %636 = vrot.lane.b32.xlu0 %v543, 40
      %v637 = vpop.permute.xlu0 %636
      %638 = vrot.lane.b32.xlu0 %v623, 40
      %v639 = vpop.permute.xlu0 %638
      %648 = vrot.lane.b32.xlu0 %v442, 48
      %v649 = vpop.permute.xlu0 %648
      %650 = vrot.lane.b32.xlu0 %v443, 48
      %v651 = vpop.permute.xlu0 %650
      %652 = vrot.lane.b32.xlu0 %v444, 48
      %v653 = vpop.permute.xlu0 %652
      %654 = vrot.lane.b32.xlu0 %v445, 48
      %v655 = vpop.permute.xlu0 %654
      %656 = vrot.lane.b32.xlu0 %v446, 48
      %v657 = vpop.permute.xlu0 %656
      %658 = vrot.lane.b32.xlu0 %v447, 48
      %v659 = vpop.permute.xlu0 %658
      %660 = vrot.lane.b32.xlu0 %v448, 48
      %v661 = vpop.permute.xlu0 %660
      %662 = vrot.lane.b32.xlu0 0.0, 48
      %v663 = vpop.permute.xlu0 %662
      %672 = vrot.lane.b32.xlu0 %v480, 56
      %v673 = vpop.permute.xlu0 %672
      %674 = vrot.lane.b32.xlu0 %v483, 56
      %v675 = vpop.permute.xlu0 %674
      %676 = vrot.lane.b32.xlu0 %v486, 56
      %v677 = vpop.permute.xlu0 %676
      %678 = vrot.lane.b32.xlu0 %v489, 56
      %v679 = vpop.permute.xlu0 %678
      %680 = vrot.lane.b32.xlu0 %v492, 56
      %v681 = vpop.permute.xlu0 %680
      %682 = vrot.lane.b32.xlu0 %v495, 56
      %v683 = vpop.permute.xlu0 %682
      %684 = vrot.lane.b32.xlu0 %v596, 56
      %v685 = vpop.permute.xlu0 %684
      %686 = vrot.lane.b32.xlu0 %v474, 56
      %v687 = vpop.permute.xlu0 %686
      %696 = vrot.lane.b32.xlu0 %v528, 64
      %v697 = vpop.permute.xlu0 %696
      %698 = vrot.lane.b32.xlu0 %v531, 64
      %v699 = vpop.permute.xlu0 %698
      %700 = vrot.lane.b32.xlu0 %v534, 64
      %v701 = vpop.permute.xlu0 %700
      %702 = vrot.lane.b32.xlu0 %v537, 64
      %v703 = vpop.permute.xlu0 %702
      %704 = vrot.lane.b32.xlu0 %v540, 64
      %v705 = vpop.permute.xlu0 %704
      %706 = vrot.lane.b32.xlu0 %v543, 64
      %v707 = vpop.permute.xlu0 %706
      %708 = vrot.lane.b32.xlu0 %v623, 64
      %v709 = vpop.permute.xlu0 %708
      %710 = vrot.lane.b32.xlu0 %v522, 64
      %v711 = vpop.permute.xlu0 %710
      %vm720 = vcmask 64512
      %v721 = vsel %vm720, 0.0, %v497
      %v722 = vsel %vm720, %v441, %v499
      %v723 = vsel %vm720, %v442, %v501
      %v724 = vsel %vm720, %v443, %v503
      %v725 = vsel %vm720, %v444, %v505
      %v726 = vsel %vm720, %v445, %v507
      %v727 = vsel %vm720, %v446, %v509
      %v728 = vsel %vm720, %v447, %v511
      %vm729 = vcmask 130048
      %v730 = vsel %vm729, %v721, %v545
      %v731 = vsel %vm729, %v722, %v547
      %v732 = vsel %vm729, %v723, %v549
      %v733 = vsel %vm729, %v724, %v551
      %v734 = vsel %vm729, %v725, %v553
      %v735 = vsel %vm729, %v726, %v555
      %v736 = vsel %vm729, %v727, %v557
      %v737 = vsel %vm729, %v728, %v559
      %vm738 = vcmask 195584
      %v739 = vsel %vm738, %v730, %v570
      %v740 = vsel %vm738, %v731, %v572
      %v741 = vsel %vm738, %v732, %v574
      %v742 = vsel %vm738, %v733, %v576
      %v743 = vsel %vm738, %v734, %v578
      %v744 = vsel %vm738, %v735, %v580
      %v745 = vsel %vm738, %v736, %v582
      %v746 = vsel %vm738, %v737, %v584
      %vm747 = vcmask 261120
      %v748 = vsel %vm747, %v739, %v598
      %v749 = vsel %vm747, %v740, %v600
      %v750 = vsel %vm747, %v741, %v602
      %v751 = vsel %vm747, %v742, %v604
      %v752 = vsel %vm747, %v743, %v606
      %v753 = vsel %vm747, %v744, %v608
      %v754 = vsel %vm747, %v745, %v610
      %v755 = vsel %vm747, %v746, %v612
      %vm756 = vcmask 326656
      %v757 = vsel %vm756, %v748, %v625
      %v758 = vsel %vm756, %v749, %v627
      %v759 = vsel %vm756, %v750, %v629
      %v760 = vsel %vm756, %v751, %v631
      %v761 = vsel %vm756, %v752, %v633
      %v762 = vsel %vm756, %v753, %v635
      %v763 = vsel %vm756, %v754, %v637
      %v764 = vsel %vm756, %v755, %v639
      %vm765 = vcmask 392192
      %v766 = vsel %vm765, %v757, %v649
      %v767 = vsel %vm765, %v758, %v651
      %v768 = vsel %vm765, %v759, %v653
      %v769 = vsel %vm765, %v760, %v655
      %v770 = vsel %vm765, %v761, %v657
      %v771 = vsel %vm765, %v762, %v659
      %v772 = vsel %vm765, %v763, %v661
      %v773 = vsel %vm765, %v764, %v663
      %vm774 = vcmask 457728
      %v775 = vsel %vm774, %v766, %v673
      %v776 = vsel %vm774, %v767, %v675
      %v777 = vsel %vm774, %v768, %v677
      %v778 = vsel %vm774, %v769, %v679
      %v779 = vsel %vm774, %v770, %v681
      %v780 = vsel %vm774, %v771, %v683
      %v781 = vsel %vm774, %v772, %v685
      %v782 = vsel %vm774, %v773, %v687
      %vm783 = vcmask 523264
      %v784 = vsel %vm783, %v775, %v697
      %v785 = vsel %vm783, %v776, %v699
      %v786 = vsel %vm783, %v777, %v701
      %v787 = vsel %vm783, %v778, %v703
      %v788 = vsel %vm783, %v779, %v705
      %v789 = vsel %vm783, %v780, %v707
      %v790 = vsel %vm783, %v781, %v709
      %v791 = vsel %vm783, %v782, %v711
      %v792 = vpack.c.bf16 %v785, %v784
      %v793 = vpack.c.bf16 %v787, %v786
      %v794 = vpack.c.bf16 %v789, %v788
      %v795 = vpack.c.bf16 %v791, %v790
      %v796 = vld [vmem:[%s3] sm:$0xf]
      %v797 = vld [vmem:[%s3 + $0x4] sm:$0xf]
      %v798 = vld [vmem:[%s3 + $0x8] sm:$0xf]
      %v799 = vld [vmem:[%s3 + $0xc] sm:$0xf]
      %v800 = vld [vmem:[%s3 + $0x10] sm:$0xf]
      %v801 = vld [vmem:[%s3 + $0x14] sm:$0xf]
      %v802 = vld [vmem:[%s3 + $0x18] sm:$0xf]
      %v803 = vld [vmem:[%s3 + $0x1c] sm:$0xf]
      %v804 = vld [vmem:[%s3 + $0x20] sm:$0xf]
      %v805 = vld [vmem:[%s4] sm:$0x1]
      %v807 = vperm.slane %v805, 0
      %v818 = vunpack.c.l.b16 %v796
      %v819 = vunpack.c.l.b16 %v797
      %v820 = vunpack.c.l.b16 %v798
      %v821 = vunpack.c.l.b16 %v799
      %v822 = vunpack.c.l.b16 %v800
      %v823 = vunpack.c.l.b16 %v801
      %v824 = vunpack.c.l.b16 %v802
      %v825 = vunpack.c.l.b16 %v803
      %v826 = vunpack.c.l.b16 %v804
      %v827 = vpack.c.b16 %v819, %v818
      %v828 = vpack.c.b16 %v821, %v820
      %v829 = vpack.c.b16 %v823, %v822
      %v830 = vpack.c.b16 %v825, %v824
      %v831 = vpack.c.b16 %v826, %v826
      %vm836 = vcmask 588800
      %v838 = vsel %vm836, %v792, 0
      %v841 = vsel %vm836, %v793, 0
      %v844 = vsel %vm836, %v794, 0
      %v847 = vsel %vm836, %v795, 0
      %vm849 = vcmask 1043456
      %v851 = vsel %vm849, %v831, 0
      %853 = vmatpush.bf16.msra.mxu0 0
      %854 = vmatpush.bf16.msra.mxu0 0
      %855 = vmatpush.bf16.msra.mxu0 0
      %856 = vmatpush.bf16.msra.mxu0 %v851
      %857 = vmatpush.bf16.msra.mxu0 %v830
      %858 = vmatpush.bf16.msra.mxu0 %v829
      %859 = vmatpush.bf16.msra.mxu0 %v828
      %860 = vmatpush.bf16.msra.mxu0 %v827
      %861 = vmatmul.bf16.gmra.mxu0 %v838
      %v862 = vpop.f32.mrf.mxu0
      %v863 = vadd.f32 %v807, %v862
      %v864 = vpop.f32.mrf.mxu0
      %v865 = vadd.f32 %v807, %v864
      %866 = vmatmul.bf16.gmra.mxu0 %v841
      %v867 = vpop.f32.mrf.mxu0
      %v868 = vadd.f32 %v807, %v867
      %v869 = vpop.f32.mrf.mxu0
      %v870 = vadd.f32 %v807, %v869
      %871 = vmatmul.bf16.gmra.mxu0 %v844
      %v872 = vpop.f32.mrf.mxu0
      %v873 = vadd.f32 %v807, %v872
      %v874 = vpop.f32.mrf.mxu0
      %v875 = vadd.f32 %v807, %v874
      %876 = vmatmul.bf16.gmra.mxu0 %v847
      %v877 = vpop.f32.mrf.mxu0
      %v878 = vadd.f32 %v807, %v877
      %v879 = vpop.f32.mrf.mxu0
      %v880 = vadd.f32 %v807, %v879
      %881 = vdwg.mxu0
      %v882 = vmax.f32 %v863, 0.0
      %v883 = vmax.f32 %v865, 0.0
      %v884 = vmax.f32 %v868, 0.0
      %v885 = vmax.f32 %v870, 0.0
      %v886 = vmax.f32 %v873, 0.0
      %v887 = vmax.f32 %v875, 0.0
      %v888 = vmax.f32 %v878, 0.0
      %v889 = vmax.f32 %v880, 0.0
      %898 = vrot.lane.b32.xlu0 %v882, 112
      %v899 = vpop.permute.xlu0 %898
      %900 = vrot.lane.b32.xlu0 %v883, 112
      %v901 = vpop.permute.xlu0 %900
      %902 = vrot.lane.b32.xlu0 %v884, 112
      %v903 = vpop.permute.xlu0 %902
      %904 = vrot.lane.b32.xlu0 %v885, 112
      %v905 = vpop.permute.xlu0 %904
      %906 = vrot.lane.b32.xlu0 %v886, 112
      %v907 = vpop.permute.xlu0 %906
      %908 = vrot.lane.b32.xlu0 %v887, 112
      %v909 = vpop.permute.xlu0 %908
      %910 = vrot.lane.b32.xlu0 %v888, 112
      %v911 = vpop.permute.xlu0 %910
      %912 = vrot.lane.b32.xlu0 %v889, 112
      %v913 = vpop.permute.xlu0 %912
      %922 = vrot.lane.b32.xlu0 %v882, 96
      %v923 = vpop.permute.xlu0 %922
      %924 = vrot.lane.b32.xlu0 %v883, 96
      %v925 = vpop.permute.xlu0 %924
      %926 = vrot.lane.b32.xlu0 %v884, 96
      %v927 = vpop.permute.xlu0 %926
      %928 = vrot.lane.b32.xlu0 %v885, 96
      %v929 = vpop.permute.xlu0 %928
      %930 = vrot.lane.b32.xlu0 %v886, 96
      %v931 = vpop.permute.xlu0 %930
      %932 = vrot.lane.b32.xlu0 %v887, 96
      %v933 = vpop.permute.xlu0 %932
      %934 = vrot.lane.b32.xlu0 %v888, 96
      %v935 = vpop.permute.xlu0 %934
      %936 = vrot.lane.b32.xlu0 %v889, 96
      %v937 = vpop.permute.xlu0 %936
      %946 = vrot.lane.b32.xlu0 %v882, 80
      %v947 = vpop.permute.xlu0 %946
      %948 = vrot.lane.b32.xlu0 %v883, 80
      %v949 = vpop.permute.xlu0 %948
      %950 = vrot.lane.b32.xlu0 %v884, 80
      %v951 = vpop.permute.xlu0 %950
      %952 = vrot.lane.b32.xlu0 %v885, 80
      %v953 = vpop.permute.xlu0 %952
      %954 = vrot.lane.b32.xlu0 %v886, 80
      %v955 = vpop.permute.xlu0 %954
      %956 = vrot.lane.b32.xlu0 %v887, 80
      %v957 = vpop.permute.xlu0 %956
      %958 = vrot.lane.b32.xlu0 %v888, 80
      %v959 = vpop.permute.xlu0 %958
      %960 = vrot.lane.b32.xlu0 %v889, 80
      %v961 = vpop.permute.xlu0 %960
      %v970 = vld [vmem:[%s2] sm:$0xff]
      %v971 = vld [vmem:[%s2 + $0x8] sm:$0xff]
      %v972 = vld [vmem:[%s2 + $0x10] sm:$0xff]
      %v973 = vld [vmem:[%s2 + $0x18] sm:$0xff]
      %v974 = vld [vmem:[%s2 + $0x20] sm:$0xff]
      %v975 = vld [vmem:[%s2 + $0x28] sm:$0xff]
      %v976 = vld [vmem:[%s2 + $0x30] sm:$0xff]
      %v977 = vld [vmem:[%s2 + $0x38] sm:$0xff]
      %v978 = vld [vmem:[%s2 + $0x40] sm:$0xff]
      %v979 = vld [vmem:[%s2 + $0x48] sm:$0xff]
      %v980 = vld [vmem:[%s2 + $0x50] sm:$0xff]
      %v981 = vld [vmem:[%s2 + $0x58] sm:$0xff]
      %v982 = vld [vmem:[%s2 + $0x60] sm:$0xff]
      %v983 = vld [vmem:[%s2 + $0x68] sm:$0xff]
      %v984 = vld [vmem:[%s2 + $0x70] sm:$0xff]
      %v985 = vld [vmem:[%s2 + $0x78] sm:$0xff]
      %v986 = vld [vmem:[%s2 + $0x80] sm:$0xff]
      %v987 = vld [vmem:[%s2 + $0x88] sm:$0xff]
      %v988 = vld [vmem:[%s2 + $0x90] sm:$0xff]
      %v989 = vld [vmem:[%s2 + $0x98] sm:$0xff]
      %v990 = vld [vmem:[%s2 + $0xa0] sm:$0xff]
      %v991 = vld [vmem:[%s2 + $0xa8] sm:$0xff]
      %v992 = vld [vmem:[%s2 + $0xb0] sm:$0xff]
      %v993 = vld [vmem:[%s2 + $0xb8] sm:$0xff]
      %v994 = vld [vmem:[%s2 + $0xc0] sm:$0xff]
      %v995 = vld [vmem:[%s2 + $0xc8] sm:$0xff]
      %v996 = vld [vmem:[%s2 + $0xd0] sm:$0xff]
      %v997 = vld [vmem:[%s2 + $0xd8] sm:$0xff]
      %v998 = vld [vmem:[%s2 + $0xe0] sm:$0xff]
      %v999 = vld [vmem:[%s2 + $0xe8] sm:$0xff]
      %v1000 = vld [vmem:[%s2 + $0xf0] sm:$0xff]
      %v1001 = vld [vmem:[%s2 + $0xf8] sm:$0xff]
      %v1002 = vld [vmem:[%s2 + $0x100] sm:$0xff]
      %v1003 = vld [vmem:[%s2 + $0x108] sm:$0xff]
      %v1004 = vld [vmem:[%s2 + $0x110] sm:$0xff]
      %v1005 = vld [vmem:[%s2 + $0x118] sm:$0xff]
      %v1006 = vld [vmem:[%s2 + $0x120] sm:$0xff]
      %v1007 = vld [vmem:[%s2 + $0x128] sm:$0xff]
      %v1008 = vld [vmem:[%s2 + $0x130] sm:$0xff]
      %v1009 = vld [vmem:[%s2 + $0x138] sm:$0xff]
      %v1010 = vld [vmem:[%s2 + $0x140] sm:$0xff]
      %v1011 = vld [vmem:[%s2 + $0x148] sm:$0xff]
      %v1012 = vld [vmem:[%s2 + $0x150] sm:$0xff]
      %v1013 = vld [vmem:[%s2 + $0x158] sm:$0xff]
      %v1014 = vld [vmem:[%s2 + $0x160] sm:$0xff]
      %v1015 = vld [vmem:[%s2 + $0x168] sm:$0xff]
      %v1016 = vld [vmem:[%s2 + $0x170] sm:$0xff]
      %v1017 = vld [vmem:[%s2 + $0x178] sm:$0xff]
      %v1018 = vld [vmem:[%s2 + $0x180] sm:$0xff]
      %v1019 = vld [vmem:[%s2 + $0x188] sm:$0xff]
      %v1020 = vld [vmem:[%s2 + $0x190] sm:$0xff]
      %v1021 = vld [vmem:[%s2 + $0x198] sm:$0xff]
      %v1022 = vld [vmem:[%s2 + $0x1a0] sm:$0xff]
      %v1023 = vld [vmem:[%s2 + $0x1a8] sm:$0xff]
      %v1024 = vld [vmem:[%s2 + $0x1b0] sm:$0xff]
      %v1025 = vld [vmem:[%s2 + $0x1b8] sm:$0xff]
      %v1026 = vld [vmem:[%s2 + $0x1c0] sm:$0xff]
      %v1027 = vld [vmem:[%s2 + $0x1c8] sm:$0xff]
      %v1028 = vld [vmem:[%s2 + $0x1d0] sm:$0xff]
      %v1029 = vld [vmem:[%s2 + $0x1d8] sm:$0xff]
      %v1030 = vld [vmem:[%s2 + $0x1e0] sm:$0xff]
      %v1031 = vld [vmem:[%s2 + $0x1e8] sm:$0xff]
      %v1032 = vld [vmem:[%s2 + $0x1f0] sm:$0xff]
      %v1033 = vld [vmem:[%s2 + $0x1f8] sm:$0xff]
      %1034 = vmatpush.msra.mxu0 %v913
      %1035 = vmatpush.msra.mxu0 %v911
      %1036 = vmatpush.msra.mxu0 %v909
      %1037 = vmatpush.msra.mxu0 %v907
      %1038 = vmatpush.msra.mxu0 %v905
      %1039 = vmatpush.msra.mxu0 %v903
      %1040 = vmatpush.msra.mxu0 %v901
      %1041 = vmatpush.msra.mxu0 %v899
      %1042 = vmatpush.msra.mxu0 %v889
      %1043 = vmatpush.msra.mxu0 %v888
      %1044 = vmatpush.msra.mxu0 %v887
      %1045 = vmatpush.msra.mxu0 %v886
      %1046 = vmatpush.msra.mxu0 %v885
      %1047 = vmatpush.msra.mxu0 %v884
      %1048 = vmatpush.msra.mxu0 %v883
      %1049 = vmatpush.msra.mxu0 %v882
      %1050 = vmatmul.f32.gmra.mxu0 %v970
      %v1051 = vpop.f32.mrf.mxu0
      %v1052 = vadd.f32 0.0, %v1051
      %1053 = vmatmul.f32.gmra.mxu0 %v972
      %v1054 = vpop.f32.mrf.mxu0
      %v1055 = vadd.f32 0.0, %v1054
      %1056 = vmatmul.f32.gmra.mxu0 %v974
      %v1057 = vpop.f32.mrf.mxu0
      %v1058 = vadd.f32 0.0, %v1057
      %1059 = vmatmul.f32.gmra.mxu0 %v976
      %v1060 = vpop.f32.mrf.mxu0
      %v1061 = vadd.f32 0.0, %v1060
      %1062 = vmatmul.f32.gmra.mxu0 %v978
      %v1063 = vpop.f32.mrf.mxu0
      %v1064 = vadd.f32 0.0, %v1063
      %1065 = vmatmul.f32.gmra.mxu0 %v980
      %v1066 = vpop.f32.mrf.mxu0
      %v1067 = vadd.f32 0.0, %v1066
      %1068 = vmatmul.f32.gmra.mxu0 %v982
      %v1069 = vpop.f32.mrf.mxu0
      %v1070 = vadd.f32 0.0, %v1069
      %1071 = vmatmul.f32.gmra.mxu0 %v984
      %v1072 = vpop.f32.mrf.mxu0
      %v1073 = vadd.f32 0.0, %v1072
      %1074 = vmatmul.f32.gmra.mxu0 %v986
      %v1075 = vpop.f32.mrf.mxu0
      %v1076 = vadd.f32 0.0, %v1075
      %1077 = vmatmul.f32.gmra.mxu0 %v988
      %v1078 = vpop.f32.mrf.mxu0
      %v1079 = vadd.f32 0.0, %v1078
      %1080 = vmatmul.f32.gmra.mxu0 %v990
      %v1081 = vpop.f32.mrf.mxu0
      %v1082 = vadd.f32 0.0, %v1081
      %1083 = vmatmul.f32.gmra.mxu0 %v992
      %v1084 = vpop.f32.mrf.mxu0
      %v1085 = vadd.f32 0.0, %v1084
      %1086 = vmatmul.f32.gmra.mxu0 %v994
      %v1087 = vpop.f32.mrf.mxu0
      %v1088 = vadd.f32 0.0, %v1087
      %1089 = vmatmul.f32.gmra.mxu0 %v996
      %v1090 = vpop.f32.mrf.mxu0
      %v1091 = vadd.f32 0.0, %v1090
      %1092 = vmatmul.f32.gmra.mxu0 %v998
      %v1093 = vpop.f32.mrf.mxu0
      %v1094 = vadd.f32 0.0, %v1093
      %1095 = vmatmul.f32.gmra.mxu0 %v1000
      %v1096 = vpop.f32.mrf.mxu0
      %v1097 = vadd.f32 0.0, %v1096
      %1098 = vmatmul.f32.gmra.mxu0 %v1002
      %v1099 = vpop.f32.mrf.mxu0
      %v1100 = vadd.f32 0.0, %v1099
      %1101 = vmatmul.f32.gmra.mxu0 %v1004
      %v1102 = vpop.f32.mrf.mxu0
      %v1103 = vadd.f32 0.0, %v1102
      %1104 = vmatmul.f32.gmra.mxu0 %v1006
      %v1105 = vpop.f32.mrf.mxu0
      %v1106 = vadd.f32 0.0, %v1105
      %1107 = vmatmul.f32.gmra.mxu0 %v1008
      %v1108 = vpop.f32.mrf.mxu0
      %v1109 = vadd.f32 0.0, %v1108
      %1110 = vmatmul.f32.gmra.mxu0 %v1010
      %v1111 = vpop.f32.mrf.mxu0
      %v1112 = vadd.f32 0.0, %v1111
      %1113 = vmatmul.f32.gmra.mxu0 %v1012
      %v1114 = vpop.f32.mrf.mxu0
      %v1115 = vadd.f32 0.0, %v1114
      %1116 = vmatmul.f32.gmra.mxu0 %v1014
      %v1117 = vpop.f32.mrf.mxu0
      %v1118 = vadd.f32 0.0, %v1117
      %1119 = vmatmul.f32.gmra.mxu0 %v1016
      %v1120 = vpop.f32.mrf.mxu0
      %v1121 = vadd.f32 0.0, %v1120
      %1122 = vmatmul.f32.gmra.mxu0 %v1018
      %v1123 = vpop.f32.mrf.mxu0
      %v1124 = vadd.f32 0.0, %v1123
      %1125 = vmatmul.f32.gmra.mxu0 %v1020
      %v1126 = vpop.f32.mrf.mxu0
      %v1127 = vadd.f32 0.0, %v1126
      %1128 = vmatmul.f32.gmra.mxu0 %v1022
      %v1129 = vpop.f32.mrf.mxu0
      %v1130 = vadd.f32 0.0, %v1129
      %1131 = vmatmul.f32.gmra.mxu0 %v1024
      %v1132 = vpop.f32.mrf.mxu0
      %v1133 = vadd.f32 0.0, %v1132
      %1134 = vmatmul.f32.gmra.mxu0 %v1026
      %v1135 = vpop.f32.mrf.mxu0
      %v1136 = vadd.f32 0.0, %v1135
      %1137 = vmatmul.f32.gmra.mxu0 %v1028
      %v1138 = vpop.f32.mrf.mxu0
      %v1139 = vadd.f32 0.0, %v1138
      %1140 = vmatmul.f32.gmra.mxu0 %v1030
      %v1141 = vpop.f32.mrf.mxu0
      %v1142 = vadd.f32 0.0, %v1141
      %1143 = vmatmul.f32.gmra.mxu0 %v1032
      %v1144 = vpop.f32.mrf.mxu0
      %v1145 = vadd.f32 0.0, %v1144
      %1146 = vdwg.mxu0
      %1147 = vmatpush.msra.mxu0 %v961
      %1148 = vmatpush.msra.mxu0 %v959
      %1149 = vmatpush.msra.mxu0 %v957
      %1150 = vmatpush.msra.mxu0 %v955
      %1151 = vmatpush.msra.mxu0 %v953
      %1152 = vmatpush.msra.mxu0 %v951
      %1153 = vmatpush.msra.mxu0 %v949
      %1154 = vmatpush.msra.mxu0 %v947
      %1155 = vmatpush.msra.mxu0 %v937
      %1156 = vmatpush.msra.mxu0 %v935
      %1157 = vmatpush.msra.mxu0 %v933
      %1158 = vmatpush.msra.mxu0 %v931
      %1159 = vmatpush.msra.mxu0 %v929
      %1160 = vmatpush.msra.mxu0 %v927
      %1161 = vmatpush.msra.mxu0 %v925
      %1162 = vmatpush.msra.mxu0 %v923
      %1163 = vmatmul.f32.gmra.mxu0 %v971
      %v1164 = vpop.f32.mrf.mxu0
      %v1165 = vadd.f32 %v1052, %v1164
      %1166 = vmatmul.f32.gmra.mxu0 %v973
      %v1167 = vpop.f32.mrf.mxu0
      %v1168 = vadd.f32 %v1055, %v1167
      %1169 = vmatmul.f32.gmra.mxu0 %v975
      %v1170 = vpop.f32.mrf.mxu0
      %v1171 = vadd.f32 %v1058, %v1170
      %1172 = vmatmul.f32.gmra.mxu0 %v977
      %v1173 = vpop.f32.mrf.mxu0
      %v1174 = vadd.f32 %v1061, %v1173
      %1175 = vmatmul.f32.gmra.mxu0 %v979
      %v1176 = vpop.f32.mrf.mxu0
      %v1177 = vadd.f32 %v1064, %v1176
      %1178 = vmatmul.f32.gmra.mxu0 %v981
      %v1179 = vpop.f32.mrf.mxu0
      %v1180 = vadd.f32 %v1067, %v1179
      %1181 = vmatmul.f32.gmra.mxu0 %v983
      %v1182 = vpop.f32.mrf.mxu0
      %v1183 = vadd.f32 %v1070, %v1182
      %1184 = vmatmul.f32.gmra.mxu0 %v985
      %v1185 = vpop.f32.mrf.mxu0
      %v1186 = vadd.f32 %v1073, %v1185
      %1187 = vmatmul.f32.gmra.mxu0 %v987
      %v1188 = vpop.f32.mrf.mxu0
      %v1189 = vadd.f32 %v1076, %v1188
      %1190 = vmatmul.f32.gmra.mxu0 %v989
      %v1191 = vpop.f32.mrf.mxu0
      %v1192 = vadd.f32 %v1079, %v1191
      %1193 = vmatmul.f32.gmra.mxu0 %v991
      %v1194 = vpop.f32.mrf.mxu0
      %v1195 = vadd.f32 %v1082, %v1194
      %1196 = vmatmul.f32.gmra.mxu0 %v993
      %v1197 = vpop.f32.mrf.mxu0
      %v1198 = vadd.f32 %v1085, %v1197
      %1199 = vmatmul.f32.gmra.mxu0 %v995
      %v1200 = vpop.f32.mrf.mxu0
      %v1201 = vadd.f32 %v1088, %v1200
      %1202 = vmatmul.f32.gmra.mxu0 %v997
      %v1203 = vpop.f32.mrf.mxu0
      %v1204 = vadd.f32 %v1091, %v1203
      %1205 = vmatmul.f32.gmra.mxu0 %v999
      %v1206 = vpop.f32.mrf.mxu0
      %v1207 = vadd.f32 %v1094, %v1206
      %1208 = vmatmul.f32.gmra.mxu0 %v1001
      %v1209 = vpop.f32.mrf.mxu0
      %v1210 = vadd.f32 %v1097, %v1209
      %1211 = vmatmul.f32.gmra.mxu0 %v1003
      %v1212 = vpop.f32.mrf.mxu0
      %v1213 = vadd.f32 %v1100, %v1212
      %1214 = vmatmul.f32.gmra.mxu0 %v1005
      %v1215 = vpop.f32.mrf.mxu0
      %v1216 = vadd.f32 %v1103, %v1215
      %1217 = vmatmul.f32.gmra.mxu0 %v1007
      %v1218 = vpop.f32.mrf.mxu0
      %v1219 = vadd.f32 %v1106, %v1218
      %1220 = vmatmul.f32.gmra.mxu0 %v1009
      %v1221 = vpop.f32.mrf.mxu0
      %v1222 = vadd.f32 %v1109, %v1221
      %1223 = vmatmul.f32.gmra.mxu0 %v1011
      %v1224 = vpop.f32.mrf.mxu0
      %v1225 = vadd.f32 %v1112, %v1224
      %1226 = vmatmul.f32.gmra.mxu0 %v1013
      %v1227 = vpop.f32.mrf.mxu0
      %v1228 = vadd.f32 %v1115, %v1227
      %1229 = vmatmul.f32.gmra.mxu0 %v1015
      %v1230 = vpop.f32.mrf.mxu0
      %v1231 = vadd.f32 %v1118, %v1230
      %1232 = vmatmul.f32.gmra.mxu0 %v1017
      %v1233 = vpop.f32.mrf.mxu0
      %v1234 = vadd.f32 %v1121, %v1233
      %1235 = vmatmul.f32.gmra.mxu0 %v1019
      %v1236 = vpop.f32.mrf.mxu0
      %v1237 = vadd.f32 %v1124, %v1236
      %1238 = vmatmul.f32.gmra.mxu0 %v1021
      %v1239 = vpop.f32.mrf.mxu0
      %v1240 = vadd.f32 %v1127, %v1239
      %1241 = vmatmul.f32.gmra.mxu0 %v1023
      %v1242 = vpop.f32.mrf.mxu0
      %v1243 = vadd.f32 %v1130, %v1242
      %1244 = vmatmul.f32.gmra.mxu0 %v1025
      %v1245 = vpop.f32.mrf.mxu0
      %v1246 = vadd.f32 %v1133, %v1245
      %1247 = vmatmul.f32.gmra.mxu0 %v1027
      %v1248 = vpop.f32.mrf.mxu0
      %v1249 = vadd.f32 %v1136, %v1248
      %1250 = vmatmul.f32.gmra.mxu0 %v1029
      %v1251 = vpop.f32.mrf.mxu0
      %v1252 = vadd.f32 %v1139, %v1251
      %1253 = vmatmul.f32.gmra.mxu0 %v1031
      %v1254 = vpop.f32.mrf.mxu0
      %v1255 = vadd.f32 %v1142, %v1254
      %1256 = vmatmul.f32.gmra.mxu0 %v1033
      %v1257 = vpop.f32.mrf.mxu0
      %v1258 = vadd.f32 %v1145, %v1257
      %1259 = vdwg.mxu0
      %v1260 = vld [vmem:[%s401] sm:$0xff]
      %v1261 = vld [vmem:[%s401 + $0x8] sm:$0xff]
      %v1262 = vld [vmem:[%s401 + $0x10] sm:$0xff]
      %v1263 = vld [vmem:[%s401 + $0x18] sm:$0xff]
      %v1264 = vld [vmem:[%s401 + $0x20] sm:$0xff]
      %v1265 = vld [vmem:[%s401 + $0x28] sm:$0xff]
      %v1266 = vld [vmem:[%s401 + $0x30] sm:$0xff]
      %v1267 = vld [vmem:[%s401 + $0x38] sm:$0xff]
      %v1268 = vld [vmem:[%s401 + $0x40] sm:$0xff]
      %v1269 = vld [vmem:[%s401 + $0x48] sm:$0xff]
      %v1270 = vld [vmem:[%s401 + $0x50] sm:$0xff]
      %v1271 = vld [vmem:[%s401 + $0x58] sm:$0xff]
      %v1272 = vld [vmem:[%s401 + $0x60] sm:$0xff]
      %v1273 = vld [vmem:[%s401 + $0x68] sm:$0xff]
      %v1274 = vld [vmem:[%s401 + $0x70] sm:$0xff]
      %v1275 = vld [vmem:[%s401 + $0x78] sm:$0xff]
      %v1276 = vld [vmem:[%s401 + $0x80] sm:$0xff]
      %v1277 = vld [vmem:[%s401 + $0x88] sm:$0xff]
      %v1278 = vld [vmem:[%s401 + $0x90] sm:$0xff]
      %v1279 = vld [vmem:[%s401 + $0x98] sm:$0xff]
      %v1280 = vld [vmem:[%s401 + $0xa0] sm:$0xff]
      %v1281 = vld [vmem:[%s401 + $0xa8] sm:$0xff]
      %v1282 = vld [vmem:[%s401 + $0xb0] sm:$0xff]
      %v1283 = vld [vmem:[%s401 + $0xb8] sm:$0xff]
      %v1284 = vld [vmem:[%s401 + $0xc0] sm:$0xff]
      %v1285 = vld [vmem:[%s401 + $0xc8] sm:$0xff]
      %v1286 = vld [vmem:[%s401 + $0xd0] sm:$0xff]
      %v1287 = vld [vmem:[%s401 + $0xd8] sm:$0xff]
      %v1288 = vld [vmem:[%s401 + $0xe0] sm:$0xff]
      %v1289 = vld [vmem:[%s401 + $0xe8] sm:$0xff]
      %v1290 = vld [vmem:[%s401 + $0xf0] sm:$0xff]
      %v1291 = vld [vmem:[%s401 + $0xf8] sm:$0xff]
      %v1292 = vsel %vm720, %v1260, 0.0
      %v1293 = vsel %vm720, %v1261, 0.0
      %v1294 = vadd.f32 %v1292, %v1293
      %v1295 = vsel %vm720, %v1262, 0.0
      %v1296 = vadd.f32 %v1294, %v1295
      %v1297 = vsel %vm720, %v1263, 0.0
      %v1298 = vadd.f32 %v1296, %v1297
      %v1299 = vsel %vm720, %v1264, 0.0
      %v1300 = vadd.f32 %v1298, %v1299
      %v1301 = vsel %vm720, %v1265, 0.0
      %v1302 = vadd.f32 %v1300, %v1301
      %v1303 = vsel %vm720, %v1266, 0.0
      %v1304 = vadd.f32 %v1302, %v1303
      %v1305 = vsel %vm720, %v1267, 0.0
      %v1306 = vadd.f32 %v1304, %v1305
      %v1307 = vsel %vm720, %v1268, 0.0
      %v1308 = vadd.f32 %v1306, %v1307
      %v1309 = vsel %vm720, %v1269, 0.0
      %v1310 = vadd.f32 %v1308, %v1309
      %v1311 = vsel %vm720, %v1270, 0.0
      %v1312 = vadd.f32 %v1310, %v1311
      %v1313 = vsel %vm720, %v1271, 0.0
      %v1314 = vadd.f32 %v1312, %v1313
      %v1315 = vsel %vm720, %v1272, 0.0
      %v1316 = vadd.f32 %v1314, %v1315
      %v1317 = vsel %vm720, %v1273, 0.0
      %v1318 = vadd.f32 %v1316, %v1317
      %v1319 = vsel %vm720, %v1274, 0.0
      %v1320 = vadd.f32 %v1318, %v1319
      %v1321 = vsel %vm720, %v1275, 0.0
      %v1322 = vadd.f32 %v1320, %v1321
      %v1323 = vsel %vm720, %v1276, 0.0
      %v1324 = vadd.f32 %v1322, %v1323
      %v1325 = vsel %vm720, %v1277, 0.0
      %v1326 = vadd.f32 %v1324, %v1325
      %v1327 = vsel %vm720, %v1278, 0.0
      %v1328 = vadd.f32 %v1326, %v1327
      %v1329 = vsel %vm720, %v1279, 0.0
      %v1330 = vadd.f32 %v1328, %v1329
      %v1331 = vsel %vm720, %v1280, 0.0
      %v1332 = vadd.f32 %v1330, %v1331
      %v1333 = vsel %vm720, %v1281, 0.0
      %v1334 = vadd.f32 %v1332, %v1333
      %v1335 = vsel %vm720, %v1282, 0.0
      %v1336 = vadd.f32 %v1334, %v1335
      %v1337 = vsel %vm720, %v1283, 0.0
      %v1338 = vadd.f32 %v1336, %v1337
      %v1339 = vsel %vm720, %v1284, 0.0
      %v1340 = vadd.f32 %v1338, %v1339
      %v1341 = vsel %vm720, %v1285, 0.0
      %v1342 = vadd.f32 %v1340, %v1341
      %v1343 = vsel %vm720, %v1286, 0.0
      %v1344 = vadd.f32 %v1342, %v1343
      %v1345 = vsel %vm720, %v1287, 0.0
      %v1346 = vadd.f32 %v1344, %v1345
      %v1347 = vsel %vm720, %v1288, 0.0
      %v1348 = vadd.f32 %v1346, %v1347
      %v1349 = vsel %vm720, %v1289, 0.0
      %v1350 = vadd.f32 %v1348, %v1349
      %v1351 = vsel %vm720, %v1290, 0.0
      %v1352 = vadd.f32 %v1350, %v1351
      %v1353 = vsel %vm720, %v1291, 0.0
      %v1354 = vadd.f32 %v1352, %v1353
      %v1355 = vrot.slane %v1354, 4
      %v1356 = vadd.f32 %v1354, %v1355
      %v1357 = vrot.slane %v1356, 2
      %v1358 = vadd.f32 %v1356, %v1357
      %v1359 = vrot.slane %v1358, 1
      %v1360 = vadd.f32 %v1358, %v1359
      %v1361 = vrcp.pop 256.0
      %v1362 = vmul.f32 256.0, %v1361
      %v1363 = vsub.f32 1.0, %v1362
      %v1364 = vmul.f32 %v1361, %v1363
      %v1365 = vadd.f32 %v1361, %v1364
      %vm1366 = vweird.f32 %v1361
      %v1367 = vsel %vm1366, %v1361, %v1365
      %v1368 = vmul.f32 %v1360, %v1367
      %1370 = vrot.lane.b32.xlu0 %v1368, 16
      %v1371 = vpop.permute.xlu0 %1370
      %v1373 = vsel %vm729, %v1165, %v1371
      %v1374 = vsel %vm729, %v1168, %v1371
      %v1375 = vsel %vm729, %v1171, %v1371
      %v1376 = vsel %vm729, %v1174, %v1371
      %v1377 = vsel %vm729, %v1177, %v1371
      %v1378 = vsel %vm729, %v1180, %v1371
      %v1379 = vsel %vm729, %v1183, %v1371
      %v1380 = vsel %vm729, %v1186, %v1371
      %v1381 = vsel %vm729, %v1189, %v1371
      %v1382 = vsel %vm729, %v1192, %v1371
      %v1383 = vsel %vm729, %v1195, %v1371
      %v1384 = vsel %vm729, %v1198, %v1371
      %v1385 = vsel %vm729, %v1201, %v1371
      %v1386 = vsel %vm729, %v1204, %v1371
      %v1387 = vsel %vm729, %v1207, %v1371
      %v1388 = vsel %vm729, %v1210, %v1371
      %v1389 = vsel %vm729, %v1213, %v1371
      %v1390 = vsel %vm729, %v1216, %v1371
      %v1391 = vsel %vm729, %v1219, %v1371
      %v1392 = vsel %vm729, %v1222, %v1371
      %v1393 = vsel %vm729, %v1225, %v1371
      %v1394 = vsel %vm729, %v1228, %v1371
      %v1395 = vsel %vm729, %v1231, %v1371
      %v1396 = vsel %vm729, %v1234, %v1371
      %v1397 = vsel %vm729, %v1237, %v1371
      %v1398 = vsel %vm729, %v1240, %v1371
      %v1399 = vsel %vm729, %v1243, %v1371
      %v1400 = vsel %vm729, %v1246, %v1371
      %v1401 = vsel %vm729, %v1249, %v1371
      %v1402 = vsel %vm729, %v1252, %v1371
      %v1403 = vsel %vm729, %v1255, %v1371
      %v1404 = vsel %vm729, %v1258, %v1371
      %v1437 = vrot.slane %v1373, 7
      %v1438 = vrot.slane %v1374, 7
      %v1439 = vsel %vm440, %v1437, %v1438
      %v1440 = vrot.slane %v1375, 7
      %v1441 = vrot.slane %v1376, 7
      %v1442 = vsel %vm440, %v1440, %v1441
      %v1443 = vrot.slane %v1377, 7
      %v1444 = vrot.slane %v1378, 7
      %v1445 = vsel %vm440, %v1443, %v1444
      %v1446 = vrot.slane %v1379, 7
      %v1447 = vrot.slane %v1380, 7
      %v1448 = vsel %vm440, %v1446, %v1447
      %v1449 = vrot.slane %v1381, 7
      %v1450 = vrot.slane %v1382, 7
      %v1451 = vsel %vm440, %v1449, %v1450
      %v1452 = vrot.slane %v1383, 7
      %v1453 = vrot.slane %v1384, 7
      %v1454 = vsel %vm440, %v1452, %v1453
      %v1455 = vrot.slane %v1385, 7
      %v1456 = vrot.slane %v1386, 7
      %v1457 = vsel %vm440, %v1455, %v1456
      %v1458 = vrot.slane %v1387, 7
      %v1459 = vrot.slane %v1388, 7
      %v1460 = vsel %vm440, %v1458, %v1459
      %v1461 = vrot.slane %v1389, 7
      %v1462 = vrot.slane %v1390, 7
      %v1463 = vsel %vm440, %v1461, %v1462
      %v1464 = vrot.slane %v1391, 7
      %v1465 = vrot.slane %v1392, 7
      %v1466 = vsel %vm440, %v1464, %v1465
      %v1467 = vrot.slane %v1393, 7
      %v1468 = vrot.slane %v1394, 7
      %v1469 = vsel %vm440, %v1467, %v1468
      %v1470 = vrot.slane %v1395, 7
      %v1471 = vrot.slane %v1396, 7
      %v1472 = vsel %vm440, %v1470, %v1471
      %v1473 = vrot.slane %v1397, 7
      %v1474 = vrot.slane %v1398, 7
      %v1475 = vsel %vm440, %v1473, %v1474
      %v1476 = vrot.slane %v1399, 7
      %v1477 = vrot.slane %v1400, 7
      %v1478 = vsel %vm440, %v1476, %v1477
      %v1479 = vrot.slane %v1401, 7
      %v1480 = vrot.slane %v1402, 7
      %v1481 = vsel %vm440, %v1479, %v1480
      %v1482 = vrot.slane %v1403, 7
      %v1483 = vrot.slane %v1404, 7
      %v1484 = vsel %vm440, %v1482, %v1483
      %v1532 = vsel %vm440, 0.0, %v1437
      %v1533 = vsel %vm440, 0.0, %v1440
      %v1534 = vsel %vm440, 0.0, %v1443
      %v1535 = vsel %vm440, 0.0, %v1446
      %v1536 = vsel %vm440, 0.0, %v1449
      %v1537 = vsel %vm440, 0.0, %v1452
      %v1538 = vsel %vm440, 0.0, %v1455
      %v1539 = vsel %vm440, 0.0, %v1458
      %v1540 = vsel %vm440, 0.0, %v1461
      %v1541 = vsel %vm440, 0.0, %v1464
      %v1542 = vsel %vm440, 0.0, %v1467
      %v1543 = vsel %vm440, 0.0, %v1470
      %v1544 = vsel %vm440, 0.0, %v1473
      %v1545 = vsel %vm440, 0.0, %v1476
      %v1546 = vsel %vm440, 0.0, %v1479
      %v1547 = vsel %vm440, 0.0, %v1482
      %v1548 = vsel %vm440, %v1438, 0.0
      %v1549 = vsel %vm440, %v1441, 0.0
      %v1550 = vsel %vm440, %v1444, 0.0
      %v1551 = vsel %vm440, %v1447, 0.0
      %v1552 = vsel %vm440, %v1450, 0.0
      %v1553 = vsel %vm440, %v1453, 0.0
      %v1554 = vsel %vm440, %v1456, 0.0
      %v1555 = vsel %vm440, %v1459, 0.0
      %v1556 = vsel %vm440, %v1462, 0.0
      %v1557 = vsel %vm440, %v1465, 0.0
      %v1558 = vsel %vm440, %v1468, 0.0
      %v1559 = vsel %vm440, %v1471, 0.0
      %v1560 = vsel %vm440, %v1474, 0.0
      %v1561 = vsel %vm440, %v1477, 0.0
      %v1562 = vsel %vm440, %v1480, 0.0
      %v1563 = vsel %vm440, %v1483, 0.0
      %v1594 = vrot.slane %v1532, 1
      %v1595 = vrot.slane %v1439, 1
      %v1596 = vsel %vm472, %v1594, %v1595
      %v1597 = vrot.slane %v1548, 1
      %v1598 = vsel %vm472, %v1595, %v1597
      %v1599 = vrot.slane %v1533, 1
      %v1600 = vrot.slane %v1442, 1
      %v1601 = vsel %vm472, %v1599, %v1600
      %v1602 = vrot.slane %v1549, 1
      %v1603 = vsel %vm472, %v1600, %v1602
      %v1604 = vrot.slane %v1534, 1
      %v1605 = vrot.slane %v1445, 1
      %v1606 = vsel %vm472, %v1604, %v1605
      %v1607 = vrot.slane %v1550, 1
      %v1608 = vsel %vm472, %v1605, %v1607
      %v1609 = vrot.slane %v1535, 1
      %v1610 = vrot.slane %v1448, 1
      %v1611 = vsel %vm472, %v1609, %v1610
      %v1612 = vrot.slane %v1551, 1
      %v1613 = vsel %vm472, %v1610, %v1612
      %v1614 = vrot.slane %v1536, 1
      %v1615 = vrot.slane %v1451, 1
      %v1616 = vsel %vm472, %v1614, %v1615
      %v1617 = vrot.slane %v1552, 1
      %v1618 = vsel %vm472, %v1615, %v1617
      %v1619 = vrot.slane %v1537, 1
      %v1620 = vrot.slane %v1454, 1
      %v1621 = vsel %vm472, %v1619, %v1620
      %v1622 = vrot.slane %v1553, 1
      %v1623 = vsel %vm472, %v1620, %v1622
      %v1624 = vrot.slane %v1538, 1
      %v1625 = vrot.slane %v1457, 1
      %v1626 = vsel %vm472, %v1624, %v1625
      %v1627 = vrot.slane %v1554, 1
      %v1628 = vsel %vm472, %v1625, %v1627
      %v1629 = vrot.slane %v1539, 1
      %v1630 = vrot.slane %v1460, 1
      %v1631 = vsel %vm472, %v1629, %v1630
      %v1632 = vrot.slane %v1555, 1
      %v1633 = vsel %vm472, %v1630, %v1632
      %v1634 = vrot.slane %v1540, 1
      %v1635 = vrot.slane %v1463, 1
      %v1636 = vsel %vm472, %v1634, %v1635
      %v1637 = vrot.slane %v1556, 1
      %v1638 = vsel %vm472, %v1635, %v1637
      %v1639 = vrot.slane %v1541, 1
      %v1640 = vrot.slane %v1466, 1
      %v1641 = vsel %vm472, %v1639, %v1640
      %v1642 = vrot.slane %v1557, 1
      %v1643 = vsel %vm472, %v1640, %v1642
      %v1644 = vrot.slane %v1542, 1
      %v1645 = vrot.slane %v1469, 1
      %v1646 = vsel %vm472, %v1644, %v1645
      %v1647 = vrot.slane %v1558, 1
      %v1648 = vsel %vm472, %v1645, %v1647
      %v1649 = vrot.slane %v1543, 1
      %v1650 = vrot.slane %v1472, 1
      %v1651 = vsel %vm472, %v1649, %v1650
      %v1652 = vrot.slane %v1559, 1
      %v1653 = vsel %vm472, %v1650, %v1652
      %v1654 = vrot.slane %v1544, 1
      %v1655 = vrot.slane %v1475, 1
      %v1656 = vsel %vm472, %v1654, %v1655
      %v1657 = vrot.slane %v1560, 1
      %v1658 = vsel %vm472, %v1655, %v1657
      %v1659 = vrot.slane %v1545, 1
      %v1660 = vrot.slane %v1478, 1
      %v1661 = vsel %vm472, %v1659, %v1660
      %v1662 = vrot.slane %v1561, 1
      %v1663 = vsel %vm472, %v1660, %v1662
      %v1664 = vrot.slane %v1546, 1
      %v1665 = vrot.slane %v1481, 1
      %v1666 = vsel %vm472, %v1664, %v1665
      %v1667 = vrot.slane %v1562, 1
      %v1668 = vsel %vm472, %v1665, %v1667
      %1669 = vrot.lane.b32.xlu0 %v474, 24
      %v1670 = vpop.permute.xlu0 %1669
      %1671 = vrot.lane.b32.xlu0 %v1596, 24
      %v1672 = vpop.permute.xlu0 %1671
      %1673 = vrot.lane.b32.xlu0 %v1598, 24
      %v1674 = vpop.permute.xlu0 %1673
      %1675 = vrot.lane.b32.xlu0 %v1601, 24
      %v1676 = vpop.permute.xlu0 %1675
      %1677 = vrot.lane.b32.xlu0 %v1603, 24
      %v1678 = vpop.permute.xlu0 %1677
      %1679 = vrot.lane.b32.xlu0 %v1606, 24
      %v1680 = vpop.permute.xlu0 %1679
      %1681 = vrot.lane.b32.xlu0 %v1608, 24
      %v1682 = vpop.permute.xlu0 %1681
      %1683 = vrot.lane.b32.xlu0 %v1611, 24
      %v1684 = vpop.permute.xlu0 %1683
      %1685 = vrot.lane.b32.xlu0 %v1613, 24
      %v1686 = vpop.permute.xlu0 %1685
      %1687 = vrot.lane.b32.xlu0 %v1616, 24
      %v1688 = vpop.permute.xlu0 %1687
      %1689 = vrot.lane.b32.xlu0 %v1618, 24
      %v1690 = vpop.permute.xlu0 %1689
      %1691 = vrot.lane.b32.xlu0 %v1621, 24
      %v1692 = vpop.permute.xlu0 %1691
      %1693 = vrot.lane.b32.xlu0 %v1623, 24
      %v1694 = vpop.permute.xlu0 %1693
      %1695 = vrot.lane.b32.xlu0 %v1626, 24
      %v1696 = vpop.permute.xlu0 %1695
      %1697 = vrot.lane.b32.xlu0 %v1628, 24
      %v1698 = vpop.permute.xlu0 %1697
      %1699 = vrot.lane.b32.xlu0 %v1631, 24
      %v1700 = vpop.permute.xlu0 %1699
      %1701 = vrot.lane.b32.xlu0 %v1633, 24
      %v1702 = vpop.permute.xlu0 %1701
      %1703 = vrot.lane.b32.xlu0 %v1636, 24
      %v1704 = vpop.permute.xlu0 %1703
      %1705 = vrot.lane.b32.xlu0 %v1638, 24
      %v1706 = vpop.permute.xlu0 %1705
      %1707 = vrot.lane.b32.xlu0 %v1641, 24
      %v1708 = vpop.permute.xlu0 %1707
      %1709 = vrot.lane.b32.xlu0 %v1643, 24
      %v1710 = vpop.permute.xlu0 %1709
      %1711 = vrot.lane.b32.xlu0 %v1646, 24
      %v1712 = vpop.permute.xlu0 %1711
      %1713 = vrot.lane.b32.xlu0 %v1648, 24
      %v1714 = vpop.permute.xlu0 %1713
      %1715 = vrot.lane.b32.xlu0 %v1651, 24
      %v1716 = vpop.permute.xlu0 %1715
      %1717 = vrot.lane.b32.xlu0 %v1653, 24
      %v1718 = vpop.permute.xlu0 %1717
      %1719 = vrot.lane.b32.xlu0 %v1656, 24
      %v1720 = vpop.permute.xlu0 %1719
      %1721 = vrot.lane.b32.xlu0 %v1658, 24
      %v1722 = vpop.permute.xlu0 %1721
      %1723 = vrot.lane.b32.xlu0 %v1661, 24
      %v1724 = vpop.permute.xlu0 %1723
      %1725 = vrot.lane.b32.xlu0 %v1663, 24
      %v1726 = vpop.permute.xlu0 %1725
      %1727 = vrot.lane.b32.xlu0 %v1666, 24
      %v1728 = vpop.permute.xlu0 %1727
      %1729 = vrot.lane.b32.xlu0 %v1668, 24
      %v1730 = vpop.permute.xlu0 %1729
      %v1762 = vrot.slane %v1532, 2
      %v1763 = vrot.slane %v1439, 2
      %v1764 = vsel %vm520, %v1762, %v1763
      %v1765 = vrot.slane %v1548, 2
      %v1766 = vsel %vm520, %v1763, %v1765
      %v1767 = vrot.slane %v1533, 2
      %v1768 = vrot.slane %v1442, 2
      %v1769 = vsel %vm520, %v1767, %v1768
      %v1770 = vrot.slane %v1549, 2
      %v1771 = vsel %vm520, %v1768, %v1770
      %v1772 = vrot.slane %v1534, 2
      %v1773 = vrot.slane %v1445, 2
      %v1774 = vsel %vm520, %v1772, %v1773
      %v1775 = vrot.slane %v1550, 2
      %v1776 = vsel %vm520, %v1773, %v1775
      %v1777 = vrot.slane %v1535, 2
      %v1778 = vrot.slane %v1448, 2
      %v1779 = vsel %vm520, %v1777, %v1778
      %v1780 = vrot.slane %v1551, 2
      %v1781 = vsel %vm520, %v1778, %v1780
      %v1782 = vrot.slane %v1536, 2
      %v1783 = vrot.slane %v1451, 2
      %v1784 = vsel %vm520, %v1782, %v1783
      %v1785 = vrot.slane %v1552, 2
      %v1786 = vsel %vm520, %v1783, %v1785
      %v1787 = vrot.slane %v1537, 2
      %v1788 = vrot.slane %v1454, 2
      %v1789 = vsel %vm520, %v1787, %v1788
      %v1790 = vrot.slane %v1553, 2
      %v1791 = vsel %vm520, %v1788, %v1790
      %v1792 = vrot.slane %v1538, 2
      %v1793 = vrot.slane %v1457, 2
      %v1794 = vsel %vm520, %v1792, %v1793
      %v1795 = vrot.slane %v1554, 2
      %v1796 = vsel %vm520, %v1793, %v1795
      %v1797 = vrot.slane %v1539, 2
      %v1798 = vrot.slane %v1460, 2
      %v1799 = vsel %vm520, %v1797, %v1798
      %v1800 = vrot.slane %v1555, 2
      %v1801 = vsel %vm520, %v1798, %v1800
      %v1802 = vrot.slane %v1540, 2
      %v1803 = vrot.slane %v1463, 2
      %v1804 = vsel %vm520, %v1802, %v1803
      %v1805 = vrot.slane %v1556, 2
      %v1806 = vsel %vm520, %v1803, %v1805
      %v1807 = vrot.slane %v1541, 2
      %v1808 = vrot.slane %v1466, 2
      %v1809 = vsel %vm520, %v1807, %v1808
      %v1810 = vrot.slane %v1557, 2
      %v1811 = vsel %vm520, %v1808, %v1810
      %v1812 = vrot.slane %v1542, 2
      %v1813 = vrot.slane %v1469, 2
      %v1814 = vsel %vm520, %v1812, %v1813
      %v1815 = vrot.slane %v1558, 2
      %v1816 = vsel %vm520, %v1813, %v1815
      %v1817 = vrot.slane %v1543, 2
      %v1818 = vrot.slane %v1472, 2
      %v1819 = vsel %vm520, %v1817, %v1818
      %v1820 = vrot.slane %v1559, 2
      %v1821 = vsel %vm520, %v1818, %v1820
      %v1822 = vrot.slane %v1544, 2
      %v1823 = vrot.slane %v1475, 2
      %v1824 = vsel %vm520, %v1822, %v1823
      %v1825 = vrot.slane %v1560, 2
      %v1826 = vsel %vm520, %v1823, %v1825
      %v1827 = vrot.slane %v1545, 2
      %v1828 = vrot.slane %v1478, 2
      %v1829 = vsel %vm520, %v1827, %v1828
      %v1830 = vrot.slane %v1561, 2
      %v1831 = vsel %vm520, %v1828, %v1830
      %v1832 = vrot.slane %v1546, 2
      %v1833 = vrot.slane %v1481, 2
      %v1834 = vsel %vm520, %v1832, %v1833
      %v1835 = vrot.slane %v1562, 2
      %v1836 = vsel %vm520, %v1833, %v1835
      %1837 = vrot.lane.b32.xlu0 %v522, 48
      %v1838 = vpop.permute.xlu0 %1837
      %1839 = vrot.lane.b32.xlu0 %v1764, 48
      %v1840 = vpop.permute.xlu0 %1839
      %1841 = vrot.lane.b32.xlu0 %v1766, 48
      %v1842 = vpop.permute.xlu0 %1841
      %1843 = vrot.lane.b32.xlu0 %v1769, 48
      %v1844 = vpop.permute.xlu0 %1843
      %1845 = vrot.lane.b32.xlu0 %v1771, 48
      %v1846 = vpop.permute.xlu0 %1845
      %1847 = vrot.lane.b32.xlu0 %v1774, 48
      %v1848 = vpop.permute.xlu0 %1847
      %1849 = vrot.lane.b32.xlu0 %v1776, 48
      %v1850 = vpop.permute.xlu0 %1849
      %1851 = vrot.lane.b32.xlu0 %v1779, 48
      %v1852 = vpop.permute.xlu0 %1851
      %1853 = vrot.lane.b32.xlu0 %v1781, 48
      %v1854 = vpop.permute.xlu0 %1853
      %1855 = vrot.lane.b32.xlu0 %v1784, 48
      %v1856 = vpop.permute.xlu0 %1855
      %1857 = vrot.lane.b32.xlu0 %v1786, 48
      %v1858 = vpop.permute.xlu0 %1857
      %1859 = vrot.lane.b32.xlu0 %v1789, 48
      %v1860 = vpop.permute.xlu0 %1859
      %1861 = vrot.lane.b32.xlu0 %v1791, 48
      %v1862 = vpop.permute.xlu0 %1861
      %1863 = vrot.lane.b32.xlu0 %v1794, 48
      %v1864 = vpop.permute.xlu0 %1863
      %1865 = vrot.lane.b32.xlu0 %v1796, 48
      %v1866 = vpop.permute.xlu0 %1865
      %1867 = vrot.lane.b32.xlu0 %v1799, 48
      %v1868 = vpop.permute.xlu0 %1867
      %1869 = vrot.lane.b32.xlu0 %v1801, 48
      %v1870 = vpop.permute.xlu0 %1869
      %1871 = vrot.lane.b32.xlu0 %v1804, 48
      %v1872 = vpop.permute.xlu0 %1871
      %1873 = vrot.lane.b32.xlu0 %v1806, 48
      %v1874 = vpop.permute.xlu0 %1873
      %1875 = vrot.lane.b32.xlu0 %v1809, 48
      %v1876 = vpop.permute.xlu0 %1875
      %1877 = vrot.lane.b32.xlu0 %v1811, 48
      %v1878 = vpop.permute.xlu0 %1877
      %1879 = vrot.lane.b32.xlu0 %v1814, 48
      %v1880 = vpop.permute.xlu0 %1879
      %1881 = vrot.lane.b32.xlu0 %v1816, 48
      %v1882 = vpop.permute.xlu0 %1881
      %1883 = vrot.lane.b32.xlu0 %v1819, 48
      %v1884 = vpop.permute.xlu0 %1883
      %1885 = vrot.lane.b32.xlu0 %v1821, 48
      %v1886 = vpop.permute.xlu0 %1885
      %1887 = vrot.lane.b32.xlu0 %v1824, 48
      %v1888 = vpop.permute.xlu0 %1887
      %1889 = vrot.lane.b32.xlu0 %v1826, 48
      %v1890 = vpop.permute.xlu0 %1889
      %1891 = vrot.lane.b32.xlu0 %v1829, 48
      %v1892 = vpop.permute.xlu0 %1891
      %1893 = vrot.lane.b32.xlu0 %v1831, 48
      %v1894 = vpop.permute.xlu0 %1893
      %1895 = vrot.lane.b32.xlu0 %v1834, 48
      %v1896 = vpop.permute.xlu0 %1895
      %1897 = vrot.lane.b32.xlu0 %v1836, 48
      %v1898 = vpop.permute.xlu0 %1897
      %1931 = vrot.lane.b32.xlu0 %v1532, 72
      %v1932 = vpop.permute.xlu0 %1931
      %1933 = vrot.lane.b32.xlu0 %v1439, 72
      %v1934 = vpop.permute.xlu0 %1933
      %1935 = vrot.lane.b32.xlu0 %v1533, 72
      %v1936 = vpop.permute.xlu0 %1935
      %1937 = vrot.lane.b32.xlu0 %v1442, 72
      %v1938 = vpop.permute.xlu0 %1937
      %1939 = vrot.lane.b32.xlu0 %v1534, 72
      %v1940 = vpop.permute.xlu0 %1939
      %1941 = vrot.lane.b32.xlu0 %v1445, 72
      %v1942 = vpop.permute.xlu0 %1941
      %1943 = vrot.lane.b32.xlu0 %v1535, 72
      %v1944 = vpop.permute.xlu0 %1943
      %1945 = vrot.lane.b32.xlu0 %v1448, 72
      %v1946 = vpop.permute.xlu0 %1945
      %1947 = vrot.lane.b32.xlu0 %v1536, 72
      %v1948 = vpop.permute.xlu0 %1947
      %1949 = vrot.lane.b32.xlu0 %v1451, 72
      %v1950 = vpop.permute.xlu0 %1949
      %1951 = vrot.lane.b32.xlu0 %v1537, 72
      %v1952 = vpop.permute.xlu0 %1951
      %1953 = vrot.lane.b32.xlu0 %v1454, 72
      %v1954 = vpop.permute.xlu0 %1953
      %1955 = vrot.lane.b32.xlu0 %v1538, 72
      %v1956 = vpop.permute.xlu0 %1955
      %1957 = vrot.lane.b32.xlu0 %v1457, 72
      %v1958 = vpop.permute.xlu0 %1957
      %1959 = vrot.lane.b32.xlu0 %v1539, 72
      %v1960 = vpop.permute.xlu0 %1959
      %1961 = vrot.lane.b32.xlu0 %v1460, 72
      %v1962 = vpop.permute.xlu0 %1961
      %1963 = vrot.lane.b32.xlu0 %v1540, 72
      %v1964 = vpop.permute.xlu0 %1963
      %1965 = vrot.lane.b32.xlu0 %v1463, 72
      %v1966 = vpop.permute.xlu0 %1965
      %1967 = vrot.lane.b32.xlu0 %v1541, 72
      %v1968 = vpop.permute.xlu0 %1967
      %1969 = vrot.lane.b32.xlu0 %v1466, 72
      %v1970 = vpop.permute.xlu0 %1969
      %1971 = vrot.lane.b32.xlu0 %v1542, 72
      %v1972 = vpop.permute.xlu0 %1971
      %1973 = vrot.lane.b32.xlu0 %v1469, 72
      %v1974 = vpop.permute.xlu0 %1973
      %1975 = vrot.lane.b32.xlu0 %v1543, 72
      %v1976 = vpop.permute.xlu0 %1975
      %1977 = vrot.lane.b32.xlu0 %v1472, 72
      %v1978 = vpop.permute.xlu0 %1977
      %1979 = vrot.lane.b32.xlu0 %v1544, 72
      %v1980 = vpop.permute.xlu0 %1979
      %1981 = vrot.lane.b32.xlu0 %v1475, 72
      %v1982 = vpop.permute.xlu0 %1981
      %1983 = vrot.lane.b32.xlu0 %v1545, 72
      %v1984 = vpop.permute.xlu0 %1983
      %1985 = vrot.lane.b32.xlu0 %v1478, 72
      %v1986 = vpop.permute.xlu0 %1985
      %1987 = vrot.lane.b32.xlu0 %v1546, 72
      %v1988 = vpop.permute.xlu0 %1987
      %1989 = vrot.lane.b32.xlu0 %v1481, 72
      %v1990 = vpop.permute.xlu0 %1989
      %1991 = vrot.lane.b32.xlu0 %v1547, 72
      %v1992 = vpop.permute.xlu0 %1991
      %1993 = vrot.lane.b32.xlu0 %v1484, 72
      %v1994 = vpop.permute.xlu0 %1993
      %v2028 = vrot.slane %v1547, 1
      %v2029 = vrot.slane %v1484, 1
      %v2030 = vsel %vm472, %v2028, %v2029
      %v2031 = vrot.slane %v1563, 1
      %v2032 = vsel %vm472, %v2029, %v2031
      %2033 = vrot.lane.b32.xlu0 %v1596, 96
      %v2034 = vpop.permute.xlu0 %2033
      %2035 = vrot.lane.b32.xlu0 %v1598, 96
      %v2036 = vpop.permute.xlu0 %2035
      %2037 = vrot.lane.b32.xlu0 %v1601, 96
      %v2038 = vpop.permute.xlu0 %2037
      %2039 = vrot.lane.b32.xlu0 %v1603, 96
      %v2040 = vpop.permute.xlu0 %2039
      %2041 = vrot.lane.b32.xlu0 %v1606, 96
      %v2042 = vpop.permute.xlu0 %2041
      %2043 = vrot.lane.b32.xlu0 %v1608, 96
      %v2044 = vpop.permute.xlu0 %2043
      %2045 = vrot.lane.b32.xlu0 %v1611, 96
      %v2046 = vpop.permute.xlu0 %2045
      %2047 = vrot.lane.b32.xlu0 %v1613, 96
      %v2048 = vpop.permute.xlu0 %2047
      %2049 = vrot.lane.b32.xlu0 %v1616, 96
      %v2050 = vpop.permute.xlu0 %2049
      %2051 = vrot.lane.b32.xlu0 %v1618, 96
      %v2052 = vpop.permute.xlu0 %2051
      %2053 = vrot.lane.b32.xlu0 %v1621, 96
      %v2054 = vpop.permute.xlu0 %2053
      %2055 = vrot.lane.b32.xlu0 %v1623, 96
      %v2056 = vpop.permute.xlu0 %2055
      %2057 = vrot.lane.b32.xlu0 %v1626, 96
      %v2058 = vpop.permute.xlu0 %2057
      %2059 = vrot.lane.b32.xlu0 %v1628, 96
      %v2060 = vpop.permute.xlu0 %2059
      %2061 = vrot.lane.b32.xlu0 %v1631, 96
      %v2062 = vpop.permute.xlu0 %2061
      %2063 = vrot.lane.b32.xlu0 %v1633, 96
      %v2064 = vpop.permute.xlu0 %2063
      %2065 = vrot.lane.b32.xlu0 %v1636, 96
      %v2066 = vpop.permute.xlu0 %2065
      %2067 = vrot.lane.b32.xlu0 %v1638, 96
      %v2068 = vpop.permute.xlu0 %2067
      %2069 = vrot.lane.b32.xlu0 %v1641, 96
      %v2070 = vpop.permute.xlu0 %2069
      %2071 = vrot.lane.b32.xlu0 %v1643, 96
      %v2072 = vpop.permute.xlu0 %2071
      %2073 = vrot.lane.b32.xlu0 %v1646, 96
      %v2074 = vpop.permute.xlu0 %2073
      %2075 = vrot.lane.b32.xlu0 %v1648, 96
      %v2076 = vpop.permute.xlu0 %2075
      %2077 = vrot.lane.b32.xlu0 %v1651, 96
      %v2078 = vpop.permute.xlu0 %2077
      %2079 = vrot.lane.b32.xlu0 %v1653, 96
      %v2080 = vpop.permute.xlu0 %2079
      %2081 = vrot.lane.b32.xlu0 %v1656, 96
      %v2082 = vpop.permute.xlu0 %2081
      %2083 = vrot.lane.b32.xlu0 %v1658, 96
      %v2084 = vpop.permute.xlu0 %2083
      %2085 = vrot.lane.b32.xlu0 %v1661, 96
      %v2086 = vpop.permute.xlu0 %2085
      %2087 = vrot.lane.b32.xlu0 %v1663, 96
      %v2088 = vpop.permute.xlu0 %2087
      %2089 = vrot.lane.b32.xlu0 %v1666, 96
      %v2090 = vpop.permute.xlu0 %2089
      %2091 = vrot.lane.b32.xlu0 %v1668, 96
      %v2092 = vpop.permute.xlu0 %2091
      %2093 = vrot.lane.b32.xlu0 %v2030, 96
      %v2094 = vpop.permute.xlu0 %2093
      %2095 = vrot.lane.b32.xlu0 %v2032, 96
      %v2096 = vpop.permute.xlu0 %2095
      %v2129 = vrot.slane %v1547, 2
      %v2130 = vrot.slane %v1484, 2
      %v2131 = vsel %vm520, %v2129, %v2130
      %v2132 = vrot.slane %v1563, 2
      %v2133 = vsel %vm520, %v2130, %v2132
      %2134 = vrot.lane.b32.xlu0 %v1764, 120
      %v2135 = vpop.permute.xlu0 %2134
      %2136 = vrot.lane.b32.xlu0 %v1766, 120
      %v2137 = vpop.permute.xlu0 %2136
      %2138 = vrot.lane.b32.xlu0 %v1769, 120
      %v2139 = vpop.permute.xlu0 %2138
      %2140 = vrot.lane.b32.xlu0 %v1771, 120
      %v2141 = vpop.permute.xlu0 %2140
      %2142 = vrot.lane.b32.xlu0 %v1774, 120
      %v2143 = vpop.permute.xlu0 %2142
      %2144 = vrot.lane.b32.xlu0 %v1776, 120
      %v2145 = vpop.permute.xlu0 %2144
      %2146 = vrot.lane.b32.xlu0 %v1779, 120
      %v2147 = vpop.permute.xlu0 %2146
      %2148 = vrot.lane.b32.xlu0 %v1781, 120
      %v2149 = vpop.permute.xlu0 %2148
      %2150 = vrot.lane.b32.xlu0 %v1784, 120
      %v2151 = vpop.permute.xlu0 %2150
      %2152 = vrot.lane.b32.xlu0 %v1786, 120
      %v2153 = vpop.permute.xlu0 %2152
      %2154 = vrot.lane.b32.xlu0 %v1789, 120
      %v2155 = vpop.permute.xlu0 %2154
      %2156 = vrot.lane.b32.xlu0 %v1791, 120
      %v2157 = vpop.permute.xlu0 %2156
      %2158 = vrot.lane.b32.xlu0 %v1794, 120
      %v2159 = vpop.permute.xlu0 %2158
      %2160 = vrot.lane.b32.xlu0 %v1796, 120
      %v2161 = vpop.permute.xlu0 %2160
      %2162 = vrot.lane.b32.xlu0 %v1799, 120
      %v2163 = vpop.permute.xlu0 %2162
      %2164 = vrot.lane.b32.xlu0 %v1801, 120
      %v2165 = vpop.permute.xlu0 %2164
      %2166 = vrot.lane.b32.xlu0 %v1804, 120
      %v2167 = vpop.permute.xlu0 %2166
      %2168 = vrot.lane.b32.xlu0 %v1806, 120
      %v2169 = vpop.permute.xlu0 %2168
      %2170 = vrot.lane.b32.xlu0 %v1809, 120
      %v2171 = vpop.permute.xlu0 %2170
      %2172 = vrot.lane.b32.xlu0 %v1811, 120
      %v2173 = vpop.permute.xlu0 %2172
      %2174 = vrot.lane.b32.xlu0 %v1814, 120
      %v2175 = vpop.permute.xlu0 %2174
      %2176 = vrot.lane.b32.xlu0 %v1816, 120
      %v2177 = vpop.permute.xlu0 %2176
      %2178 = vrot.lane.b32.xlu0 %v1819, 120
      %v2179 = vpop.permute.xlu0 %2178
      %2180 = vrot.lane.b32.xlu0 %v1821, 120
      %v2181 = vpop.permute.xlu0 %2180
      %2182 = vrot.lane.b32.xlu0 %v1824, 120
      %v2183 = vpop.permute.xlu0 %2182
      %2184 = vrot.lane.b32.xlu0 %v1826, 120
      %v2185 = vpop.permute.xlu0 %2184
      %2186 = vrot.lane.b32.xlu0 %v1829, 120
      %v2187 = vpop.permute.xlu0 %2186
      %2188 = vrot.lane.b32.xlu0 %v1831, 120
      %v2189 = vpop.permute.xlu0 %2188
      %2190 = vrot.lane.b32.xlu0 %v1834, 120
      %v2191 = vpop.permute.xlu0 %2190
      %2192 = vrot.lane.b32.xlu0 %v1836, 120
      %v2193 = vpop.permute.xlu0 %2192
      %2194 = vrot.lane.b32.xlu0 %v2131, 120
      %v2195 = vpop.permute.xlu0 %2194
      %2196 = vrot.lane.b32.xlu0 %v2133, 120
      %v2197 = vpop.permute.xlu0 %2196
      %2230 = vrot.lane.b32.xlu0 %v1533, 16
      %v2231 = vpop.permute.xlu0 %2230
      %2232 = vrot.lane.b32.xlu0 %v1442, 16
      %v2233 = vpop.permute.xlu0 %2232
      %2234 = vrot.lane.b32.xlu0 %v1534, 16
      %v2235 = vpop.permute.xlu0 %2234
      %2236 = vrot.lane.b32.xlu0 %v1445, 16
      %v2237 = vpop.permute.xlu0 %2236
      %2238 = vrot.lane.b32.xlu0 %v1535, 16
      %v2239 = vpop.permute.xlu0 %2238
      %2240 = vrot.lane.b32.xlu0 %v1448, 16
      %v2241 = vpop.permute.xlu0 %2240
      %2242 = vrot.lane.b32.xlu0 %v1536, 16
      %v2243 = vpop.permute.xlu0 %2242
      %2244 = vrot.lane.b32.xlu0 %v1451, 16
      %v2245 = vpop.permute.xlu0 %2244
      %2246 = vrot.lane.b32.xlu0 %v1537, 16
      %v2247 = vpop.permute.xlu0 %2246
      %2248 = vrot.lane.b32.xlu0 %v1454, 16
      %v2249 = vpop.permute.xlu0 %2248
      %2250 = vrot.lane.b32.xlu0 %v1538, 16
      %v2251 = vpop.permute.xlu0 %2250
      %2252 = vrot.lane.b32.xlu0 %v1457, 16
      %v2253 = vpop.permute.xlu0 %2252
      %2254 = vrot.lane.b32.xlu0 %v1539, 16
      %v2255 = vpop.permute.xlu0 %2254
      %2256 = vrot.lane.b32.xlu0 %v1460, 16
      %v2257 = vpop.permute.xlu0 %2256
      %2258 = vrot.lane.b32.xlu0 %v1540, 16
      %v2259 = vpop.permute.xlu0 %2258
      %2260 = vrot.lane.b32.xlu0 %v1463, 16
      %v2261 = vpop.permute.xlu0 %2260
      %2262 = vrot.lane.b32.xlu0 %v1541, 16
      %v2263 = vpop.permute.xlu0 %2262
      %2264 = vrot.lane.b32.xlu0 %v1466, 16
      %v2265 = vpop.permute.xlu0 %2264
      %2266 = vrot.lane.b32.xlu0 %v1542, 16
      %v2267 = vpop.permute.xlu0 %2266
      %2268 = vrot.lane.b32.xlu0 %v1469, 16
      %v2269 = vpop.permute.xlu0 %2268
      %2270 = vrot.lane.b32.xlu0 %v1543, 16
      %v2271 = vpop.permute.xlu0 %2270
      %2272 = vrot.lane.b32.xlu0 %v1472, 16
      %v2273 = vpop.permute.xlu0 %2272
      %2274 = vrot.lane.b32.xlu0 %v1544, 16
      %v2275 = vpop.permute.xlu0 %2274
      %2276 = vrot.lane.b32.xlu0 %v1475, 16
      %v2277 = vpop.permute.xlu0 %2276
      %2278 = vrot.lane.b32.xlu0 %v1545, 16
      %v2279 = vpop.permute.xlu0 %2278
      %2280 = vrot.lane.b32.xlu0 %v1478, 16
      %v2281 = vpop.permute.xlu0 %2280
      %2282 = vrot.lane.b32.xlu0 %v1546, 16
      %v2283 = vpop.permute.xlu0 %2282
      %2284 = vrot.lane.b32.xlu0 %v1481, 16
      %v2285 = vpop.permute.xlu0 %2284
      %2286 = vrot.lane.b32.xlu0 %v1547, 16
      %v2287 = vpop.permute.xlu0 %2286
      %2288 = vrot.lane.b32.xlu0 %v1484, 16
      %v2289 = vpop.permute.xlu0 %2288
      %2290 = vrot.lane.b32.xlu0 0.0, 16
      %v2291 = vpop.permute.xlu0 %2290
      %2323 = vrot.lane.b32.xlu0 %v1601, 40
      %v2324 = vpop.permute.xlu0 %2323
      %2325 = vrot.lane.b32.xlu0 %v1603, 40
      %v2326 = vpop.permute.xlu0 %2325
      %2327 = vrot.lane.b32.xlu0 %v1606, 40
      %v2328 = vpop.permute.xlu0 %2327
      %2329 = vrot.lane.b32.xlu0 %v1608, 40
      %v2330 = vpop.permute.xlu0 %2329
      %2331 = vrot.lane.b32.xlu0 %v1611, 40
      %v2332 = vpop.permute.xlu0 %2331
      %2333 = vrot.lane.b32.xlu0 %v1613, 40
      %v2334 = vpop.permute.xlu0 %2333
      %2335 = vrot.lane.b32.xlu0 %v1616, 40
      %v2336 = vpop.permute.xlu0 %2335
      %2337 = vrot.lane.b32.xlu0 %v1618, 40
      %v2338 = vpop.permute.xlu0 %2337
      %2339 = vrot.lane.b32.xlu0 %v1621, 40
      %v2340 = vpop.permute.xlu0 %2339
      %2341 = vrot.lane.b32.xlu0 %v1623, 40
      %v2342 = vpop.permute.xlu0 %2341
      %2343 = vrot.lane.b32.xlu0 %v1626, 40
      %v2344 = vpop.permute.xlu0 %2343
      %2345 = vrot.lane.b32.xlu0 %v1628, 40
      %v2346 = vpop.permute.xlu0 %2345
      %2347 = vrot.lane.b32.xlu0 %v1631, 40
      %v2348 = vpop.permute.xlu0 %2347
      %2349 = vrot.lane.b32.xlu0 %v1633, 40
      %v2350 = vpop.permute.xlu0 %2349
      %2351 = vrot.lane.b32.xlu0 %v1636, 40
      %v2352 = vpop.permute.xlu0 %2351
      %2353 = vrot.lane.b32.xlu0 %v1638, 40
      %v2354 = vpop.permute.xlu0 %2353
      %2355 = vrot.lane.b32.xlu0 %v1641, 40
      %v2356 = vpop.permute.xlu0 %2355
      %2357 = vrot.lane.b32.xlu0 %v1643, 40
      %v2358 = vpop.permute.xlu0 %2357
      %2359 = vrot.lane.b32.xlu0 %v1646, 40
      %v2360 = vpop.permute.xlu0 %2359
      %2361 = vrot.lane.b32.xlu0 %v1648, 40
      %v2362 = vpop.permute.xlu0 %2361
      %2363 = vrot.lane.b32.xlu0 %v1651, 40
      %v2364 = vpop.permute.xlu0 %2363
      %2365 = vrot.lane.b32.xlu0 %v1653, 40
      %v2366 = vpop.permute.xlu0 %2365
      %2367 = vrot.lane.b32.xlu0 %v1656, 40
      %v2368 = vpop.permute.xlu0 %2367
      %2369 = vrot.lane.b32.xlu0 %v1658, 40
      %v2370 = vpop.permute.xlu0 %2369
      %2371 = vrot.lane.b32.xlu0 %v1661, 40
      %v2372 = vpop.permute.xlu0 %2371
      %2373 = vrot.lane.b32.xlu0 %v1663, 40
      %v2374 = vpop.permute.xlu0 %2373
      %2375 = vrot.lane.b32.xlu0 %v1666, 40
      %v2376 = vpop.permute.xlu0 %2375
      %2377 = vrot.lane.b32.xlu0 %v1668, 40
      %v2378 = vpop.permute.xlu0 %2377
      %2379 = vrot.lane.b32.xlu0 %v2030, 40
      %v2380 = vpop.permute.xlu0 %2379
      %2381 = vrot.lane.b32.xlu0 %v2032, 40
      %v2382 = vpop.permute.xlu0 %2381
      %2383 = vrot.lane.b32.xlu0 %v474, 40
      %v2384 = vpop.permute.xlu0 %2383
      %2416 = vrot.lane.b32.xlu0 %v1769, 64
      %v2417 = vpop.permute.xlu0 %2416
      %2418 = vrot.lane.b32.xlu0 %v1771, 64
      %v2419 = vpop.permute.xlu0 %2418
      %2420 = vrot.lane.b32.xlu0 %v1774, 64
      %v2421 = vpop.permute.xlu0 %2420
      %2422 = vrot.lane.b32.xlu0 %v1776, 64
      %v2423 = vpop.permute.xlu0 %2422
      %2424 = vrot.lane.b32.xlu0 %v1779, 64
      %v2425 = vpop.permute.xlu0 %2424
      %2426 = vrot.lane.b32.xlu0 %v1781, 64
      %v2427 = vpop.permute.xlu0 %2426
      %2428 = vrot.lane.b32.xlu0 %v1784, 64
      %v2429 = vpop.permute.xlu0 %2428
      %2430 = vrot.lane.b32.xlu0 %v1786, 64
      %v2431 = vpop.permute.xlu0 %2430
      %2432 = vrot.lane.b32.xlu0 %v1789, 64
      %v2433 = vpop.permute.xlu0 %2432
      %2434 = vrot.lane.b32.xlu0 %v1791, 64
      %v2435 = vpop.permute.xlu0 %2434
      %2436 = vrot.lane.b32.xlu0 %v1794, 64
      %v2437 = vpop.permute.xlu0 %2436
      %2438 = vrot.lane.b32.xlu0 %v1796, 64
      %v2439 = vpop.permute.xlu0 %2438
      %2440 = vrot.lane.b32.xlu0 %v1799, 64
      %v2441 = vpop.permute.xlu0 %2440
      %2442 = vrot.lane.b32.xlu0 %v1801, 64
      %v2443 = vpop.permute.xlu0 %2442
      %2444 = vrot.lane.b32.xlu0 %v1804, 64
      %v2445 = vpop.permute.xlu0 %2444
      %2446 = vrot.lane.b32.xlu0 %v1806, 64
      %v2447 = vpop.permute.xlu0 %2446
      %2448 = vrot.lane.b32.xlu0 %v1809, 64
      %v2449 = vpop.permute.xlu0 %2448
      %2450 = vrot.lane.b32.xlu0 %v1811, 64
      %v2451 = vpop.permute.xlu0 %2450
      %2452 = vrot.lane.b32.xlu0 %v1814, 64
      %v2453 = vpop.permute.xlu0 %2452
      %2454 = vrot.lane.b32.xlu0 %v1816, 64
      %v2455 = vpop.permute.xlu0 %2454
      %2456 = vrot.lane.b32.xlu0 %v1819, 64
      %v2457 = vpop.permute.xlu0 %2456
      %2458 = vrot.lane.b32.xlu0 %v1821, 64
      %v2459 = vpop.permute.xlu0 %2458
      %2460 = vrot.lane.b32.xlu0 %v1824, 64
      %v2461 = vpop.permute.xlu0 %2460
      %2462 = vrot.lane.b32.xlu0 %v1826, 64
      %v2463 = vpop.permute.xlu0 %2462
      %2464 = vrot.lane.b32.xlu0 %v1829, 64
      %v2465 = vpop.permute.xlu0 %2464
      %2466 = vrot.lane.b32.xlu0 %v1831, 64
      %v2467 = vpop.permute.xlu0 %2466
      %2468 = vrot.lane.b32.xlu0 %v1834, 64
      %v2469 = vpop.permute.xlu0 %2468
      %2470 = vrot.lane.b32.xlu0 %v1836, 64
      %v2471 = vpop.permute.xlu0 %2470
      %2472 = vrot.lane.b32.xlu0 %v2131, 64
      %v2473 = vpop.permute.xlu0 %2472
      %2474 = vrot.lane.b32.xlu0 %v2133, 64
      %v2475 = vpop.permute.xlu0 %2474
      %v2506 = vsel %vm738, 0.0, %v1670
      %v2507 = vsel %vm738, %v1532, %v1672
      %v2508 = vsel %vm738, %v1439, %v1674
      %v2509 = vsel %vm738, %v1533, %v1676
      %v2510 = vsel %vm738, %v1442, %v1678
      %v2511 = vsel %vm738, %v1534, %v1680
      %v2512 = vsel %vm738, %v1445, %v1682
      %v2513 = vsel %vm738, %v1535, %v1684
      %v2514 = vsel %vm738, %v1448, %v1686
      %v2515 = vsel %vm738, %v1536, %v1688
      %v2516 = vsel %vm738, %v1451, %v1690
      %v2517 = vsel %vm738, %v1537, %v1692
      %v2518 = vsel %vm738, %v1454, %v1694
      %v2519 = vsel %vm738, %v1538, %v1696
      %v2520 = vsel %vm738, %v1457, %v1698
      %v2521 = vsel %vm738, %v1539, %v1700
      %v2522 = vsel %vm738, %v1460, %v1702
      %v2523 = vsel %vm738, %v1540, %v1704
      %v2524 = vsel %vm738, %v1463, %v1706
      %v2525 = vsel %vm738, %v1541, %v1708
      %v2526 = vsel %vm738, %v1466, %v1710
      %v2527 = vsel %vm738, %v1542, %v1712
      %v2528 = vsel %vm738, %v1469, %v1714
      %v2529 = vsel %vm738, %v1543, %v1716
      %v2530 = vsel %vm738, %v1472, %v1718
      %v2531 = vsel %vm738, %v1544, %v1720
      %v2532 = vsel %vm738, %v1475, %v1722
      %v2533 = vsel %vm738, %v1545, %v1724
      %v2534 = vsel %vm738, %v1478, %v1726
      %v2535 = vsel %vm738, %v1546, %v1728
      %v2536 = vsel %vm738, %v1481, %v1730
      %v2537 = vsel %vm765, %v2506, %v1838
      %v2538 = vsel %vm765, %v2507, %v1840
      %v2539 = vsel %vm765, %v2508, %v1842
      %v2540 = vsel %vm765, %v2509, %v1844
      %v2541 = vsel %vm765, %v2510, %v1846
      %v2542 = vsel %vm765, %v2511, %v1848
      %v2543 = vsel %vm765, %v2512, %v1850
      %v2544 = vsel %vm765, %v2513, %v1852
      %v2545 = vsel %vm765, %v2514, %v1854
      %v2546 = vsel %vm765, %v2515, %v1856
      %v2547 = vsel %vm765, %v2516, %v1858
      %v2548 = vsel %vm765, %v2517, %v1860
      %v2549 = vsel %vm765, %v2518, %v1862
      %v2550 = vsel %vm765, %v2519, %v1864
      %v2551 = vsel %vm765, %v2520, %v1866
      %v2552 = vsel %vm765, %v2521, %v1868
      %v2553 = vsel %vm765, %v2522, %v1870
      %v2554 = vsel %vm765, %v2523, %v1872
      %v2555 = vsel %vm765, %v2524, %v1874
      %v2556 = vsel %vm765, %v2525, %v1876
      %v2557 = vsel %vm765, %v2526, %v1878
      %v2558 = vsel %vm765, %v2527, %v1880
      %v2559 = vsel %vm765, %v2528, %v1882
      %v2560 = vsel %vm765, %v2529, %v1884
      %v2561 = vsel %vm765, %v2530, %v1886
      %v2562 = vsel %vm765, %v2531, %v1888
      %v2563 = vsel %vm765, %v2532, %v1890
      %v2564 = vsel %vm765, %v2533, %v1892
      %v2565 = vsel %vm765, %v2534, %v1894
      %v2566 = vsel %vm765, %v2535, %v1896
      %v2567 = vsel %vm765, %v2536, %v1898
      %v2568 = vsel %vm836, %v2537, %v1932
      %v2569 = vsel %vm836, %v2537, %v1934
      %v2570 = vsel %vm836, %v2538, %v1936
      %v2571 = vsel %vm836, %v2539, %v1938
      %v2572 = vsel %vm836, %v2540, %v1940
      %v2573 = vsel %vm836, %v2541, %v1942
      %v2574 = vsel %vm836, %v2542, %v1944
      %v2575 = vsel %vm836, %v2543, %v1946
      %v2576 = vsel %vm836, %v2544, %v1948
      %v2577 = vsel %vm836, %v2545, %v1950
      %v2578 = vsel %vm836, %v2546, %v1952
      %v2579 = vsel %vm836, %v2547, %v1954
      %v2580 = vsel %vm836, %v2548, %v1956
      %v2581 = vsel %vm836, %v2549, %v1958
      %v2582 = vsel %vm836, %v2550, %v1960
      %v2583 = vsel %vm836, %v2551, %v1962
      %v2584 = vsel %vm836, %v2552, %v1964
      %v2585 = vsel %vm836, %v2553, %v1966
      %v2586 = vsel %vm836, %v2554, %v1968
      %v2587 = vsel %vm836, %v2555, %v1970
      %v2588 = vsel %vm836, %v2556, %v1972
      %v2589 = vsel %vm836, %v2557, %v1974
      %v2590 = vsel %vm836, %v2558, %v1976
      %v2591 = vsel %vm836, %v2559, %v1978
      %v2592 = vsel %vm836, %v2560, %v1980
      %v2593 = vsel %vm836, %v2561, %v1982
      %v2594 = vsel %vm836, %v2562, %v1984
      %v2595 = vsel %vm836, %v2563, %v1986
      %v2596 = vsel %vm836, %v2564, %v1988
      %v2597 = vsel %vm836, %v2565, %v1990
      %v2598 = vsel %vm836, %v2566, %v1992
      %v2599 = vsel %vm836, %v2567, %v1994
      %vm2600 = vcmask 785408
      %v2601 = vsel %vm2600, %v2568, %v2034
      %v2602 = vsel %vm2600, %v2569, %v2036
      %v2603 = vsel %vm2600, %v2570, %v2038
      %v2604 = vsel %vm2600, %v2571, %v2040
      %v2605 = vsel %vm2600, %v2572, %v2042
      %v2606 = vsel %vm2600, %v2573, %v2044
      %v2607 = vsel %vm2600, %v2574, %v2046
      %v2608 = vsel %vm2600, %v2575, %v2048
      %v2609 = vsel %vm2600, %v2576, %v2050
      %v2610 = vsel %vm2600, %v2577, %v2052
      %v2611 = vsel %vm2600, %v2578, %v2054
      %v2612 = vsel %vm2600, %v2579, %v2056
      %v2613 = vsel %vm2600, %v2580, %v2058
      %v2614 = vsel %vm2600, %v2581, %v2060
      %v2615 = vsel %vm2600, %v2582, %v2062
      %v2616 = vsel %vm2600, %v2583, %v2064
      %v2617 = vsel %vm2600, %v2584, %v2066
      %v2618 = vsel %vm2600, %v2585, %v2068
      %v2619 = vsel %vm2600, %v2586, %v2070
      %v2620 = vsel %vm2600, %v2587, %v2072
      %v2621 = vsel %vm2600, %v2588, %v2074
      %v2622 = vsel %vm2600, %v2589, %v2076
      %v2623 = vsel %vm2600, %v2590, %v2078
      %v2624 = vsel %vm2600, %v2591, %v2080
      %v2625 = vsel %vm2600, %v2592, %v2082
      %v2626 = vsel %vm2600, %v2593, %v2084
      %v2627 = vsel %vm2600, %v2594, %v2086
      %v2628 = vsel %vm2600, %v2595, %v2088
      %v2629 = vsel %vm2600, %v2596, %v2090
      %v2630 = vsel %vm2600, %v2597, %v2092
      %v2631 = vsel %vm2600, %v2598, %v2094
      %v2632 = vsel %vm2600, %v2599, %v2096
      %vm2633 = vcmask 982016
      %v2634 = vsel %vm2633, %v2601, %v2135
      %v2635 = vsel %vm2633, %v2602, %v2137
      %v2636 = vsel %vm2633, %v2603, %v2139
      %v2637 = vsel %vm2633, %v2604, %v2141
      %v2638 = vsel %vm2633, %v2605, %v2143
      %v2639 = vsel %vm2633, %v2606, %v2145
      %v2640 = vsel %vm2633, %v2607, %v2147
      %v2641 = vsel %vm2633, %v2608, %v2149
      %v2642 = vsel %vm2633, %v2609, %v2151
      %v2643 = vsel %vm2633, %v2610, %v2153
      %v2644 = vsel %vm2633, %v2611, %v2155
      %v2645 = vsel %vm2633, %v2612, %v2157
      %v2646 = vsel %vm2633, %v2613, %v2159
      %v2647 = vsel %vm2633, %v2614, %v2161
      %v2648 = vsel %vm2633, %v2615, %v2163
      %v2649 = vsel %vm2633, %v2616, %v2165
      %v2650 = vsel %vm2633, %v2617, %v2167
      %v2651 = vsel %vm2633, %v2618, %v2169
      %v2652 = vsel %vm2633, %v2619, %v2171
      %v2653 = vsel %vm2633, %v2620, %v2173
      %v2654 = vsel %vm2633, %v2621, %v2175
      %v2655 = vsel %vm2633, %v2622, %v2177
      %v2656 = vsel %vm2633, %v2623, %v2179
      %v2657 = vsel %vm2633, %v2624, %v2181
      %v2658 = vsel %vm2633, %v2625, %v2183
      %v2659 = vsel %vm2633, %v2626, %v2185
      %v2660 = vsel %vm2633, %v2627, %v2187
      %v2661 = vsel %vm2633, %v2628, %v2189
      %v2662 = vsel %vm2633, %v2629, %v2191
      %v2663 = vsel %vm2633, %v2630, %v2193
      %v2664 = vsel %vm2633, %v2631, %v2195
      %v2665 = vsel %vm2633, %v2632, %v2197
      %v2666 = vsel %vm729, %v2135, %v2231
      %v2667 = vsel %vm729, %v2137, %v2233
      %v2668 = vsel %vm729, %v2139, %v2235
      %v2669 = vsel %vm729, %v2141, %v2237
      %v2670 = vsel %vm729, %v2143, %v2239
      %v2671 = vsel %vm729, %v2145, %v2241
      %v2672 = vsel %vm729, %v2147, %v2243
      %v2673 = vsel %vm729, %v2149, %v2245
      %v2674 = vsel %vm729, %v2151, %v2247
      %v2675 = vsel %vm729, %v2153, %v2249
      %v2676 = vsel %vm729, %v2155, %v2251
      %v2677 = vsel %vm729, %v2157, %v2253
      %v2678 = vsel %vm729, %v2159, %v2255
      %v2679 = vsel %vm729, %v2161, %v2257
      %v2680 = vsel %vm729, %v2163, %v2259
      %v2681 = vsel %vm729, %v2165, %v2261
      %v2682 = vsel %vm729, %v2167, %v2263
      %v2683 = vsel %vm729, %v2169, %v2265
      %v2684 = vsel %vm729, %v2171, %v2267
      %v2685 = vsel %vm729, %v2173, %v2269
      %v2686 = vsel %vm729, %v2175, %v2271
      %v2687 = vsel %vm729, %v2177, %v2273
      %v2688 = vsel %vm729, %v2179, %v2275
      %v2689 = vsel %vm729, %v2181, %v2277
      %v2690 = vsel %vm729, %v2183, %v2279
      %v2691 = vsel %vm729, %v2185, %v2281
      %v2692 = vsel %vm729, %v2187, %v2283
      %v2693 = vsel %vm729, %v2189, %v2285
      %v2694 = vsel %vm729, %v2191, %v2287
      %v2695 = vsel %vm729, %v2193, %v2289
      %v2696 = vsel %vm729, %v2195, %v2291
      %v2697 = vsel %vm729, %v2197, %v2291
      %v2698 = vsel %vm756, %v2666, %v2324
      %v2699 = vsel %vm756, %v2667, %v2326
      %v2700 = vsel %vm756, %v2668, %v2328
      %v2701 = vsel %vm756, %v2669, %v2330
      %v2702 = vsel %vm756, %v2670, %v2332
      %v2703 = vsel %vm756, %v2671, %v2334
      %v2704 = vsel %vm756, %v2672, %v2336
      %v2705 = vsel %vm756, %v2673, %v2338
      %v2706 = vsel %vm756, %v2674, %v2340
      %v2707 = vsel %vm756, %v2675, %v2342
      %v2708 = vsel %vm756, %v2676, %v2344
      %v2709 = vsel %vm756, %v2677, %v2346
      %v2710 = vsel %vm756, %v2678, %v2348
      %v2711 = vsel %vm756, %v2679, %v2350
      %v2712 = vsel %vm756, %v2680, %v2352
      %v2713 = vsel %vm756, %v2681, %v2354
      %v2714 = vsel %vm756, %v2682, %v2356
      %v2715 = vsel %vm756, %v2683, %v2358
      %v2716 = vsel %vm756, %v2684, %v2360
      %v2717 = vsel %vm756, %v2685, %v2362
      %v2718 = vsel %vm756, %v2686, %v2364
      %v2719 = vsel %vm756, %v2687, %v2366
      %v2720 = vsel %vm756, %v2688, %v2368
      %v2721 = vsel %vm756, %v2689, %v2370
      %v2722 = vsel %vm756, %v2690, %v2372
      %v2723 = vsel %vm756, %v2691, %v2374
      %v2724 = vsel %vm756, %v2692, %v2376
      %v2725 = vsel %vm756, %v2693, %v2378
      %v2726 = vsel %vm756, %v2694, %v2380
      %v2727 = vsel %vm756, %v2695, %v2382
      %v2728 = vsel %vm756, %v2696, %v2384
      %v2729 = vsel %vm756, %v2697, %v2384
      %v2730 = vsel %vm783, %v2698, %v2417
      %v2731 = vsel %vm783, %v2699, %v2419
      %v2732 = vsel %vm783, %v2700, %v2421
      %v2733 = vsel %vm783, %v2701, %v2423
      %v2734 = vsel %vm783, %v2702, %v2425
      %v2735 = vsel %vm783, %v2703, %v2427
      %v2736 = vsel %vm783, %v2704, %v2429
      %v2737 = vsel %vm783, %v2705, %v2431
      %v2738 = vsel %vm783, %v2706, %v2433
      %v2739 = vsel %vm783, %v2707, %v2435
      %v2740 = vsel %vm783, %v2708, %v2437
      %v2741 = vsel %vm783, %v2709, %v2439
      %v2742 = vsel %vm783, %v2710, %v2441
      %v2743 = vsel %vm783, %v2711, %v2443
      %v2744 = vsel %vm783, %v2712, %v2445
      %v2745 = vsel %vm783, %v2713, %v2447
      %v2746 = vsel %vm783, %v2714, %v2449
      %v2747 = vsel %vm783, %v2715, %v2451
      %v2748 = vsel %vm783, %v2716, %v2453
      %v2749 = vsel %vm783, %v2717, %v2455
      %v2750 = vsel %vm783, %v2718, %v2457
      %v2751 = vsel %vm783, %v2719, %v2459
      %v2752 = vsel %vm783, %v2720, %v2461
      %v2753 = vsel %vm783, %v2721, %v2463
      %v2754 = vsel %vm783, %v2722, %v2465
      %v2755 = vsel %vm783, %v2723, %v2467
      %v2756 = vsel %vm783, %v2724, %v2469
      %v2757 = vsel %vm783, %v2725, %v2471
      %v2758 = vsel %vm783, %v2726, %v2473
      %v2759 = vsel %vm783, %v2727, %v2475
      %v2760 = vsel %vm783, %v2728, %v711
      %v2761 = vsel %vm783, %v2729, %v711
      %v2762 = vpack.c.bf16 %v2635, %v2634
      %v2763 = vpack.c.bf16 %v2731, %v2730
      %v2764 = vpack.c.bf16 %v2637, %v2636
      %v2765 = vpack.c.bf16 %v2733, %v2732
      %v2766 = vpack.c.bf16 %v2639, %v2638
      %v2767 = vpack.c.bf16 %v2735, %v2734
      %v2768 = vpack.c.bf16 %v2641, %v2640
      %v2769 = vpack.c.bf16 %v2737, %v2736
      %v2770 = vpack.c.bf16 %v2643, %v2642
      %v2771 = vpack.c.bf16 %v2739, %v2738
      %v2772 = vpack.c.bf16 %v2645, %v2644
      %v2773 = vpack.c.bf16 %v2741, %v2740
      %v2774 = vpack.c.bf16 %v2647, %v2646
      %v2775 = vpack.c.bf16 %v2743, %v2742
      %v2776 = vpack.c.bf16 %v2649, %v2648
      %v2777 = vpack.c.bf16 %v2745, %v2744
      %v2778 = vpack.c.bf16 %v2651, %v2650
      %v2779 = vpack.c.bf16 %v2747, %v2746
      %v2780 = vpack.c.bf16 %v2653, %v2652
      %v2781 = vpack.c.bf16 %v2749, %v2748
      %v2782 = vpack.c.bf16 %v2655, %v2654
      %v2783 = vpack.c.bf16 %v2751, %v2750
      %v2784 = vpack.c.bf16 %v2657, %v2656
      %v2785 = vpack.c.bf16 %v2753, %v2752
      %v2786 = vpack.c.bf16 %v2659, %v2658
      %v2787 = vpack.c.bf16 %v2755, %v2754
      %v2788 = vpack.c.bf16 %v2661, %v2660
      %v2789 = vpack.c.bf16 %v2757, %v2756
      %v2790 = vpack.c.bf16 %v2663, %v2662
      %v2791 = vpack.c.bf16 %v2759, %v2758
      %v2792 = vpack.c.bf16 %v2665, %v2664
      %v2793 = vpack.c.bf16 %v2761, %v2760
      %v2794 = vld [vmem:[%s5] sm:$0xf]
      %v2795 = vld [vmem:[%s5 + $0x4] sm:$0xf]
      %v2796 = vld [vmem:[%s5 + $0x8] sm:$0xf]
      %v2797 = vld [vmem:[%s5 + $0xc] sm:$0xf]
      %v2798 = vld [vmem:[%s5 + $0x10] sm:$0xf]
      %v2799 = vld [vmem:[%s5 + $0x14] sm:$0xf]
      %v2800 = vld [vmem:[%s5 + $0x18] sm:$0xf]
      %v2801 = vld [vmem:[%s5 + $0x1c] sm:$0xf]
      %v2802 = vld [vmem:[%s5 + $0x20] sm:$0xf]
      %v2803 = vld [vmem:[%s5 + $0x24] sm:$0xf]
      %v2804 = vld [vmem:[%s5 + $0x28] sm:$0xf]
      %v2805 = vld [vmem:[%s5 + $0x2c] sm:$0xf]
      %v2806 = vld [vmem:[%s5 + $0x30] sm:$0xf]
      %v2807 = vld [vmem:[%s5 + $0x34] sm:$0xf]
      %v2808 = vld [vmem:[%s5 + $0x38] sm:$0xf]
      %v2809 = vld [vmem:[%s5 + $0x3c] sm:$0xf]
      %v2810 = vld [vmem:[%s5 + $0x40] sm:$0xf]
      %v2811 = vld [vmem:[%s5 + $0x44] sm:$0xf]
      %v2812 = vld [vmem:[%s5 + $0x48] sm:$0xf]
      %v2813 = vld [vmem:[%s5 + $0x4c] sm:$0xf]
      %v2814 = vld [vmem:[%s5 + $0x50] sm:$0xf]
      %v2815 = vld [vmem:[%s5 + $0x54] sm:$0xf]
      %v2816 = vld [vmem:[%s5 + $0x58] sm:$0xf]
      %v2817 = vld [vmem:[%s5 + $0x5c] sm:$0xf]
      %v2818 = vld [vmem:[%s5 + $0x60] sm:$0xf]
      %v2819 = vld [vmem:[%s5 + $0x64] sm:$0xf]
      %v2820 = vld [vmem:[%s5 + $0x68] sm:$0xf]
      %v2821 = vld [vmem:[%s6] sm:$0x1]
      %v2823 = vperm.slane %v2821, 0
      %v2852 = vunpack.c.l.b16 %v2794
      %v2853 = vunpack.c.l.b16 %v2795
      %v2854 = vunpack.c.l.b16 %v2796
      %v2855 = vunpack.c.l.b16 %v2797
      %v2856 = vunpack.c.l.b16 %v2798
      %v2857 = vunpack.c.l.b16 %v2799
      %v2858 = vunpack.c.l.b16 %v2800
      %v2859 = vunpack.c.l.b16 %v2801
      %v2860 = vunpack.c.l.b16 %v2802
      %v2861 = vunpack.c.l.b16 %v2803
      %v2862 = vunpack.c.l.b16 %v2804
      %v2863 = vunpack.c.l.b16 %v2805
      %v2864 = vunpack.c.l.b16 %v2806
      %v2865 = vunpack.c.l.b16 %v2807
      %v2866 = vunpack.c.l.b16 %v2808
      %v2867 = vunpack.c.l.b16 %v2809
      %v2868 = vunpack.c.l.b16 %v2810
      %v2869 = vunpack.c.l.b16 %v2811
      %v2870 = vunpack.c.l.b16 %v2812
      %v2871 = vunpack.c.l.b16 %v2813
      %v2872 = vunpack.c.l.b16 %v2814
      %v2873 = vunpack.c.l.b16 %v2815
      %v2874 = vunpack.c.l.b16 %v2816
      %v2875 = vunpack.c.l.b16 %v2817
      %v2876 = vunpack.c.l.b16 %v2818
      %v2877 = vunpack.c.l.b16 %v2819
      %v2878 = vunpack.c.l.b16 %v2820
      %v2879 = vpack.c.b16 %v2853, %v2852
      %v2880 = vpack.c.b16 %v2855, %v2854
      %v2881 = vpack.c.b16 %v2857, %v2856
      %v2882 = vpack.c.b16 %v2859, %v2858
      %v2883 = vpack.c.b16 %v2861, %v2860
      %v2884 = vpack.c.b16 %v2863, %v2862
      %v2885 = vpack.c.b16 %v2865, %v2864
      %v2886 = vpack.c.b16 %v2867, %v2866
      %v2887 = vpack.c.b16 %v2869, %v2868
      %v2888 = vpack.c.b16 %v2871, %v2870
      %v2889 = vpack.c.b16 %v2873, %v2872
      %v2890 = vpack.c.b16 %v2875, %v2874
      %v2891 = vpack.c.b16 %v2877, %v2876
      %v2892 = vpack.c.b16 %v2878, %v2878
      %vm2906 = vcmask 719872
      %v2908 = vsel %vm2906, %v2763, 0
      %v2911 = vsel %vm2906, %v2765, 0
      %v2914 = vsel %vm2906, %v2767, 0
      %v2917 = vsel %vm2906, %v2769, 0
      %v2920 = vsel %vm2906, %v2771, 0
      %v2923 = vsel %vm2906, %v2773, 0
      %v2926 = vsel %vm2906, %v2775, 0
      %v2929 = vsel %vm2906, %v2777, 0
      %v2932 = vsel %vm2906, %v2779, 0
      %v2935 = vsel %vm2906, %v2781, 0
      %v2938 = vsel %vm2906, %v2783, 0
      %v2941 = vsel %vm2906, %v2785, 0
      %v2944 = vsel %vm2906, %v2787, 0
      %v2947 = vsel %vm2906, %v2789, 0
      %v2950 = vsel %vm2906, %v2791, 0
      %v2953 = vsel %vm2906, %v2793, 0
      %v2956 = vsel %vm849, %v2892, 0
      %2958 = vmatpush.bf16.msra.mxu0 %v2886
      %2959 = vmatpush.bf16.msra.mxu0 %v2885
      %2960 = vmatpush.bf16.msra.mxu0 %v2884
      %2961 = vmatpush.bf16.msra.mxu0 %v2883
      %2962 = vmatpush.bf16.msra.mxu0 %v2882
      %2963 = vmatpush.bf16.msra.mxu0 %v2881
      %2964 = vmatpush.bf16.msra.mxu0 %v2880
      %2965 = vmatpush.bf16.msra.mxu0 %v2879
      %2966 = vmatmul.bf16.gmra.mxu0 %v2762
      %v2967 = vpop.f32.mrf.mxu0
      %v2968 = vadd.f32 %v2823, %v2967
      %v2969 = vpop.f32.mrf.mxu0
      %v2970 = vadd.f32 %v2823, %v2969
      %2971 = vmatmul.bf16.gmra.mxu0 %v2764
      %v2972 = vpop.f32.mrf.mxu0
      %v2973 = vadd.f32 %v2823, %v2972
      %v2974 = vpop.f32.mrf.mxu0
      %v2975 = vadd.f32 %v2823, %v2974
      %2976 = vmatmul.bf16.gmra.mxu0 %v2766
      %v2977 = vpop.f32.mrf.mxu0
      %v2978 = vadd.f32 %v2823, %v2977
      %v2979 = vpop.f32.mrf.mxu0
      %v2980 = vadd.f32 %v2823, %v2979
      %2981 = vmatmul.bf16.gmra.mxu0 %v2768
      %v2982 = vpop.f32.mrf.mxu0
      %v2983 = vadd.f32 %v2823, %v2982
      %v2984 = vpop.f32.mrf.mxu0
      %v2985 = vadd.f32 %v2823, %v2984
      %2986 = vmatmul.bf16.gmra.mxu0 %v2770
      %v2987 = vpop.f32.mrf.mxu0
      %v2988 = vadd.f32 %v2823, %v2987
      %v2989 = vpop.f32.mrf.mxu0
      %v2990 = vadd.f32 %v2823, %v2989
      %2991 = vmatmul.bf16.gmra.mxu0 %v2772
      %v2992 = vpop.f32.mrf.mxu0
      %v2993 = vadd.f32 %v2823, %v2992
      %v2994 = vpop.f32.mrf.mxu0
      %v2995 = vadd.f32 %v2823, %v2994
      %2996 = vmatmul.bf16.gmra.mxu0 %v2774
      %v2997 = vpop.f32.mrf.mxu0
      %v2998 = vadd.f32 %v2823, %v2997
      %v2999 = vpop.f32.mrf.mxu0
      %v3000 = vadd.f32 %v2823, %v2999
      %3001 = vmatmul.bf16.gmra.mxu0 %v2776
      %v3002 = vpop.f32.mrf.mxu0
      %v3003 = vadd.f32 %v2823, %v3002
      %v3004 = vpop.f32.mrf.mxu0
      %v3005 = vadd.f32 %v2823, %v3004
      %3006 = vmatmul.bf16.gmra.mxu0 %v2778
      %v3007 = vpop.f32.mrf.mxu0
      %v3008 = vadd.f32 %v2823, %v3007
      %v3009 = vpop.f32.mrf.mxu0
      %v3010 = vadd.f32 %v2823, %v3009
      %3011 = vmatmul.bf16.gmra.mxu0 %v2780
      %v3012 = vpop.f32.mrf.mxu0
      %v3013 = vadd.f32 %v2823, %v3012
      %v3014 = vpop.f32.mrf.mxu0
      %v3015 = vadd.f32 %v2823, %v3014
      %3016 = vmatmul.bf16.gmra.mxu0 %v2782
      %v3017 = vpop.f32.mrf.mxu0
      %v3018 = vadd.f32 %v2823, %v3017
      %v3019 = vpop.f32.mrf.mxu0
      %v3020 = vadd.f32 %v2823, %v3019
      %3021 = vmatmul.bf16.gmra.mxu0 %v2784
      %v3022 = vpop.f32.mrf.mxu0
      %v3023 = vadd.f32 %v2823, %v3022
      %v3024 = vpop.f32.mrf.mxu0
      %v3025 = vadd.f32 %v2823, %v3024
      %3026 = vmatmul.bf16.gmra.mxu0 %v2786
      %v3027 = vpop.f32.mrf.mxu0
      %v3028 = vadd.f32 %v2823, %v3027
      %v3029 = vpop.f32.mrf.mxu0
      %v3030 = vadd.f32 %v2823, %v3029
      %3031 = vmatmul.bf16.gmra.mxu0 %v2788
      %v3032 = vpop.f32.mrf.mxu0
      %v3033 = vadd.f32 %v2823, %v3032
      %v3034 = vpop.f32.mrf.mxu0
      %v3035 = vadd.f32 %v2823, %v3034
      %3036 = vmatmul.bf16.gmra.mxu0 %v2790
      %v3037 = vpop.f32.mrf.mxu0
      %v3038 = vadd.f32 %v2823, %v3037
      %v3039 = vpop.f32.mrf.mxu0
      %v3040 = vadd.f32 %v2823, %v3039
      %3041 = vmatmul.bf16.gmra.mxu0 %v2792
      %v3042 = vpop.f32.mrf.mxu0
      %v3043 = vadd.f32 %v2823, %v3042
      %v3044 = vpop.f32.mrf.mxu0
      %v3045 = vadd.f32 %v2823, %v3044
      %3046 = vdwg.mxu0
      %3047 = vmatpush.bf16.msra.mxu0 0
      %3048 = vmatpush.bf16.msra.mxu0 0
      %3049 = vmatpush.bf16.msra.mxu0 %v2956
      %3050 = vmatpush.bf16.msra.mxu0 %v2891
      %3051 = vmatpush.bf16.msra.mxu0 %v2890
      %3052 = vmatpush.bf16.msra.mxu0 %v2889
      %3053 = vmatpush.bf16.msra.mxu0 %v2888
      %3054 = vmatpush.bf16.msra.mxu0 %v2887
      %3055 = vmatmul.bf16.gmra.mxu0 %v2908
      %v3056 = vpop.f32.mrf.mxu0
      %v3057 = vadd.f32 %v2968, %v3056
      %v3058 = vpop.f32.mrf.mxu0
      %v3059 = vadd.f32 %v2970, %v3058
      %3060 = vmatmul.bf16.gmra.mxu0 %v2911
      %v3061 = vpop.f32.mrf.mxu0
      %v3062 = vadd.f32 %v2973, %v3061
      %v3063 = vpop.f32.mrf.mxu0
      %v3064 = vadd.f32 %v2975, %v3063
      %3065 = vmatmul.bf16.gmra.mxu0 %v2914
      %v3066 = vpop.f32.mrf.mxu0
      %v3067 = vadd.f32 %v2978, %v3066
      %v3068 = vpop.f32.mrf.mxu0
      %v3069 = vadd.f32 %v2980, %v3068
      %3070 = vmatmul.bf16.gmra.mxu0 %v2917
      %v3071 = vpop.f32.mrf.mxu0
      %v3072 = vadd.f32 %v2983, %v3071
      %v3073 = vpop.f32.mrf.mxu0
      %v3074 = vadd.f32 %v2985, %v3073
      %3075 = vmatmul.bf16.gmra.mxu0 %v2920
      %v3076 = vpop.f32.mrf.mxu0
      %v3077 = vadd.f32 %v2988, %v3076
      %v3078 = vpop.f32.mrf.mxu0
      %v3079 = vadd.f32 %v2990, %v3078
      %3080 = vmatmul.bf16.gmra.mxu0 %v2923
      %v3081 = vpop.f32.mrf.mxu0
      %v3082 = vadd.f32 %v2993, %v3081
      %v3083 = vpop.f32.mrf.mxu0
      %v3084 = vadd.f32 %v2995, %v3083
      %3085 = vmatmul.bf16.gmra.mxu0 %v2926
      %v3086 = vpop.f32.mrf.mxu0
      %v3087 = vadd.f32 %v2998, %v3086
      %v3088 = vpop.f32.mrf.mxu0
      %v3089 = vadd.f32 %v3000, %v3088
      %3090 = vmatmul.bf16.gmra.mxu0 %v2929
      %v3091 = vpop.f32.mrf.mxu0
      %v3092 = vadd.f32 %v3003, %v3091
      %v3093 = vpop.f32.mrf.mxu0
      %v3094 = vadd.f32 %v3005, %v3093
      %3095 = vmatmul.bf16.gmra.mxu0 %v2932
      %v3096 = vpop.f32.mrf.mxu0
      %v3097 = vadd.f32 %v3008, %v3096
      %v3098 = vpop.f32.mrf.mxu0
      %v3099 = vadd.f32 %v3010, %v3098
      %3100 = vmatmul.bf16.gmra.mxu0 %v2935
      %v3101 = vpop.f32.mrf.mxu0
      %v3102 = vadd.f32 %v3013, %v3101
      %v3103 = vpop.f32.mrf.mxu0
      %v3104 = vadd.f32 %v3015, %v3103
      %3105 = vmatmul.bf16.gmra.mxu0 %v2938
      %v3106 = vpop.f32.mrf.mxu0
      %v3107 = vadd.f32 %v3018, %v3106
      %v3108 = vpop.f32.mrf.mxu0
      %v3109 = vadd.f32 %v3020, %v3108
      %3110 = vmatmul.bf16.gmra.mxu0 %v2941
      %v3111 = vpop.f32.mrf.mxu0
      %v3112 = vadd.f32 %v3023, %v3111
      %v3113 = vpop.f32.mrf.mxu0
      %v3114 = vadd.f32 %v3025, %v3113
      %3115 = vmatmul.bf16.gmra.mxu0 %v2944
      %v3116 = vpop.f32.mrf.mxu0
      %v3117 = vadd.f32 %v3028, %v3116
      %v3118 = vpop.f32.mrf.mxu0
      %v3119 = vadd.f32 %v3030, %v3118
      %3120 = vmatmul.bf16.gmra.mxu0 %v2947
      %v3121 = vpop.f32.mrf.mxu0
      %v3122 = vadd.f32 %v3033, %v3121
      %v3123 = vpop.f32.mrf.mxu0
      %v3124 = vadd.f32 %v3035, %v3123
      %3125 = vmatmul.bf16.gmra.mxu0 %v2950
      %v3126 = vpop.f32.mrf.mxu0
      %v3127 = vadd.f32 %v3038, %v3126
      %v3128 = vpop.f32.mrf.mxu0
      %v3129 = vadd.f32 %v3040, %v3128
      %3130 = vmatmul.bf16.gmra.mxu0 %v2953
      %v3131 = vpop.f32.mrf.mxu0
      %v3132 = vadd.f32 %v3043, %v3131
      %v3133 = vpop.f32.mrf.mxu0
      %v3134 = vadd.f32 %v3045, %v3133
      %3135 = vdwg.mxu0
      %vm3136 = vcmp.ge.f32.partialorder %v3057, 0.0
      %vm3137 = vcmp.ge.f32.partialorder %v3059, 0.0
      %vm3138 = vcmp.ge.f32.partialorder %v3062, 0.0
      %vm3139 = vcmp.ge.f32.partialorder %v3064, 0.0
      %vm3140 = vcmp.ge.f32.partialorder %v3067, 0.0
      %vm3141 = vcmp.ge.f32.partialorder %v3069, 0.0
      %vm3142 = vcmp.ge.f32.partialorder %v3072, 0.0
      %vm3143 = vcmp.ge.f32.partialorder %v3074, 0.0
      %vm3144 = vcmp.ge.f32.partialorder %v3077, 0.0
      %vm3145 = vcmp.ge.f32.partialorder %v3079, 0.0
      %vm3146 = vcmp.ge.f32.partialorder %v3082, 0.0
      %vm3147 = vcmp.ge.f32.partialorder %v3084, 0.0
      %vm3148 = vcmp.ge.f32.partialorder %v3087, 0.0
      %vm3149 = vcmp.ge.f32.partialorder %v3089, 0.0
      %vm3150 = vcmp.ge.f32.partialorder %v3092, 0.0
      %vm3151 = vcmp.ge.f32.partialorder %v3094, 0.0
      %vm3152 = vcmp.ge.f32.partialorder %v3097, 0.0
      %vm3153 = vcmp.ge.f32.partialorder %v3099, 0.0
      %vm3154 = vcmp.ge.f32.partialorder %v3102, 0.0
      %vm3155 = vcmp.ge.f32.partialorder %v3104, 0.0
      %vm3156 = vcmp.ge.f32.partialorder %v3107, 0.0
      %vm3157 = vcmp.ge.f32.partialorder %v3109, 0.0
      %vm3158 = vcmp.ge.f32.partialorder %v3112, 0.0
      %vm3159 = vcmp.ge.f32.partialorder %v3114, 0.0
      %vm3160 = vcmp.ge.f32.partialorder %v3117, 0.0
      %vm3161 = vcmp.ge.f32.partialorder %v3119, 0.0
      %vm3162 = vcmp.ge.f32.partialorder %v3122, 0.0
      %vm3163 = vcmp.ge.f32.partialorder %v3124, 0.0
      %vm3164 = vcmp.ge.f32.partialorder %v3127, 0.0
      %vm3165 = vcmp.ge.f32.partialorder %v3129, 0.0
      %vm3166 = vcmp.ge.f32.partialorder %v3132, 0.0
      %vm3167 = vcmp.ge.f32.partialorder %v3134, 0.0
      %v3168 = vmul.f32 %v3057, 0.1
      %v3169 = vmul.f32 %v3059, 0.1
      %v3170 = vmul.f32 %v3062, 0.1
      %v3171 = vmul.f32 %v3064, 0.1
      %v3172 = vmul.f32 %v3067, 0.1
      %v3173 = vmul.f32 %v3069, 0.1
      %v3174 = vmul.f32 %v3072, 0.1
      %v3175 = vmul.f32 %v3074, 0.1
      %v3176 = vmul.f32 %v3077, 0.1
      %v3177 = vmul.f32 %v3079, 0.1
      %v3178 = vmul.f32 %v3082, 0.1
      %v3179 = vmul.f32 %v3084, 0.1
      %v3180 = vmul.f32 %v3087, 0.1
      %v3181 = vmul.f32 %v3089, 0.1
      %v3182 = vmul.f32 %v3092, 0.1
      %v3183 = vmul.f32 %v3094, 0.1
      %v3184 = vmul.f32 %v3097, 0.1
      %v3185 = vmul.f32 %v3099, 0.1
      %v3186 = vmul.f32 %v3102, 0.1
      %v3187 = vmul.f32 %v3104, 0.1
      %v3188 = vmul.f32 %v3107, 0.1
      %v3189 = vmul.f32 %v3109, 0.1
      %v3190 = vmul.f32 %v3112, 0.1
      %v3191 = vmul.f32 %v3114, 0.1
      %v3192 = vmul.f32 %v3117, 0.1
      %v3193 = vmul.f32 %v3119, 0.1
      %v3194 = vmul.f32 %v3122, 0.1
      %v3195 = vmul.f32 %v3124, 0.1
      %v3196 = vmul.f32 %v3127, 0.1
      %v3197 = vmul.f32 %v3129, 0.1
      %v3198 = vmul.f32 %v3132, 0.1
      %v3199 = vmul.f32 %v3134, 0.1
      %v3200 = vsel %vm3136, %v3057, %v3168
      %v3201 = vsel %vm3137, %v3059, %v3169
      %v3202 = vsel %vm3138, %v3062, %v3170
      %v3203 = vsel %vm3139, %v3064, %v3171
      %v3204 = vsel %vm3140, %v3067, %v3172
      %v3205 = vsel %vm3141, %v3069, %v3173
      %v3206 = vsel %vm3142, %v3072, %v3174
      %v3207 = vsel %vm3143, %v3074, %v3175
      %v3208 = vsel %vm3144, %v3077, %v3176
      %v3209 = vsel %vm3145, %v3079, %v3177
      %v3210 = vsel %vm3146, %v3082, %v3178
      %v3211 = vsel %vm3147, %v3084, %v3179
      %v3212 = vsel %vm3148, %v3087, %v3180
      %v3213 = vsel %vm3149, %v3089, %v3181
      %v3214 = vsel %vm3150, %v3092, %v3182
      %v3215 = vsel %vm3151, %v3094, %v3183
      %v3216 = vsel %vm3152, %v3097, %v3184
      %v3217 = vsel %vm3153, %v3099, %v3185
      %v3218 = vsel %vm3154, %v3102, %v3186
      %v3219 = vsel %vm3155, %v3104, %v3187
      %v3220 = vsel %vm3156, %v3107, %v3188
      %v3221 = vsel %vm3157, %v3109, %v3189
      %v3222 = vsel %vm3158, %v3112, %v3190
      %v3223 = vsel %vm3159, %v3114, %v3191
      %v3224 = vsel %vm3160, %v3117, %v3192
      %v3225 = vsel %vm3161, %v3119, %v3193
      %v3226 = vsel %vm3162, %v3122, %v3194
      %v3227 = vsel %vm3163, %v3124, %v3195
      %v3228 = vsel %vm3164, %v3127, %v3196
      %v3229 = vsel %vm3165, %v3129, %v3197
      %v3230 = vsel %vm3166, %v3132, %v3198
      %v3231 = vsel %vm3167, %v3134, %v3199
      %v3264 = vrot.slane %v3200, 7
      %v3265 = vrot.slane %v3201, 7
      %v3266 = vsel %vm440, %v3264, %v3265
      %v3267 = vrot.slane %v3202, 7
      %v3268 = vrot.slane %v3203, 7
      %v3269 = vsel %vm440, %v3267, %v3268
      %v3270 = vrot.slane %v3204, 7
      %v3271 = vrot.slane %v3205, 7
      %v3272 = vsel %vm440, %v3270, %v3271
      %v3273 = vrot.slane %v3206, 7
      %v3274 = vrot.slane %v3207, 7
      %v3275 = vsel %vm440, %v3273, %v3274
      %v3276 = vrot.slane %v3208, 7
      %v3277 = vrot.slane %v3209, 7
      %v3278 = vsel %vm440, %v3276, %v3277
      %v3279 = vrot.slane %v3210, 7
      %v3280 = vrot.slane %v3211, 7
      %v3281 = vsel %vm440, %v3279, %v3280
      %v3282 = vrot.slane %v3212, 7
      %v3283 = vrot.slane %v3213, 7
      %v3284 = vsel %vm440, %v3282, %v3283
      %v3285 = vrot.slane %v3214, 7
      %v3286 = vrot.slane %v3215, 7
      %v3287 = vsel %vm440, %v3285, %v3286
      %v3288 = vrot.slane %v3216, 7
      %v3289 = vrot.slane %v3217, 7
      %v3290 = vsel %vm440, %v3288, %v3289
      %v3291 = vrot.slane %v3218, 7
      %v3292 = vrot.slane %v3219, 7
      %v3293 = vsel %vm440, %v3291, %v3292
      %v3294 = vrot.slane %v3220, 7
      %v3295 = vrot.slane %v3221, 7
      %v3296 = vsel %vm440, %v3294, %v3295
      %v3297 = vrot.slane %v3222, 7
      %v3298 = vrot.slane %v3223, 7
      %v3299 = vsel %vm440, %v3297, %v3298
      %v3300 = vrot.slane %v3224, 7
      %v3301 = vrot.slane %v3225, 7
      %v3302 = vsel %vm440, %v3300, %v3301
      %v3303 = vrot.slane %v3226, 7
      %v3304 = vrot.slane %v3227, 7
      %v3305 = vsel %vm440, %v3303, %v3304
      %v3306 = vrot.slane %v3228, 7
      %v3307 = vrot.slane %v3229, 7
      %v3308 = vsel %vm440, %v3306, %v3307
      %v3309 = vrot.slane %v3230, 7
      %v3310 = vrot.slane %v3231, 7
      %v3311 = vsel %vm440, %v3309, %v3310
      %v3359 = vsel %vm440, 0.0, %v3264
      %v3360 = vsel %vm440, 0.0, %v3267
      %v3361 = vsel %vm440, 0.0, %v3270
      %v3362 = vsel %vm440, 0.0, %v3273
      %v3363 = vsel %vm440, 0.0, %v3276
      %v3364 = vsel %vm440, 0.0, %v3279
      %v3365 = vsel %vm440, 0.0, %v3282
      %v3366 = vsel %vm440, 0.0, %v3285
      %v3367 = vsel %vm440, 0.0, %v3288
      %v3368 = vsel %vm440, 0.0, %v3291
      %v3369 = vsel %vm440, 0.0, %v3294
      %v3370 = vsel %vm440, 0.0, %v3297
      %v3371 = vsel %vm440, 0.0, %v3300
      %v3372 = vsel %vm440, 0.0, %v3303
      %v3373 = vsel %vm440, 0.0, %v3306
      %v3374 = vsel %vm440, 0.0, %v3309
      %v3375 = vsel %vm440, %v3265, 0.0
      %v3376 = vsel %vm440, %v3268, 0.0
      %v3377 = vsel %vm440, %v3271, 0.0
      %v3378 = vsel %vm440, %v3274, 0.0
      %v3379 = vsel %vm440, %v3277, 0.0
      %v3380 = vsel %vm440, %v3280, 0.0
      %v3381 = vsel %vm440, %v3283, 0.0
      %v3382 = vsel %vm440, %v3286, 0.0
      %v3383 = vsel %vm440, %v3289, 0.0
      %v3384 = vsel %vm440, %v3292, 0.0
      %v3385 = vsel %vm440, %v3295, 0.0
      %v3386 = vsel %vm440, %v3298, 0.0
      %v3387 = vsel %vm440, %v3301, 0.0
      %v3388 = vsel %vm440, %v3304, 0.0
      %v3389 = vsel %vm440, %v3307, 0.0
      %v3390 = vsel %vm440, %v3310, 0.0
      %v3421 = vrot.slane %v3359, 1
      %v3422 = vrot.slane %v3266, 1
      %v3423 = vsel %vm472, %v3421, %v3422
      %v3424 = vrot.slane %v3375, 1
      %v3425 = vsel %vm472, %v3422, %v3424
      %v3426 = vrot.slane %v3360, 1
      %v3427 = vrot.slane %v3269, 1
      %v3428 = vsel %vm472, %v3426, %v3427
      %v3429 = vrot.slane %v3376, 1
      %v3430 = vsel %vm472, %v3427, %v3429
      %v3431 = vrot.slane %v3361, 1
      %v3432 = vrot.slane %v3272, 1
      %v3433 = vsel %vm472, %v3431, %v3432
      %v3434 = vrot.slane %v3377, 1
      %v3435 = vsel %vm472, %v3432, %v3434
      %v3436 = vrot.slane %v3362, 1
      %v3437 = vrot.slane %v3275, 1
      %v3438 = vsel %vm472, %v3436, %v3437
      %v3439 = vrot.slane %v3378, 1
      %v3440 = vsel %vm472, %v3437, %v3439
      %v3441 = vrot.slane %v3363, 1
      %v3442 = vrot.slane %v3278, 1
      %v3443 = vsel %vm472, %v3441, %v3442
      %v3444 = vrot.slane %v3379, 1
      %v3445 = vsel %vm472, %v3442, %v3444
      %v3446 = vrot.slane %v3364, 1
      %v3447 = vrot.slane %v3281, 1
      %v3448 = vsel %vm472, %v3446, %v3447
      %v3449 = vrot.slane %v3380, 1
      %v3450 = vsel %vm472, %v3447, %v3449
      %v3451 = vrot.slane %v3365, 1
      %v3452 = vrot.slane %v3284, 1
      %v3453 = vsel %vm472, %v3451, %v3452
      %v3454 = vrot.slane %v3381, 1
      %v3455 = vsel %vm472, %v3452, %v3454
      %v3456 = vrot.slane %v3366, 1
      %v3457 = vrot.slane %v3287, 1
      %v3458 = vsel %vm472, %v3456, %v3457
      %v3459 = vrot.slane %v3382, 1
      %v3460 = vsel %vm472, %v3457, %v3459
      %v3461 = vrot.slane %v3367, 1
      %v3462 = vrot.slane %v3290, 1
      %v3463 = vsel %vm472, %v3461, %v3462
      %v3464 = vrot.slane %v3383, 1
      %v3465 = vsel %vm472, %v3462, %v3464
      %v3466 = vrot.slane %v3368, 1
      %v3467 = vrot.slane %v3293, 1
      %v3468 = vsel %vm472, %v3466, %v3467
      %v3469 = vrot.slane %v3384, 1
      %v3470 = vsel %vm472, %v3467, %v3469
      %v3471 = vrot.slane %v3369, 1
      %v3472 = vrot.slane %v3296, 1
      %v3473 = vsel %vm472, %v3471, %v3472
      %v3474 = vrot.slane %v3385, 1
      %v3475 = vsel %vm472, %v3472, %v3474
      %v3476 = vrot.slane %v3370, 1
      %v3477 = vrot.slane %v3299, 1
      %v3478 = vsel %vm472, %v3476, %v3477
      %v3479 = vrot.slane %v3386, 1
      %v3480 = vsel %vm472, %v3477, %v3479
      %v3481 = vrot.slane %v3371, 1
      %v3482 = vrot.slane %v3302, 1
      %v3483 = vsel %vm472, %v3481, %v3482
      %v3484 = vrot.slane %v3387, 1
      %v3485 = vsel %vm472, %v3482, %v3484
      %v3486 = vrot.slane %v3372, 1
      %v3487 = vrot.slane %v3305, 1
      %v3488 = vsel %vm472, %v3486, %v3487
      %v3489 = vrot.slane %v3388, 1
      %v3490 = vsel %vm472, %v3487, %v3489
      %v3491 = vrot.slane %v3373, 1
      %v3492 = vrot.slane %v3308, 1
      %v3493 = vsel %vm472, %v3491, %v3492
      %v3494 = vrot.slane %v3389, 1
      %v3495 = vsel %vm472, %v3492, %v3494
      %3496 = vrot.lane.b32.xlu0 %v474, 16
      %v3497 = vpop.permute.xlu0 %3496
      %3498 = vrot.lane.b32.xlu0 %v3423, 16
      %v3499 = vpop.permute.xlu0 %3498
      %3500 = vrot.lane.b32.xlu0 %v3425, 16
      %v3501 = vpop.permute.xlu0 %3500
      %3502 = vrot.lane.b32.xlu0 %v3428, 16
      %v3503 = vpop.permute.xlu0 %3502
      %3504 = vrot.lane.b32.xlu0 %v3430, 16
      %v3505 = vpop.permute.xlu0 %3504
      %3506 = vrot.lane.b32.xlu0 %v3433, 16
      %v3507 = vpop.permute.xlu0 %3506
      %3508 = vrot.lane.b32.xlu0 %v3435, 16
      %v3509 = vpop.permute.xlu0 %3508
      %3510 = vrot.lane.b32.xlu0 %v3438, 16
      %v3511 = vpop.permute.xlu0 %3510
      %3512 = vrot.lane.b32.xlu0 %v3440, 16
      %v3513 = vpop.permute.xlu0 %3512
      %3514 = vrot.lane.b32.xlu0 %v3443, 16
      %v3515 = vpop.permute.xlu0 %3514
      %3516 = vrot.lane.b32.xlu0 %v3445, 16
      %v3517 = vpop.permute.xlu0 %3516
      %3518 = vrot.lane.b32.xlu0 %v3448, 16
      %v3519 = vpop.permute.xlu0 %3518
      %3520 = vrot.lane.b32.xlu0 %v3450, 16
      %v3521 = vpop.permute.xlu0 %3520
      %3522 = vrot.lane.b32.xlu0 %v3453, 16
      %v3523 = vpop.permute.xlu0 %3522
      %3524 = vrot.lane.b32.xlu0 %v3455, 16
      %v3525 = vpop.permute.xlu0 %3524
      %3526 = vrot.lane.b32.xlu0 %v3458, 16
      %v3527 = vpop.permute.xlu0 %3526
      %3528 = vrot.lane.b32.xlu0 %v3460, 16
      %v3529 = vpop.permute.xlu0 %3528
      %3530 = vrot.lane.b32.xlu0 %v3463, 16
      %v3531 = vpop.permute.xlu0 %3530
      %3532 = vrot.lane.b32.xlu0 %v3465, 16
      %v3533 = vpop.permute.xlu0 %3532
      %3534 = vrot.lane.b32.xlu0 %v3468, 16
      %v3535 = vpop.permute.xlu0 %3534
      %3536 = vrot.lane.b32.xlu0 %v3470, 16
      %v3537 = vpop.permute.xlu0 %3536
      %3538 = vrot.lane.b32.xlu0 %v3473, 16
      %v3539 = vpop.permute.xlu0 %3538
      %3540 = vrot.lane.b32.xlu0 %v3475, 16
      %v3541 = vpop.permute.xlu0 %3540
      %3542 = vrot.lane.b32.xlu0 %v3478, 16
      %v3543 = vpop.permute.xlu0 %3542
      %3544 = vrot.lane.b32.xlu0 %v3480, 16
      %v3545 = vpop.permute.xlu0 %3544
      %3546 = vrot.lane.b32.xlu0 %v3483, 16
      %v3547 = vpop.permute.xlu0 %3546
      %3548 = vrot.lane.b32.xlu0 %v3485, 16
      %v3549 = vpop.permute.xlu0 %3548
      %3550 = vrot.lane.b32.xlu0 %v3488, 16
      %v3551 = vpop.permute.xlu0 %3550
      %3552 = vrot.lane.b32.xlu0 %v3490, 16
      %v3553 = vpop.permute.xlu0 %3552
      %3554 = vrot.lane.b32.xlu0 %v3493, 16
      %v3555 = vpop.permute.xlu0 %3554
      %3556 = vrot.lane.b32.xlu0 %v3495, 16
      %v3557 = vpop.permute.xlu0 %3556
      %v3589 = vrot.slane %v3359, 2
      %v3590 = vrot.slane %v3266, 2
      %v3591 = vsel %vm520, %v3589, %v3590
      %v3592 = vrot.slane %v3375, 2
      %v3593 = vsel %vm520, %v3590, %v3592
      %v3594 = vrot.slane %v3360, 2
      %v3595 = vrot.slane %v3269, 2
      %v3596 = vsel %vm520, %v3594, %v3595
      %v3597 = vrot.slane %v3376, 2
      %v3598 = vsel %vm520, %v3595, %v3597
      %v3599 = vrot.slane %v3361, 2
      %v3600 = vrot.slane %v3272, 2
      %v3601 = vsel %vm520, %v3599, %v3600
      %v3602 = vrot.slane %v3377, 2
      %v3603 = vsel %vm520, %v3600, %v3602
      %v3604 = vrot.slane %v3362, 2
      %v3605 = vrot.slane %v3275, 2
      %v3606 = vsel %vm520, %v3604, %v3605
      %v3607 = vrot.slane %v3378, 2
      %v3608 = vsel %vm520, %v3605, %v3607
      %v3609 = vrot.slane %v3363, 2
      %v3610 = vrot.slane %v3278, 2
      %v3611 = vsel %vm520, %v3609, %v3610
      %v3612 = vrot.slane %v3379, 2
      %v3613 = vsel %vm520, %v3610, %v3612
      %v3614 = vrot.slane %v3364, 2
      %v3615 = vrot.slane %v3281, 2
      %v3616 = vsel %vm520, %v3614, %v3615
      %v3617 = vrot.slane %v3380, 2
      %v3618 = vsel %vm520, %v3615, %v3617
      %v3619 = vrot.slane %v3365, 2
      %v3620 = vrot.slane %v3284, 2
      %v3621 = vsel %vm520, %v3619, %v3620
      %v3622 = vrot.slane %v3381, 2
      %v3623 = vsel %vm520, %v3620, %v3622
      %v3624 = vrot.slane %v3366, 2
      %v3625 = vrot.slane %v3287, 2
      %v3626 = vsel %vm520, %v3624, %v3625
      %v3627 = vrot.slane %v3382, 2
      %v3628 = vsel %vm520, %v3625, %v3627
      %v3629 = vrot.slane %v3367, 2
      %v3630 = vrot.slane %v3290, 2
      %v3631 = vsel %vm520, %v3629, %v3630
      %v3632 = vrot.slane %v3383, 2
      %v3633 = vsel %vm520, %v3630, %v3632
      %v3634 = vrot.slane %v3368, 2
      %v3635 = vrot.slane %v3293, 2
      %v3636 = vsel %vm520, %v3634, %v3635
      %v3637 = vrot.slane %v3384, 2
      %v3638 = vsel %vm520, %v3635, %v3637
      %v3639 = vrot.slane %v3369, 2
      %v3640 = vrot.slane %v3296, 2
      %v3641 = vsel %vm520, %v3639, %v3640
      %v3642 = vrot.slane %v3385, 2
      %v3643 = vsel %vm520, %v3640, %v3642
      %v3644 = vrot.slane %v3370, 2
      %v3645 = vrot.slane %v3299, 2
      %v3646 = vsel %vm520, %v3644, %v3645
      %v3647 = vrot.slane %v3386, 2
      %v3648 = vsel %vm520, %v3645, %v3647
      %v3649 = vrot.slane %v3371, 2
      %v3650 = vrot.slane %v3302, 2
      %v3651 = vsel %vm520, %v3649, %v3650
      %v3652 = vrot.slane %v3387, 2
      %v3653 = vsel %vm520, %v3650, %v3652
      %v3654 = vrot.slane %v3372, 2
      %v3655 = vrot.slane %v3305, 2
      %v3656 = vsel %vm520, %v3654, %v3655
      %v3657 = vrot.slane %v3388, 2
      %v3658 = vsel %vm520, %v3655, %v3657
      %v3659 = vrot.slane %v3373, 2
      %v3660 = vrot.slane %v3308, 2
      %v3661 = vsel %vm520, %v3659, %v3660
      %v3662 = vrot.slane %v3389, 2
      %v3663 = vsel %vm520, %v3660, %v3662
      %3664 = vrot.lane.b32.xlu0 %v522, 32
      %v3665 = vpop.permute.xlu0 %3664
      %3666 = vrot.lane.b32.xlu0 %v3591, 32
      %v3667 = vpop.permute.xlu0 %3666
      %3668 = vrot.lane.b32.xlu0 %v3593, 32
      %v3669 = vpop.permute.xlu0 %3668
      %3670 = vrot.lane.b32.xlu0 %v3596, 32
      %v3671 = vpop.permute.xlu0 %3670
      %3672 = vrot.lane.b32.xlu0 %v3598, 32
      %v3673 = vpop.permute.xlu0 %3672
      %3674 = vrot.lane.b32.xlu0 %v3601, 32
      %v3675 = vpop.permute.xlu0 %3674
      %3676 = vrot.lane.b32.xlu0 %v3603, 32
      %v3677 = vpop.permute.xlu0 %3676
      %3678 = vrot.lane.b32.xlu0 %v3606, 32
      %v3679 = vpop.permute.xlu0 %3678
      %3680 = vrot.lane.b32.xlu0 %v3608, 32
      %v3681 = vpop.permute.xlu0 %3680
      %3682 = vrot.lane.b32.xlu0 %v3611, 32
      %v3683 = vpop.permute.xlu0 %3682
      %3684 = vrot.lane.b32.xlu0 %v3613, 32
      %v3685 = vpop.permute.xlu0 %3684
      %3686 = vrot.lane.b32.xlu0 %v3616, 32
      %v3687 = vpop.permute.xlu0 %3686
      %3688 = vrot.lane.b32.xlu0 %v3618, 32
      %v3689 = vpop.permute.xlu0 %3688
      %3690 = vrot.lane.b32.xlu0 %v3621, 32
      %v3691 = vpop.permute.xlu0 %3690
      %3692 = vrot.lane.b32.xlu0 %v3623, 32
      %v3693 = vpop.permute.xlu0 %3692
      %3694 = vrot.lane.b32.xlu0 %v3626, 32
      %v3695 = vpop.permute.xlu0 %3694
      %3696 = vrot.lane.b32.xlu0 %v3628, 32
      %v3697 = vpop.permute.xlu0 %3696
      %3698 = vrot.lane.b32.xlu0 %v3631, 32
      %v3699 = vpop.permute.xlu0 %3698
      %3700 = vrot.lane.b32.xlu0 %v3633, 32
      %v3701 = vpop.permute.xlu0 %3700
      %3702 = vrot.lane.b32.xlu0 %v3636, 32
      %v3703 = vpop.permute.xlu0 %3702
      %3704 = vrot.lane.b32.xlu0 %v3638, 32
      %v3705 = vpop.permute.xlu0 %3704
      %3706 = vrot.lane.b32.xlu0 %v3641, 32
      %v3707 = vpop.permute.xlu0 %3706
      %3708 = vrot.lane.b32.xlu0 %v3643, 32
      %v3709 = vpop.permute.xlu0 %3708
      %3710 = vrot.lane.b32.xlu0 %v3646, 32
      %v3711 = vpop.permute.xlu0 %3710
      %3712 = vrot.lane.b32.xlu0 %v3648, 32
      %v3713 = vpop.permute.xlu0 %3712
      %3714 = vrot.lane.b32.xlu0 %v3651, 32
      %v3715 = vpop.permute.xlu0 %3714
      %3716 = vrot.lane.b32.xlu0 %v3653, 32
      %v3717 = vpop.permute.xlu0 %3716
      %3718 = vrot.lane.b32.xlu0 %v3656, 32
      %v3719 = vpop.permute.xlu0 %3718
      %3720 = vrot.lane.b32.xlu0 %v3658, 32
      %v3721 = vpop.permute.xlu0 %3720
      %3722 = vrot.lane.b32.xlu0 %v3661, 32
      %v3723 = vpop.permute.xlu0 %3722
      %3724 = vrot.lane.b32.xlu0 %v3663, 32
      %v3725 = vpop.permute.xlu0 %3724
      %3758 = vrot.lane.b32.xlu0 %v3359, 48
      %v3759 = vpop.permute.xlu0 %3758
      %3760 = vrot.lane.b32.xlu0 %v3266, 48
      %v3761 = vpop.permute.xlu0 %3760
      %3762 = vrot.lane.b32.xlu0 %v3360, 48
      %v3763 = vpop.permute.xlu0 %3762
      %3764 = vrot.lane.b32.xlu0 %v3269, 48
      %v3765 = vpop.permute.xlu0 %3764
      %3766 = vrot.lane.b32.xlu0 %v3361, 48
      %v3767 = vpop.permute.xlu0 %3766
      %3768 = vrot.lane.b32.xlu0 %v3272, 48
      %v3769 = vpop.permute.xlu0 %3768
      %3770 = vrot.lane.b32.xlu0 %v3362, 48
      %v3771 = vpop.permute.xlu0 %3770
      %3772 = vrot.lane.b32.xlu0 %v3275, 48
      %v3773 = vpop.permute.xlu0 %3772
      %3774 = vrot.lane.b32.xlu0 %v3363, 48
      %v3775 = vpop.permute.xlu0 %3774
      %3776 = vrot.lane.b32.xlu0 %v3278, 48
      %v3777 = vpop.permute.xlu0 %3776
      %3778 = vrot.lane.b32.xlu0 %v3364, 48
      %v3779 = vpop.permute.xlu0 %3778
      %3780 = vrot.lane.b32.xlu0 %v3281, 48
      %v3781 = vpop.permute.xlu0 %3780
      %3782 = vrot.lane.b32.xlu0 %v3365, 48
      %v3783 = vpop.permute.xlu0 %3782
      %3784 = vrot.lane.b32.xlu0 %v3284, 48
      %v3785 = vpop.permute.xlu0 %3784
      %3786 = vrot.lane.b32.xlu0 %v3366, 48
      %v3787 = vpop.permute.xlu0 %3786
      %3788 = vrot.lane.b32.xlu0 %v3287, 48
      %v3789 = vpop.permute.xlu0 %3788
      %3790 = vrot.lane.b32.xlu0 %v3367, 48
      %v3791 = vpop.permute.xlu0 %3790
      %3792 = vrot.lane.b32.xlu0 %v3290, 48
      %v3793 = vpop.permute.xlu0 %3792
      %3794 = vrot.lane.b32.xlu0 %v3368, 48
      %v3795 = vpop.permute.xlu0 %3794
      %3796 = vrot.lane.b32.xlu0 %v3293, 48
      %v3797 = vpop.permute.xlu0 %3796
      %3798 = vrot.lane.b32.xlu0 %v3369, 48
      %v3799 = vpop.permute.xlu0 %3798
      %3800 = vrot.lane.b32.xlu0 %v3296, 48
      %v3801 = vpop.permute.xlu0 %3800
      %3802 = vrot.lane.b32.xlu0 %v3370, 48
      %v3803 = vpop.permute.xlu0 %3802
      %3804 = vrot.lane.b32.xlu0 %v3299, 48
      %v3805 = vpop.permute.xlu0 %3804
      %3806 = vrot.lane.b32.xlu0 %v3371, 48
      %v3807 = vpop.permute.xlu0 %3806
      %3808 = vrot.lane.b32.xlu0 %v3302, 48
      %v3809 = vpop.permute.xlu0 %3808
      %3810 = vrot.lane.b32.xlu0 %v3372, 48
      %v3811 = vpop.permute.xlu0 %3810
      %3812 = vrot.lane.b32.xlu0 %v3305, 48
      %v3813 = vpop.permute.xlu0 %3812
      %3814 = vrot.lane.b32.xlu0 %v3373, 48
      %v3815 = vpop.permute.xlu0 %3814
      %3816 = vrot.lane.b32.xlu0 %v3308, 48
      %v3817 = vpop.permute.xlu0 %3816
      %3818 = vrot.lane.b32.xlu0 %v3374, 48
      %v3819 = vpop.permute.xlu0 %3818
      %3820 = vrot.lane.b32.xlu0 %v3311, 48
      %v3821 = vpop.permute.xlu0 %3820
      %v3855 = vrot.slane %v3374, 1
      %v3856 = vrot.slane %v3311, 1
      %v3857 = vsel %vm472, %v3855, %v3856
      %v3858 = vrot.slane %v3390, 1
      %v3859 = vsel %vm472, %v3856, %v3858
      %3860 = vrot.lane.b32.xlu0 %v3423, 64
      %v3861 = vpop.permute.xlu0 %3860
      %3862 = vrot.lane.b32.xlu0 %v3425, 64
      %v3863 = vpop.permute.xlu0 %3862
      %3864 = vrot.lane.b32.xlu0 %v3428, 64
      %v3865 = vpop.permute.xlu0 %3864
      %3866 = vrot.lane.b32.xlu0 %v3430, 64
      %v3867 = vpop.permute.xlu0 %3866
      %3868 = vrot.lane.b32.xlu0 %v3433, 64
      %v3869 = vpop.permute.xlu0 %3868
      %3870 = vrot.lane.b32.xlu0 %v3435, 64
      %v3871 = vpop.permute.xlu0 %3870
      %3872 = vrot.lane.b32.xlu0 %v3438, 64
      %v3873 = vpop.permute.xlu0 %3872
      %3874 = vrot.lane.b32.xlu0 %v3440, 64
      %v3875 = vpop.permute.xlu0 %3874
      %3876 = vrot.lane.b32.xlu0 %v3443, 64
      %v3877 = vpop.permute.xlu0 %3876
      %3878 = vrot.lane.b32.xlu0 %v3445, 64
      %v3879 = vpop.permute.xlu0 %3878
      %3880 = vrot.lane.b32.xlu0 %v3448, 64
      %v3881 = vpop.permute.xlu0 %3880
      %3882 = vrot.lane.b32.xlu0 %v3450, 64
      %v3883 = vpop.permute.xlu0 %3882
      %3884 = vrot.lane.b32.xlu0 %v3453, 64
      %v3885 = vpop.permute.xlu0 %3884
      %3886 = vrot.lane.b32.xlu0 %v3455, 64
      %v3887 = vpop.permute.xlu0 %3886
      %3888 = vrot.lane.b32.xlu0 %v3458, 64
      %v3889 = vpop.permute.xlu0 %3888
      %3890 = vrot.lane.b32.xlu0 %v3460, 64
      %v3891 = vpop.permute.xlu0 %3890
      %3892 = vrot.lane.b32.xlu0 %v3463, 64
      %v3893 = vpop.permute.xlu0 %3892
      %3894 = vrot.lane.b32.xlu0 %v3465, 64
      %v3895 = vpop.permute.xlu0 %3894
      %3896 = vrot.lane.b32.xlu0 %v3468, 64
      %v3897 = vpop.permute.xlu0 %3896
      %3898 = vrot.lane.b32.xlu0 %v3470, 64
      %v3899 = vpop.permute.xlu0 %3898
      %3900 = vrot.lane.b32.xlu0 %v3473, 64
      %v3901 = vpop.permute.xlu0 %3900
      %3902 = vrot.lane.b32.xlu0 %v3475, 64
      %v3903 = vpop.permute.xlu0 %3902
      %3904 = vrot.lane.b32.xlu0 %v3478, 64
      %v3905 = vpop.permute.xlu0 %3904
      %3906 = vrot.lane.b32.xlu0 %v3480, 64
      %v3907 = vpop.permute.xlu0 %3906
      %3908 = vrot.lane.b32.xlu0 %v3483, 64
      %v3909 = vpop.permute.xlu0 %3908
      %3910 = vrot.lane.b32.xlu0 %v3485, 64
      %v3911 = vpop.permute.xlu0 %3910
      %3912 = vrot.lane.b32.xlu0 %v3488, 64
      %v3913 = vpop.permute.xlu0 %3912
      %3914 = vrot.lane.b32.xlu0 %v3490, 64
      %v3915 = vpop.permute.xlu0 %3914
      %3916 = vrot.lane.b32.xlu0 %v3493, 64
      %v3917 = vpop.permute.xlu0 %3916
      %3918 = vrot.lane.b32.xlu0 %v3495, 64
      %v3919 = vpop.permute.xlu0 %3918
      %3920 = vrot.lane.b32.xlu0 %v3857, 64
      %v3921 = vpop.permute.xlu0 %3920
      %3922 = vrot.lane.b32.xlu0 %v3859, 64
      %v3923 = vpop.permute.xlu0 %3922
      %v3956 = vrot.slane %v3374, 2
      %v3957 = vrot.slane %v3311, 2
      %v3958 = vsel %vm520, %v3956, %v3957
      %v3959 = vrot.slane %v3390, 2
      %v3960 = vsel %vm520, %v3957, %v3959
      %3961 = vrot.lane.b32.xlu0 %v3591, 80
      %v3962 = vpop.permute.xlu0 %3961
      %3963 = vrot.lane.b32.xlu0 %v3593, 80
      %v3964 = vpop.permute.xlu0 %3963
      %3965 = vrot.lane.b32.xlu0 %v3596, 80
      %v3966 = vpop.permute.xlu0 %3965
      %3967 = vrot.lane.b32.xlu0 %v3598, 80
      %v3968 = vpop.permute.xlu0 %3967
      %3969 = vrot.lane.b32.xlu0 %v3601, 80
      %v3970 = vpop.permute.xlu0 %3969
      %3971 = vrot.lane.b32.xlu0 %v3603, 80
      %v3972 = vpop.permute.xlu0 %3971
      %3973 = vrot.lane.b32.xlu0 %v3606, 80
      %v3974 = vpop.permute.xlu0 %3973
      %3975 = vrot.lane.b32.xlu0 %v3608, 80
      %v3976 = vpop.permute.xlu0 %3975
      %3977 = vrot.lane.b32.xlu0 %v3611, 80
      %v3978 = vpop.permute.xlu0 %3977
      %3979 = vrot.lane.b32.xlu0 %v3613, 80
      %v3980 = vpop.permute.xlu0 %3979
      %3981 = vrot.lane.b32.xlu0 %v3616, 80
      %v3982 = vpop.permute.xlu0 %3981
      %3983 = vrot.lane.b32.xlu0 %v3618, 80
      %v3984 = vpop.permute.xlu0 %3983
      %3985 = vrot.lane.b32.xlu0 %v3621, 80
      %v3986 = vpop.permute.xlu0 %3985
      %3987 = vrot.lane.b32.xlu0 %v3623, 80
      %v3988 = vpop.permute.xlu0 %3987
      %3989 = vrot.lane.b32.xlu0 %v3626, 80
      %v3990 = vpop.permute.xlu0 %3989
      %3991 = vrot.lane.b32.xlu0 %v3628, 80
      %v3992 = vpop.permute.xlu0 %3991
      %3993 = vrot.lane.b32.xlu0 %v3631, 80
      %v3994 = vpop.permute.xlu0 %3993
      %3995 = vrot.lane.b32.xlu0 %v3633, 80
      %v3996 = vpop.permute.xlu0 %3995
      %3997 = vrot.lane.b32.xlu0 %v3636, 80
      %v3998 = vpop.permute.xlu0 %3997
      %3999 = vrot.lane.b32.xlu0 %v3638, 80
      %v4000 = vpop.permute.xlu0 %3999
      %4001 = vrot.lane.b32.xlu0 %v3641, 80
      %v4002 = vpop.permute.xlu0 %4001
      %4003 = vrot.lane.b32.xlu0 %v3643, 80
      %v4004 = vpop.permute.xlu0 %4003
      %4005 = vrot.lane.b32.xlu0 %v3646, 80
      %v4006 = vpop.permute.xlu0 %4005
      %4007 = vrot.lane.b32.xlu0 %v3648, 80
      %v4008 = vpop.permute.xlu0 %4007
      %4009 = vrot.lane.b32.xlu0 %v3651, 80
      %v4010 = vpop.permute.xlu0 %4009
      %4011 = vrot.lane.b32.xlu0 %v3653, 80
      %v4012 = vpop.permute.xlu0 %4011
      %4013 = vrot.lane.b32.xlu0 %v3656, 80
      %v4014 = vpop.permute.xlu0 %4013
      %4015 = vrot.lane.b32.xlu0 %v3658, 80
      %v4016 = vpop.permute.xlu0 %4015
      %4017 = vrot.lane.b32.xlu0 %v3661, 80
      %v4018 = vpop.permute.xlu0 %4017
      %4019 = vrot.lane.b32.xlu0 %v3663, 80
      %v4020 = vpop.permute.xlu0 %4019
      %4021 = vrot.lane.b32.xlu0 %v3958, 80
      %v4022 = vpop.permute.xlu0 %4021
      %4023 = vrot.lane.b32.xlu0 %v3960, 80
      %v4024 = vpop.permute.xlu0 %4023
      %4057 = vrot.lane.b32.xlu0 %v3360, 96
      %v4058 = vpop.permute.xlu0 %4057
      %4059 = vrot.lane.b32.xlu0 %v3269, 96
      %v4060 = vpop.permute.xlu0 %4059
      %4061 = vrot.lane.b32.xlu0 %v3361, 96
      %v4062 = vpop.permute.xlu0 %4061
      %4063 = vrot.lane.b32.xlu0 %v3272, 96
      %v4064 = vpop.permute.xlu0 %4063
      %4065 = vrot.lane.b32.xlu0 %v3362, 96
      %v4066 = vpop.permute.xlu0 %4065
      %4067 = vrot.lane.b32.xlu0 %v3275, 96
      %v4068 = vpop.permute.xlu0 %4067
      %4069 = vrot.lane.b32.xlu0 %v3363, 96
      %v4070 = vpop.permute.xlu0 %4069
      %4071 = vrot.lane.b32.xlu0 %v3278, 96
      %v4072 = vpop.permute.xlu0 %4071
      %4073 = vrot.lane.b32.xlu0 %v3364, 96
      %v4074 = vpop.permute.xlu0 %4073
      %4075 = vrot.lane.b32.xlu0 %v3281, 96
      %v4076 = vpop.permute.xlu0 %4075
      %4077 = vrot.lane.b32.xlu0 %v3365, 96
      %v4078 = vpop.permute.xlu0 %4077
      %4079 = vrot.lane.b32.xlu0 %v3284, 96
      %v4080 = vpop.permute.xlu0 %4079
      %4081 = vrot.lane.b32.xlu0 %v3366, 96
      %v4082 = vpop.permute.xlu0 %4081
      %4083 = vrot.lane.b32.xlu0 %v3287, 96
      %v4084 = vpop.permute.xlu0 %4083
      %4085 = vrot.lane.b32.xlu0 %v3367, 96
      %v4086 = vpop.permute.xlu0 %4085
      %4087 = vrot.lane.b32.xlu0 %v3290, 96
      %v4088 = vpop.permute.xlu0 %4087
      %4089 = vrot.lane.b32.xlu0 %v3368, 96
      %v4090 = vpop.permute.xlu0 %4089
      %4091 = vrot.lane.b32.xlu0 %v3293, 96
      %v4092 = vpop.permute.xlu0 %4091
      %4093 = vrot.lane.b32.xlu0 %v3369, 96
      %v4094 = vpop.permute.xlu0 %4093
      %4095 = vrot.lane.b32.xlu0 %v3296, 96
      %v4096 = vpop.permute.xlu0 %4095
      %4097 = vrot.lane.b32.xlu0 %v3370, 96
      %v4098 = vpop.permute.xlu0 %4097
      %4099 = vrot.lane.b32.xlu0 %v3299, 96
      %v4100 = vpop.permute.xlu0 %4099
      %4101 = vrot.lane.b32.xlu0 %v3371, 96
      %v4102 = vpop.permute.xlu0 %4101
      %4103 = vrot.lane.b32.xlu0 %v3302, 96
      %v4104 = vpop.permute.xlu0 %4103
      %4105 = vrot.lane.b32.xlu0 %v3372, 96
      %v4106 = vpop.permute.xlu0 %4105
      %4107 = vrot.lane.b32.xlu0 %v3305, 96
      %v4108 = vpop.permute.xlu0 %4107
      %4109 = vrot.lane.b32.xlu0 %v3373, 96
      %v4110 = vpop.permute.xlu0 %4109
      %4111 = vrot.lane.b32.xlu0 %v3308, 96
      %v4112 = vpop.permute.xlu0 %4111
      %4113 = vrot.lane.b32.xlu0 %v3374, 96
      %v4114 = vpop.permute.xlu0 %4113
      %4115 = vrot.lane.b32.xlu0 %v3311, 96
      %v4116 = vpop.permute.xlu0 %4115
      %4117 = vrot.lane.b32.xlu0 0.0, 96
      %v4118 = vpop.permute.xlu0 %4117
      %4150 = vrot.lane.b32.xlu0 %v3428, 112
      %v4151 = vpop.permute.xlu0 %4150
      %4152 = vrot.lane.b32.xlu0 %v3430, 112
      %v4153 = vpop.permute.xlu0 %4152
      %4154 = vrot.lane.b32.xlu0 %v3433, 112
      %v4155 = vpop.permute.xlu0 %4154
      %4156 = vrot.lane.b32.xlu0 %v3435, 112
      %v4157 = vpop.permute.xlu0 %4156
      %4158 = vrot.lane.b32.xlu0 %v3438, 112
      %v4159 = vpop.permute.xlu0 %4158
      %4160 = vrot.lane.b32.xlu0 %v3440, 112
      %v4161 = vpop.permute.xlu0 %4160
      %4162 = vrot.lane.b32.xlu0 %v3443, 112
      %v4163 = vpop.permute.xlu0 %4162
      %4164 = vrot.lane.b32.xlu0 %v3445, 112
      %v4165 = vpop.permute.xlu0 %4164
      %4166 = vrot.lane.b32.xlu0 %v3448, 112
      %v4167 = vpop.permute.xlu0 %4166
      %4168 = vrot.lane.b32.xlu0 %v3450, 112
      %v4169 = vpop.permute.xlu0 %4168
      %4170 = vrot.lane.b32.xlu0 %v3453, 112
      %v4171 = vpop.permute.xlu0 %4170
      %4172 = vrot.lane.b32.xlu0 %v3455, 112
      %v4173 = vpop.permute.xlu0 %4172
      %4174 = vrot.lane.b32.xlu0 %v3458, 112
      %v4175 = vpop.permute.xlu0 %4174
      %4176 = vrot.lane.b32.xlu0 %v3460, 112
      %v4177 = vpop.permute.xlu0 %4176
      %4178 = vrot.lane.b32.xlu0 %v3463, 112
      %v4179 = vpop.permute.xlu0 %4178
      %4180 = vrot.lane.b32.xlu0 %v3465, 112
      %v4181 = vpop.permute.xlu0 %4180
      %4182 = vrot.lane.b32.xlu0 %v3468, 112
      %v4183 = vpop.permute.xlu0 %4182
      %4184 = vrot.lane.b32.xlu0 %v3470, 112
      %v4185 = vpop.permute.xlu0 %4184
      %4186 = vrot.lane.b32.xlu0 %v3473, 112
      %v4187 = vpop.permute.xlu0 %4186
      %4188 = vrot.lane.b32.xlu0 %v3475, 112
      %v4189 = vpop.permute.xlu0 %4188
      %4190 = vrot.lane.b32.xlu0 %v3478, 112
      %v4191 = vpop.permute.xlu0 %4190
      %4192 = vrot.lane.b32.xlu0 %v3480, 112
      %v4193 = vpop.permute.xlu0 %4192
      %4194 = vrot.lane.b32.xlu0 %v3483, 112
      %v4195 = vpop.permute.xlu0 %4194
      %4196 = vrot.lane.b32.xlu0 %v3485, 112
      %v4197 = vpop.permute.xlu0 %4196
      %4198 = vrot.lane.b32.xlu0 %v3488, 112
      %v4199 = vpop.permute.xlu0 %4198
      %4200 = vrot.lane.b32.xlu0 %v3490, 112
      %v4201 = vpop.permute.xlu0 %4200
      %4202 = vrot.lane.b32.xlu0 %v3493, 112
      %v4203 = vpop.permute.xlu0 %4202
      %4204 = vrot.lane.b32.xlu0 %v3495, 112
      %v4205 = vpop.permute.xlu0 %4204
      %4206 = vrot.lane.b32.xlu0 %v3857, 112
      %v4207 = vpop.permute.xlu0 %4206
      %4208 = vrot.lane.b32.xlu0 %v3859, 112
      %v4209 = vpop.permute.xlu0 %4208
      %4210 = vrot.lane.b32.xlu0 %v474, 112
      %v4211 = vpop.permute.xlu0 %4210
      %v4274 = vsel %vm729, 0.0, %v3497
      %v4275 = vsel %vm729, %v3359, %v3499
      %v4276 = vsel %vm729, %v3266, %v3501
      %v4277 = vsel %vm729, %v3360, %v3503
      %v4278 = vsel %vm729, %v3269, %v3505
      %v4279 = vsel %vm729, %v3361, %v3507
      %v4280 = vsel %vm729, %v3272, %v3509
      %v4281 = vsel %vm729, %v3362, %v3511
      %v4282 = vsel %vm729, %v3275, %v3513
      %v4283 = vsel %vm729, %v3363, %v3515
      %v4284 = vsel %vm729, %v3278, %v3517
      %v4285 = vsel %vm729, %v3364, %v3519
      %v4286 = vsel %vm729, %v3281, %v3521
      %v4287 = vsel %vm729, %v3365, %v3523
      %v4288 = vsel %vm729, %v3284, %v3525
      %v4289 = vsel %vm729, %v3366, %v3527
      %v4290 = vsel %vm729, %v3287, %v3529
      %v4291 = vsel %vm729, %v3367, %v3531
      %v4292 = vsel %vm729, %v3290, %v3533
      %v4293 = vsel %vm729, %v3368, %v3535
      %v4294 = vsel %vm729, %v3293, %v3537
      %v4295 = vsel %vm729, %v3369, %v3539
      %v4296 = vsel %vm729, %v3296, %v3541
      %v4297 = vsel %vm729, %v3370, %v3543
      %v4298 = vsel %vm729, %v3299, %v3545
      %v4299 = vsel %vm729, %v3371, %v3547
      %v4300 = vsel %vm729, %v3302, %v3549
      %v4301 = vsel %vm729, %v3372, %v3551
      %v4302 = vsel %vm729, %v3305, %v3553
      %v4303 = vsel %vm729, %v3373, %v3555
      %v4304 = vsel %vm729, %v3308, %v3557
      %v4305 = vsel %vm747, %v4274, %v3665
      %v4306 = vsel %vm747, %v4275, %v3667
      %v4307 = vsel %vm747, %v4276, %v3669
      %v4308 = vsel %vm747, %v4277, %v3671
      %v4309 = vsel %vm747, %v4278, %v3673
      %v4310 = vsel %vm747, %v4279, %v3675
      %v4311 = vsel %vm747, %v4280, %v3677
      %v4312 = vsel %vm747, %v4281, %v3679
      %v4313 = vsel %vm747, %v4282, %v3681
      %v4314 = vsel %vm747, %v4283, %v3683
      %v4315 = vsel %vm747, %v4284, %v3685
      %v4316 = vsel %vm747, %v4285, %v3687
      %v4317 = vsel %vm747, %v4286, %v3689
      %v4318 = vsel %vm747, %v4287, %v3691
      %v4319 = vsel %vm747, %v4288, %v3693
      %v4320 = vsel %vm747, %v4289, %v3695
      %v4321 = vsel %vm747, %v4290, %v3697
      %v4322 = vsel %vm747, %v4291, %v3699
      %v4323 = vsel %vm747, %v4292, %v3701
      %v4324 = vsel %vm747, %v4293, %v3703
      %v4325 = vsel %vm747, %v4294, %v3705
      %v4326 = vsel %vm747, %v4295, %v3707
      %v4327 = vsel %vm747, %v4296, %v3709
      %v4328 = vsel %vm747, %v4297, %v3711
      %v4329 = vsel %vm747, %v4298, %v3713
      %v4330 = vsel %vm747, %v4299, %v3715
      %v4331 = vsel %vm747, %v4300, %v3717
      %v4332 = vsel %vm747, %v4301, %v3719
      %v4333 = vsel %vm747, %v4302, %v3721
      %v4334 = vsel %vm747, %v4303, %v3723
      %v4335 = vsel %vm747, %v4304, %v3725
      %v4336 = vsel %vm765, %v4305, %v3759
      %v4337 = vsel %vm765, %v4305, %v3761
      %v4338 = vsel %vm765, %v4306, %v3763
      %v4339 = vsel %vm765, %v4307, %v3765
      %v4340 = vsel %vm765, %v4308, %v3767
      %v4341 = vsel %vm765, %v4309, %v3769
      %v4342 = vsel %vm765, %v4310, %v3771
      %v4343 = vsel %vm765, %v4311, %v3773
      %v4344 = vsel %vm765, %v4312, %v3775
      %v4345 = vsel %vm765, %v4313, %v3777
      %v4346 = vsel %vm765, %v4314, %v3779
      %v4347 = vsel %vm765, %v4315, %v3781
      %v4348 = vsel %vm765, %v4316, %v3783
      %v4349 = vsel %vm765, %v4317, %v3785
      %v4350 = vsel %vm765, %v4318, %v3787
      %v4351 = vsel %vm765, %v4319, %v3789
      %v4352 = vsel %vm765, %v4320, %v3791
      %v4353 = vsel %vm765, %v4321, %v3793
      %v4354 = vsel %vm765, %v4322, %v3795
      %v4355 = vsel %vm765, %v4323, %v3797
      %v4356 = vsel %vm765, %v4324, %v3799
      %v4357 = vsel %vm765, %v4325, %v3801
      %v4358 = vsel %vm765, %v4326, %v3803
      %v4359 = vsel %vm765, %v4327, %v3805
      %v4360 = vsel %vm765, %v4328, %v3807
      %v4361 = vsel %vm765, %v4329, %v3809
      %v4362 = vsel %vm765, %v4330, %v3811
      %v4363 = vsel %vm765, %v4331, %v3813
      %v4364 = vsel %vm765, %v4332, %v3815
      %v4365 = vsel %vm765, %v4333, %v3817
      %v4366 = vsel %vm765, %v4334, %v3819
      %v4367 = vsel %vm765, %v4335, %v3821
      %v4368 = vsel %vm783, %v4336, %v3861
      %v4369 = vsel %vm783, %v4337, %v3863
      %v4370 = vsel %vm783, %v4338, %v3865
      %v4371 = vsel %vm783, %v4339, %v3867
      %v4372 = vsel %vm783, %v4340, %v3869
      %v4373 = vsel %vm783, %v4341, %v3871
      %v4374 = vsel %vm783, %v4342, %v3873
      %v4375 = vsel %vm783, %v4343, %v3875
      %v4376 = vsel %vm783, %v4344, %v3877
      %v4377 = vsel %vm783, %v4345, %v3879
      %v4378 = vsel %vm783, %v4346, %v3881
      %v4379 = vsel %vm783, %v4347, %v3883
      %v4380 = vsel %vm783, %v4348, %v3885
      %v4381 = vsel %vm783, %v4349, %v3887
      %v4382 = vsel %vm783, %v4350, %v3889
      %v4383 = vsel %vm783, %v4351, %v3891
      %v4384 = vsel %vm783, %v4352, %v3893
      %v4385 = vsel %vm783, %v4353, %v3895
      %v4386 = vsel %vm783, %v4354, %v3897
      %v4387 = vsel %vm783, %v4355, %v3899
      %v4388 = vsel %vm783, %v4356, %v3901
      %v4389 = vsel %vm783, %v4357, %v3903
      %v4390 = vsel %vm783, %v4358, %v3905
      %v4391 = vsel %vm783, %v4359, %v3907
      %v4392 = vsel %vm783, %v4360, %v3909
      %v4393 = vsel %vm783, %v4361, %v3911
      %v4394 = vsel %vm783, %v4362, %v3913
      %v4395 = vsel %vm783, %v4363, %v3915
      %v4396 = vsel %vm783, %v4364, %v3917
      %v4397 = vsel %vm783, %v4365, %v3919
      %v4398 = vsel %vm783, %v4366, %v3921
      %v4399 = vsel %vm783, %v4367, %v3923
      %vm4400 = vcmask 654336
      %v4401 = vsel %vm4400, %v4368, %v3962
      %v4402 = vsel %vm4400, %v4369, %v3964
      %v4403 = vsel %vm4400, %v4370, %v3966
      %v4404 = vsel %vm4400, %v4371, %v3968
      %v4405 = vsel %vm4400, %v4372, %v3970
      %v4406 = vsel %vm4400, %v4373, %v3972
      %v4407 = vsel %vm4400, %v4374, %v3974
      %v4408 = vsel %vm4400, %v4375, %v3976
      %v4409 = vsel %vm4400, %v4376, %v3978
      %v4410 = vsel %vm4400, %v4377, %v3980
      %v4411 = vsel %vm4400, %v4378, %v3982
      %v4412 = vsel %vm4400, %v4379, %v3984
      %v4413 = vsel %vm4400, %v4380, %v3986
      %v4414 = vsel %vm4400, %v4381, %v3988
      %v4415 = vsel %vm4400, %v4382, %v3990
      %v4416 = vsel %vm4400, %v4383, %v3992
      %v4417 = vsel %vm4400, %v4384, %v3994
      %v4418 = vsel %vm4400, %v4385, %v3996
      %v4419 = vsel %vm4400, %v4386, %v3998
      %v4420 = vsel %vm4400, %v4387, %v4000
      %v4421 = vsel %vm4400, %v4388, %v4002
      %v4422 = vsel %vm4400, %v4389, %v4004
      %v4423 = vsel %vm4400, %v4390, %v4006
      %v4424 = vsel %vm4400, %v4391, %v4008
      %v4425 = vsel %vm4400, %v4392, %v4010
      %v4426 = vsel %vm4400, %v4393, %v4012
      %v4427 = vsel %vm4400, %v4394, %v4014
      %v4428 = vsel %vm4400, %v4395, %v4016
      %v4429 = vsel %vm4400, %v4396, %v4018
      %v4430 = vsel %vm4400, %v4397, %v4020
      %v4431 = vsel %vm4400, %v4398, %v4022
      %v4432 = vsel %vm4400, %v4399, %v4024
      %v4433 = vsel %vm2600, %v4401, %v4058
      %v4434 = vsel %vm2600, %v4402, %v4060
      %v4435 = vsel %vm2600, %v4403, %v4062
      %v4436 = vsel %vm2600, %v4404, %v4064
      %v4437 = vsel %vm2600, %v4405, %v4066
      %v4438 = vsel %vm2600, %v4406, %v4068
      %v4439 = vsel %vm2600, %v4407, %v4070
      %v4440 = vsel %vm2600, %v4408, %v4072
      %v4441 = vsel %vm2600, %v4409, %v4074
      %v4442 = vsel %vm2600, %v4410, %v4076
      %v4443 = vsel %vm2600, %v4411, %v4078
      %v4444 = vsel %vm2600, %v4412, %v4080
      %v4445 = vsel %vm2600, %v4413, %v4082
      %v4446 = vsel %vm2600, %v4414, %v4084
      %v4447 = vsel %vm2600, %v4415, %v4086
      %v4448 = vsel %vm2600, %v4416, %v4088
      %v4449 = vsel %vm2600, %v4417, %v4090
      %v4450 = vsel %vm2600, %v4418, %v4092
      %v4451 = vsel %vm2600, %v4419, %v4094
      %v4452 = vsel %vm2600, %v4420, %v4096
      %v4453 = vsel %vm2600, %v4421, %v4098
      %v4454 = vsel %vm2600, %v4422, %v4100
      %v4455 = vsel %vm2600, %v4423, %v4102
      %v4456 = vsel %vm2600, %v4424, %v4104
      %v4457 = vsel %vm2600, %v4425, %v4106
      %v4458 = vsel %vm2600, %v4426, %v4108
      %v4459 = vsel %vm2600, %v4427, %v4110
      %v4460 = vsel %vm2600, %v4428, %v4112
      %v4461 = vsel %vm2600, %v4429, %v4114
      %v4462 = vsel %vm2600, %v4430, %v4116
      %v4463 = vsel %vm2600, %v4431, %v4118
      %v4464 = vsel %vm2600, %v4432, %v4118
      %vm4465 = vcmask 916480
      %v4466 = vsel %vm4465, %v4433, %v4151
      %v4467 = vsel %vm4465, %v4434, %v4153
      %v4468 = vsel %vm4465, %v4435, %v4155
      %v4469 = vsel %vm4465, %v4436, %v4157
      %v4470 = vsel %vm4465, %v4437, %v4159
      %v4471 = vsel %vm4465, %v4438, %v4161
      %v4472 = vsel %vm4465, %v4439, %v4163
      %v4473 = vsel %vm4465, %v4440, %v4165
      %v4474 = vsel %vm4465, %v4441, %v4167
      %v4475 = vsel %vm4465, %v4442, %v4169
      %v4476 = vsel %vm4465, %v4443, %v4171
      %v4477 = vsel %vm4465, %v4444, %v4173
      %v4478 = vsel %vm4465, %v4445, %v4175
      %v4479 = vsel %vm4465, %v4446, %v4177
      %v4480 = vsel %vm4465, %v4447, %v4179
      %v4481 = vsel %vm4465, %v4448, %v4181
      %v4482 = vsel %vm4465, %v4449, %v4183
      %v4483 = vsel %vm4465, %v4450, %v4185
      %v4484 = vsel %vm4465, %v4451, %v4187
      %v4485 = vsel %vm4465, %v4452, %v4189
      %v4486 = vsel %vm4465, %v4453, %v4191
      %v4487 = vsel %vm4465, %v4454, %v4193
      %v4488 = vsel %vm4465, %v4455, %v4195
      %v4489 = vsel %vm4465, %v4456, %v4197
      %v4490 = vsel %vm4465, %v4457, %v4199
      %v4491 = vsel %vm4465, %v4458, %v4201
      %v4492 = vsel %vm4465, %v4459, %v4203
      %v4493 = vsel %vm4465, %v4460, %v4205
      %v4494 = vsel %vm4465, %v4461, %v4207
      %v4495 = vsel %vm4465, %v4462, %v4209
      %v4496 = vsel %vm4465, %v4463, %v4211
      %v4497 = vsel %vm4465, %v4464, %v4211
      %v4498 = vpack.c.bf16 %v4467, %v4466
      %v4499 = vpack.c.bf16 %v3598, %v3596
      %v4500 = vpack.c.bf16 %v4469, %v4468
      %v4501 = vpack.c.bf16 %v3603, %v3601
      %v4502 = vpack.c.bf16 %v4471, %v4470
      %v4503 = vpack.c.bf16 %v3608, %v3606
      %v4504 = vpack.c.bf16 %v4473, %v4472
      %v4505 = vpack.c.bf16 %v3613, %v3611
      %v4506 = vpack.c.bf16 %v4475, %v4474
      %v4507 = vpack.c.bf16 %v3618, %v3616
      %v4508 = vpack.c.bf16 %v4477, %v4476
      %v4509 = vpack.c.bf16 %v3623, %v3621
      %v4510 = vpack.c.bf16 %v4479, %v4478
      %v4511 = vpack.c.bf16 %v3628, %v3626
      %v4512 = vpack.c.bf16 %v4481, %v4480
      %v4513 = vpack.c.bf16 %v3633, %v3631
      %v4514 = vpack.c.bf16 %v4483, %v4482
      %v4515 = vpack.c.bf16 %v3638, %v3636
      %v4516 = vpack.c.bf16 %v4485, %v4484
      %v4517 = vpack.c.bf16 %v3643, %v3641
      %v4518 = vpack.c.bf16 %v4487, %v4486
      %v4519 = vpack.c.bf16 %v3648, %v3646
      %v4520 = vpack.c.bf16 %v4489, %v4488
      %v4521 = vpack.c.bf16 %v3653, %v3651
      %v4522 = vpack.c.bf16 %v4491, %v4490
      %v4523 = vpack.c.bf16 %v3658, %v3656
      %v4524 = vpack.c.bf16 %v4493, %v4492
      %v4525 = vpack.c.bf16 %v3663, %v3661
      %v4526 = vpack.c.bf16 %v4495, %v4494
      %v4527 = vpack.c.bf16 %v3960, %v3958
      %v4528 = vpack.c.bf16 %v4497, %v4496
      %v4529 = vpack.c.bf16 %v522, %v522
      %v4530 = vld [vmem:[%s7] sm:$0xf]
      %v4531 = vld [vmem:[%s7 + $0x4] sm:$0xf]
      %v4532 = vld [vmem:[%s7 + $0x8] sm:$0xf]
      %v4533 = vld [vmem:[%s7 + $0xc] sm:$0xf]
      %v4534 = vld [vmem:[%s7 + $0x10] sm:$0xf]
      %v4535 = vld [vmem:[%s7 + $0x14] sm:$0xf]
      %v4536 = vld [vmem:[%s7 + $0x18] sm:$0xf]
      %v4537 = vld [vmem:[%s7 + $0x1c] sm:$0xf]
      %v4538 = vld [vmem:[%s7 + $0x20] sm:$0xf]
      %v4539 = vld [vmem:[%s7 + $0x24] sm:$0xf]
      %v4540 = vld [vmem:[%s7 + $0x28] sm:$0xf]
      %v4541 = vld [vmem:[%s7 + $0x2c] sm:$0xf]
      %v4542 = vld [vmem:[%s7 + $0x30] sm:$0xf]
      %v4543 = vld [vmem:[%s7 + $0x34] sm:$0xf]
      %v4544 = vld [vmem:[%s7 + $0x38] sm:$0xf]
      %v4545 = vld [vmem:[%s7 + $0x3c] sm:$0xf]
      %v4546 = vld [vmem:[%s7 + $0x40] sm:$0xf]
      %v4547 = vld [vmem:[%s7 + $0x44] sm:$0xf]
      %v4548 = vld [vmem:[%s8] sm:$0x1]
      %v4550 = vperm.slane %v4548, 0
      %v4570 = vunpack.c.l.b16 %v4530
      %v4571 = vunpack.c.l.b16 %v4531
      %v4572 = vunpack.c.l.b16 %v4532
      %v4573 = vunpack.c.l.b16 %v4533
      %v4574 = vunpack.c.l.b16 %v4534
      %v4575 = vunpack.c.l.b16 %v4535
      %v4576 = vunpack.c.l.b16 %v4536
      %v4577 = vunpack.c.l.b16 %v4537
      %v4578 = vunpack.c.l.b16 %v4538
      %v4579 = vunpack.c.l.b16 %v4539
      %v4580 = vunpack.c.l.b16 %v4540
      %v4581 = vunpack.c.l.b16 %v4541
      %v4582 = vunpack.c.l.b16 %v4542
      %v4583 = vunpack.c.l.b16 %v4543
      %v4584 = vunpack.c.l.b16 %v4544
      %v4585 = vunpack.c.l.b16 %v4545
      %v4586 = vunpack.c.l.b16 %v4546
      %v4587 = vunpack.c.l.b16 %v4547
      %v4588 = vpack.c.b16 %v4571, %v4570
      %v4589 = vpack.c.b16 %v4573, %v4572
      %v4590 = vpack.c.b16 %v4575, %v4574
      %v4591 = vpack.c.b16 %v4577, %v4576
      %v4592 = vpack.c.b16 %v4579, %v4578
      %v4593 = vpack.c.b16 %v4581, %v4580
      %v4594 = vpack.c.b16 %v4583, %v4582
      %v4595 = vpack.c.b16 %v4585, %v4584
      %v4596 = vpack.c.b16 %v4587, %v4586
      %v4607 = vsel %vm729, %v4499, 0
      %v4610 = vsel %vm729, %v4501, 0
      %v4613 = vsel %vm729, %v4503, 0
      %v4616 = vsel %vm729, %v4505, 0
      %v4619 = vsel %vm729, %v4507, 0
      %v4622 = vsel %vm729, %v4509, 0
      %v4625 = vsel %vm729, %v4511, 0
      %v4628 = vsel %vm729, %v4513, 0
      %v4631 = vsel %vm729, %v4515, 0
      %v4634 = vsel %vm729, %v4517, 0
      %v4637 = vsel %vm729, %v4519, 0
      %v4640 = vsel %vm729, %v4521, 0
      %v4643 = vsel %vm729, %v4523, 0
      %v4646 = vsel %vm729, %v4525, 0
      %v4649 = vsel %vm729, %v4527, 0
      %v4652 = vsel %vm729, %v4529, 0
      %4654 = vmatpush.bf16.msra.mxu0 %v4595
      %4655 = vmatpush.bf16.msra.mxu0 %v4594
      %4656 = vmatpush.bf16.msra.mxu0 %v4593
      %4657 = vmatpush.bf16.msra.mxu0 %v4592
      %4658 = vmatpush.bf16.msra.mxu0 %v4591
      %4659 = vmatpush.bf16.msra.mxu0 %v4590
      %4660 = vmatpush.bf16.msra.mxu0 %v4589
      %4661 = vmatpush.bf16.msra.mxu0 %v4588
      %4662 = vmatmul.bf16.gmra.mxu0 %v4498
      %v4663 = vpop.f32.mrf.mxu0
      %v4664 = vadd.f32 %v4550, %v4663
      %v4665 = vpop.f32.mrf.mxu0
      %v4666 = vadd.f32 %v4550, %v4665
      %4667 = vmatmul.bf16.gmra.mxu0 %v4500
      %v4668 = vpop.f32.mrf.mxu0
      %v4669 = vadd.f32 %v4550, %v4668
      %v4670 = vpop.f32.mrf.mxu0
      %v4671 = vadd.f32 %v4550, %v4670
      %4672 = vmatmul.bf16.gmra.mxu0 %v4502
      %v4673 = vpop.f32.mrf.mxu0
      %v4674 = vadd.f32 %v4550, %v4673
      %v4675 = vpop.f32.mrf.mxu0
      %v4676 = vadd.f32 %v4550, %v4675
      %4677 = vmatmul.bf16.gmra.mxu0 %v4504
      %v4678 = vpop.f32.mrf.mxu0
      %v4679 = vadd.f32 %v4550, %v4678
      %v4680 = vpop.f32.mrf.mxu0
      %v4681 = vadd.f32 %v4550, %v4680
      %4682 = vmatmul.bf16.gmra.mxu0 %v4506
      %v4683 = vpop.f32.mrf.mxu0
      %v4684 = vadd.f32 %v4550, %v4683
      %v4685 = vpop.f32.mrf.mxu0
      %v4686 = vadd.f32 %v4550, %v4685
      %4687 = vmatmul.bf16.gmra.mxu0 %v4508
      %v4688 = vpop.f32.mrf.mxu0
      %v4689 = vadd.f32 %v4550, %v4688
      %v4690 = vpop.f32.mrf.mxu0
      %v4691 = vadd.f32 %v4550, %v4690
      %4692 = vmatmul.bf16.gmra.mxu0 %v4510
      %v4693 = vpop.f32.mrf.mxu0
      %v4694 = vadd.f32 %v4550, %v4693
      %v4695 = vpop.f32.mrf.mxu0
      %v4696 = vadd.f32 %v4550, %v4695
      %4697 = vmatmul.bf16.gmra.mxu0 %v4512
      %v4698 = vpop.f32.mrf.mxu0
      %v4699 = vadd.f32 %v4550, %v4698
      %v4700 = vpop.f32.mrf.mxu0
      %v4701 = vadd.f32 %v4550, %v4700
      %4702 = vmatmul.bf16.gmra.mxu0 %v4514
      %v4703 = vpop.f32.mrf.mxu0
      %v4704 = vadd.f32 %v4550, %v4703
      %v4705 = vpop.f32.mrf.mxu0
      %v4706 = vadd.f32 %v4550, %v4705
      %4707 = vmatmul.bf16.gmra.mxu0 %v4516
      %v4708 = vpop.f32.mrf.mxu0
      %v4709 = vadd.f32 %v4550, %v4708
      %v4710 = vpop.f32.mrf.mxu0
      %v4711 = vadd.f32 %v4550, %v4710
      %4712 = vmatmul.bf16.gmra.mxu0 %v4518
      %v4713 = vpop.f32.mrf.mxu0
      %v4714 = vadd.f32 %v4550, %v4713
      %v4715 = vpop.f32.mrf.mxu0
      %v4716 = vadd.f32 %v4550, %v4715
      %4717 = vmatmul.bf16.gmra.mxu0 %v4520
      %v4718 = vpop.f32.mrf.mxu0
      %v4719 = vadd.f32 %v4550, %v4718
      %v4720 = vpop.f32.mrf.mxu0
      %v4721 = vadd.f32 %v4550, %v4720
      %4722 = vmatmul.bf16.gmra.mxu0 %v4522
      %v4723 = vpop.f32.mrf.mxu0
      %v4724 = vadd.f32 %v4550, %v4723
      %v4725 = vpop.f32.mrf.mxu0
      %v4726 = vadd.f32 %v4550, %v4725
      %4727 = vmatmul.bf16.gmra.mxu0 %v4524
      %v4728 = vpop.f32.mrf.mxu0
      %v4729 = vadd.f32 %v4550, %v4728
      %v4730 = vpop.f32.mrf.mxu0
      %v4731 = vadd.f32 %v4550, %v4730
      %4732 = vmatmul.bf16.gmra.mxu0 %v4526
      %v4733 = vpop.f32.mrf.mxu0
      %v4734 = vadd.f32 %v4550, %v4733
      %v4735 = vpop.f32.mrf.mxu0
      %v4736 = vadd.f32 %v4550, %v4735
      %4737 = vmatmul.bf16.gmra.mxu0 %v4528
      %v4738 = vpop.f32.mrf.mxu0
      %v4739 = vadd.f32 %v4550, %v4738
      %v4740 = vpop.f32.mrf.mxu0
      %v4741 = vadd.f32 %v4550, %v4740
      %4742 = vdwg.mxu0
      %4743 = vmatpush.bf16.msra.mxu0 0
      %4744 = vmatpush.bf16.msra.mxu0 0
      %4745 = vmatpush.bf16.msra.mxu0 0
      %4746 = vmatpush.bf16.msra.mxu0 0
      %4747 = vmatpush.bf16.msra.mxu0 0
      %4748 = vmatpush.bf16.msra.mxu0 0
      %4749 = vmatpush.bf16.msra.mxu0 0
      %4750 = vmatpush.bf16.msra.mxu0 %v4596
      %4751 = vmatmul.bf16.gmra.mxu0 %v4607
      %v4752 = vpop.f32.mrf.mxu0
      %v4753 = vadd.f32 %v4664, %v4752
      %v4754 = vpop.f32.mrf.mxu0
      %v4755 = vadd.f32 %v4666, %v4754
      %4756 = vmatmul.bf16.gmra.mxu0 %v4610
      %v4757 = vpop.f32.mrf.mxu0
      %v4758 = vadd.f32 %v4669, %v4757
      %v4759 = vpop.f32.mrf.mxu0
      %v4760 = vadd.f32 %v4671, %v4759
      %4761 = vmatmul.bf16.gmra.mxu0 %v4613
      %v4762 = vpop.f32.mrf.mxu0
      %v4763 = vadd.f32 %v4674, %v4762
      %v4764 = vpop.f32.mrf.mxu0
      %v4765 = vadd.f32 %v4676, %v4764
      %4766 = vmatmul.bf16.gmra.mxu0 %v4616
      %v4767 = vpop.f32.mrf.mxu0
      %v4768 = vadd.f32 %v4679, %v4767
      %v4769 = vpop.f32.mrf.mxu0
      %v4770 = vadd.f32 %v4681, %v4769
      %4771 = vmatmul.bf16.gmra.mxu0 %v4619
      %v4772 = vpop.f32.mrf.mxu0
      %v4773 = vadd.f32 %v4684, %v4772
      %v4774 = vpop.f32.mrf.mxu0
      %v4775 = vadd.f32 %v4686, %v4774
      %4776 = vmatmul.bf16.gmra.mxu0 %v4622
      %v4777 = vpop.f32.mrf.mxu0
      %v4778 = vadd.f32 %v4689, %v4777
      %v4779 = vpop.f32.mrf.mxu0
      %v4780 = vadd.f32 %v4691, %v4779
      %4781 = vmatmul.bf16.gmra.mxu0 %v4625
      %v4782 = vpop.f32.mrf.mxu0
      %v4783 = vadd.f32 %v4694, %v4782
      %v4784 = vpop.f32.mrf.mxu0
      %v4785 = vadd.f32 %v4696, %v4784
      %4786 = vmatmul.bf16.gmra.mxu0 %v4628
      %v4787 = vpop.f32.mrf.mxu0
      %v4788 = vadd.f32 %v4699, %v4787
      %v4789 = vpop.f32.mrf.mxu0
      %v4790 = vadd.f32 %v4701, %v4789
      %4791 = vmatmul.bf16.gmra.mxu0 %v4631
      %v4792 = vpop.f32.mrf.mxu0
      %v4793 = vadd.f32 %v4704, %v4792
      %v4794 = vpop.f32.mrf.mxu0
      %v4795 = vadd.f32 %v4706, %v4794
      %4796 = vmatmul.bf16.gmra.mxu0 %v4634
      %v4797 = vpop.f32.mrf.mxu0
      %v4798 = vadd.f32 %v4709, %v4797
      %v4799 = vpop.f32.mrf.mxu0
      %v4800 = vadd.f32 %v4711, %v4799
      %4801 = vmatmul.bf16.gmra.mxu0 %v4637
      %v4802 = vpop.f32.mrf.mxu0
      %v4803 = vadd.f32 %v4714, %v4802
      %v4804 = vpop.f32.mrf.mxu0
      %v4805 = vadd.f32 %v4716, %v4804
      %4806 = vmatmul.bf16.gmra.mxu0 %v4640
      %v4807 = vpop.f32.mrf.mxu0
      %v4808 = vadd.f32 %v4719, %v4807
      %v4809 = vpop.f32.mrf.mxu0
      %v4810 = vadd.f32 %v4721, %v4809
      %4811 = vmatmul.bf16.gmra.mxu0 %v4643
      %v4812 = vpop.f32.mrf.mxu0
      %v4813 = vadd.f32 %v4724, %v4812
      %v4814 = vpop.f32.mrf.mxu0
      %v4815 = vadd.f32 %v4726, %v4814
      %4816 = vmatmul.bf16.gmra.mxu0 %v4646
      %v4817 = vpop.f32.mrf.mxu0
      %v4818 = vadd.f32 %v4729, %v4817
      %v4819 = vpop.f32.mrf.mxu0
      %v4820 = vadd.f32 %v4731, %v4819
      %4821 = vmatmul.bf16.gmra.mxu0 %v4649
      %v4822 = vpop.f32.mrf.mxu0
      %v4823 = vadd.f32 %v4734, %v4822
      %v4824 = vpop.f32.mrf.mxu0
      %v4825 = vadd.f32 %v4736, %v4824
      %4826 = vmatmul.bf16.gmra.mxu0 %v4652
      %v4827 = vpop.f32.mrf.mxu0
      %v4828 = vadd.f32 %v4739, %v4827
      %v4829 = vpop.f32.mrf.mxu0
      %v4830 = vadd.f32 %v4741, %v4829
      %4831 = vdwg.mxu0
      %vm4832 = vcmp.ge.f32.partialorder %v4753, 0.0
      %vm4833 = vcmp.ge.f32.partialorder %v4755, 0.0
      %vm4834 = vcmp.ge.f32.partialorder %v4758, 0.0
      %vm4835 = vcmp.ge.f32.partialorder %v4760, 0.0
      %vm4836 = vcmp.ge.f32.partialorder %v4763, 0.0
      %vm4837 = vcmp.ge.f32.partialorder %v4765, 0.0
      %vm4838 = vcmp.ge.f32.partialorder %v4768, 0.0
      %vm4839 = vcmp.ge.f32.partialorder %v4770, 0.0
      %vm4840 = vcmp.ge.f32.partialorder %v4773, 0.0
      %vm4841 = vcmp.ge.f32.partialorder %v4775, 0.0
      %vm4842 = vcmp.ge.f32.partialorder %v4778, 0.0
      %vm4843 = vcmp.ge.f32.partialorder %v4780, 0.0
      %vm4844 = vcmp.ge.f32.partialorder %v4783, 0.0
      %vm4845 = vcmp.ge.f32.partialorder %v4785, 0.0
      %vm4846 = vcmp.ge.f32.partialorder %v4788, 0.0
      %vm4847 = vcmp.ge.f32.partialorder %v4790, 0.0
      %vm4848 = vcmp.ge.f32.partialorder %v4793, 0.0
      %vm4849 = vcmp.ge.f32.partialorder %v4795, 0.0
      %vm4850 = vcmp.ge.f32.partialorder %v4798, 0.0
      %vm4851 = vcmp.ge.f32.partialorder %v4800, 0.0
      %vm4852 = vcmp.ge.f32.partialorder %v4803, 0.0
      %vm4853 = vcmp.ge.f32.partialorder %v4805, 0.0
      %vm4854 = vcmp.ge.f32.partialorder %v4808, 0.0
      %vm4855 = vcmp.ge.f32.partialorder %v4810, 0.0
      %vm4856 = vcmp.ge.f32.partialorder %v4813, 0.0
      %vm4857 = vcmp.ge.f32.partialorder %v4815, 0.0
      %vm4858 = vcmp.ge.f32.partialorder %v4818, 0.0
      %vm4859 = vcmp.ge.f32.partialorder %v4820, 0.0
      %vm4860 = vcmp.ge.f32.partialorder %v4823, 0.0
      %vm4861 = vcmp.ge.f32.partialorder %v4825, 0.0
      %vm4862 = vcmp.ge.f32.partialorder %v4828, 0.0
      %vm4863 = vcmp.ge.f32.partialorder %v4830, 0.0
      %v4864 = vmul.f32 %v4753, 0.1
      %v4865 = vmul.f32 %v4755, 0.1
      %v4866 = vmul.f32 %v4758, 0.1
      %v4867 = vmul.f32 %v4760, 0.1
      %v4868 = vmul.f32 %v4763, 0.1
      %v4869 = vmul.f32 %v4765, 0.1
      %v4870 = vmul.f32 %v4768, 0.1
      %v4871 = vmul.f32 %v4770, 0.1
      %v4872 = vmul.f32 %v4773, 0.1
      %v4873 = vmul.f32 %v4775, 0.1
      %v4874 = vmul.f32 %v4778, 0.1
      %v4875 = vmul.f32 %v4780, 0.1
      %v4876 = vmul.f32 %v4783, 0.1
      %v4877 = vmul.f32 %v4785, 0.1
      %v4878 = vmul.f32 %v4788, 0.1
      %v4879 = vmul.f32 %v4790, 0.1
      %v4880 = vmul.f32 %v4793, 0.1
      %v4881 = vmul.f32 %v4795, 0.1
      %v4882 = vmul.f32 %v4798, 0.1
      %v4883 = vmul.f32 %v4800, 0.1
      %v4884 = vmul.f32 %v4803, 0.1
      %v4885 = vmul.f32 %v4805, 0.1
      %v4886 = vmul.f32 %v4808, 0.1
      %v4887 = vmul.f32 %v4810, 0.1
      %v4888 = vmul.f32 %v4813, 0.1
      %v4889 = vmul.f32 %v4815, 0.1
      %v4890 = vmul.f32 %v4818, 0.1
      %v4891 = vmul.f32 %v4820, 0.1
      %v4892 = vmul.f32 %v4823, 0.1
      %v4893 = vmul.f32 %v4825, 0.1
      %v4894 = vmul.f32 %v4828, 0.1
      %v4895 = vmul.f32 %v4830, 0.1
      %v4896 = vsel %vm4832, %v4753, %v4864
      %v4897 = vsel %vm4833, %v4755, %v4865
      %v4898 = vsel %vm4834, %v4758, %v4866
      %v4899 = vsel %vm4835, %v4760, %v4867
      %v4900 = vsel %vm4836, %v4763, %v4868
      %v4901 = vsel %vm4837, %v4765, %v4869
      %v4902 = vsel %vm4838, %v4768, %v4870
      %v4903 = vsel %vm4839, %v4770, %v4871
      %v4904 = vsel %vm4840, %v4773, %v4872
      %v4905 = vsel %vm4841, %v4775, %v4873
      %v4906 = vsel %vm4842, %v4778, %v4874
      %v4907 = vsel %vm4843, %v4780, %v4875
      %v4908 = vsel %vm4844, %v4783, %v4876
      %v4909 = vsel %vm4845, %v4785, %v4877
      %v4910 = vsel %vm4846, %v4788, %v4878
      %v4911 = vsel %vm4847, %v4790, %v4879
      %v4912 = vsel %vm4848, %v4793, %v4880
      %v4913 = vsel %vm4849, %v4795, %v4881
      %v4914 = vsel %vm4850, %v4798, %v4882
      %v4915 = vsel %vm4851, %v4800, %v4883
      %v4916 = vsel %vm4852, %v4803, %v4884
      %v4917 = vsel %vm4853, %v4805, %v4885
      %v4918 = vsel %vm4854, %v4808, %v4886
      %v4919 = vsel %vm4855, %v4810, %v4887
      %v4920 = vsel %vm4856, %v4813, %v4888
      %v4921 = vsel %vm4857, %v4815, %v4889
      %v4922 = vsel %vm4858, %v4818, %v4890
      %v4923 = vsel %vm4859, %v4820, %v4891
      %v4924 = vsel %vm4860, %v4823, %v4892
      %v4925 = vsel %vm4861, %v4825, %v4893
      %v4926 = vsel %vm4862, %v4828, %v4894
      %v4927 = vsel %vm4863, %v4830, %v4895
      %v4960 = vrot.slane %v4896, 7
      %v4961 = vrot.slane %v4897, 7
      %v4962 = vsel %vm440, %v4960, %v4961
      %v4963 = vrot.slane %v4898, 7
      %v4964 = vrot.slane %v4899, 7
      %v4965 = vsel %vm440, %v4963, %v4964
      %v4966 = vrot.slane %v4900, 7
      %v4967 = vrot.slane %v4901, 7
      %v4968 = vsel %vm440, %v4966, %v4967
      %v4969 = vrot.slane %v4902, 7
      %v4970 = vrot.slane %v4903, 7
      %v4971 = vsel %vm440, %v4969, %v4970
      %v4972 = vrot.slane %v4904, 7
      %v4973 = vrot.slane %v4905, 7
      %v4974 = vsel %vm440, %v4972, %v4973
      %v4975 = vrot.slane %v4906, 7
      %v4976 = vrot.slane %v4907, 7
      %v4977 = vsel %vm440, %v4975, %v4976
      %v4978 = vrot.slane %v4908, 7
      %v4979 = vrot.slane %v4909, 7
      %v4980 = vsel %vm440, %v4978, %v4979
      %v4981 = vrot.slane %v4910, 7
      %v4982 = vrot.slane %v4911, 7
      %v4983 = vsel %vm440, %v4981, %v4982
      %v4984 = vrot.slane %v4912, 7
      %v4985 = vrot.slane %v4913, 7
      %v4986 = vsel %vm440, %v4984, %v4985
      %v4987 = vrot.slane %v4914, 7
      %v4988 = vrot.slane %v4915, 7
      %v4989 = vsel %vm440, %v4987, %v4988
      %v4990 = vrot.slane %v4916, 7
      %v4991 = vrot.slane %v4917, 7
      %v4992 = vsel %vm440, %v4990, %v4991
      %v4993 = vrot.slane %v4918, 7
      %v4994 = vrot.slane %v4919, 7
      %v4995 = vsel %vm440, %v4993, %v4994
      %v4996 = vrot.slane %v4920, 7
      %v4997 = vrot.slane %v4921, 7
      %v4998 = vsel %vm440, %v4996, %v4997
      %v4999 = vrot.slane %v4922, 7
      %v5000 = vrot.slane %v4923, 7
      %v5001 = vsel %vm440, %v4999, %v5000
      %v5002 = vrot.slane %v4924, 7
      %v5003 = vrot.slane %v4925, 7
      %v5004 = vsel %vm440, %v5002, %v5003
      %v5005 = vrot.slane %v4926, 7
      %v5006 = vrot.slane %v4927, 7
      %v5007 = vsel %vm440, %v5005, %v5006
      %v5055 = vsel %vm440, 0.0, %v4960
      %v5056 = vsel %vm440, 0.0, %v4963
      %v5057 = vsel %vm440, 0.0, %v4966
      %v5058 = vsel %vm440, 0.0, %v4969
      %v5059 = vsel %vm440, 0.0, %v4972
      %v5060 = vsel %vm440, 0.0, %v4975
      %v5061 = vsel %vm440, 0.0, %v4978
      %v5062 = vsel %vm440, 0.0, %v4981
      %v5063 = vsel %vm440, 0.0, %v4984
      %v5064 = vsel %vm440, 0.0, %v4987
      %v5065 = vsel %vm440, 0.0, %v4990
      %v5066 = vsel %vm440, 0.0, %v4993
      %v5067 = vsel %vm440, 0.0, %v4996
      %v5068 = vsel %vm440, 0.0, %v4999
      %v5069 = vsel %vm440, 0.0, %v5002
      %v5070 = vsel %vm440, 0.0, %v5005
      %v5071 = vsel %vm440, %v4961, 0.0
      %v5072 = vsel %vm440, %v4964, 0.0
      %v5073 = vsel %vm440, %v4967, 0.0
      %v5074 = vsel %vm440, %v4970, 0.0
      %v5075 = vsel %vm440, %v4973, 0.0
      %v5076 = vsel %vm440, %v4976, 0.0
      %v5077 = vsel %vm440, %v4979, 0.0
      %v5078 = vsel %vm440, %v4982, 0.0
      %v5079 = vsel %vm440, %v4985, 0.0
      %v5080 = vsel %vm440, %v4988, 0.0
      %v5081 = vsel %vm440, %v4991, 0.0
      %v5082 = vsel %vm440, %v4994, 0.0
      %v5083 = vsel %vm440, %v4997, 0.0
      %v5084 = vsel %vm440, %v5000, 0.0
      %v5085 = vsel %vm440, %v5003, 0.0
      %v5086 = vsel %vm440, %v5006, 0.0
      %v5117 = vrot.slane %v5055, 1
      %v5118 = vrot.slane %v4962, 1
      %v5119 = vsel %vm472, %v5117, %v5118
      %v5120 = vrot.slane %v5071, 1
      %v5121 = vsel %vm472, %v5118, %v5120
      %v5122 = vrot.slane %v5056, 1
      %v5123 = vrot.slane %v4965, 1
      %v5124 = vsel %vm472, %v5122, %v5123
      %v5125 = vrot.slane %v5072, 1
      %v5126 = vsel %vm472, %v5123, %v5125
      %v5127 = vrot.slane %v5057, 1
      %v5128 = vrot.slane %v4968, 1
      %v5129 = vsel %vm472, %v5127, %v5128
      %v5130 = vrot.slane %v5073, 1
      %v5131 = vsel %vm472, %v5128, %v5130
      %v5132 = vrot.slane %v5058, 1
      %v5133 = vrot.slane %v4971, 1
      %v5134 = vsel %vm472, %v5132, %v5133
      %v5135 = vrot.slane %v5074, 1
      %v5136 = vsel %vm472, %v5133, %v5135
      %v5137 = vrot.slane %v5059, 1
      %v5138 = vrot.slane %v4974, 1
      %v5139 = vsel %vm472, %v5137, %v5138
      %v5140 = vrot.slane %v5075, 1
      %v5141 = vsel %vm472, %v5138, %v5140
      %v5142 = vrot.slane %v5060, 1
      %v5143 = vrot.slane %v4977, 1
      %v5144 = vsel %vm472, %v5142, %v5143
      %v5145 = vrot.slane %v5076, 1
      %v5146 = vsel %vm472, %v5143, %v5145
      %v5147 = vrot.slane %v5061, 1
      %v5148 = vrot.slane %v4980, 1
      %v5149 = vsel %vm472, %v5147, %v5148
      %v5150 = vrot.slane %v5077, 1
      %v5151 = vsel %vm472, %v5148, %v5150
      %v5152 = vrot.slane %v5062, 1
      %v5153 = vrot.slane %v4983, 1
      %v5154 = vsel %vm472, %v5152, %v5153
      %v5155 = vrot.slane %v5078, 1
      %v5156 = vsel %vm472, %v5153, %v5155
      %v5157 = vrot.slane %v5063, 1
      %v5158 = vrot.slane %v4986, 1
      %v5159 = vsel %vm472, %v5157, %v5158
      %v5160 = vrot.slane %v5079, 1
      %v5161 = vsel %vm472, %v5158, %v5160
      %v5162 = vrot.slane %v5064, 1
      %v5163 = vrot.slane %v4989, 1
      %v5164 = vsel %vm472, %v5162, %v5163
      %v5165 = vrot.slane %v5080, 1
      %v5166 = vsel %vm472, %v5163, %v5165
      %v5167 = vrot.slane %v5065, 1
      %v5168 = vrot.slane %v4992, 1
      %v5169 = vsel %vm472, %v5167, %v5168
      %v5170 = vrot.slane %v5081, 1
      %v5171 = vsel %vm472, %v5168, %v5170
      %v5172 = vrot.slane %v5066, 1
      %v5173 = vrot.slane %v4995, 1
      %v5174 = vsel %vm472, %v5172, %v5173
      %v5175 = vrot.slane %v5082, 1
      %v5176 = vsel %vm472, %v5173, %v5175
      %v5177 = vrot.slane %v5067, 1
      %v5178 = vrot.slane %v4998, 1
      %v5179 = vsel %vm472, %v5177, %v5178
      %v5180 = vrot.slane %v5083, 1
      %v5181 = vsel %vm472, %v5178, %v5180
      %v5182 = vrot.slane %v5068, 1
      %v5183 = vrot.slane %v5001, 1
      %v5184 = vsel %vm472, %v5182, %v5183
      %v5185 = vrot.slane %v5084, 1
      %v5186 = vsel %vm472, %v5183, %v5185
      %v5187 = vrot.slane %v5069, 1
      %v5188 = vrot.slane %v5004, 1
      %v5189 = vsel %vm472, %v5187, %v5188
      %v5190 = vrot.slane %v5085, 1
      %v5191 = vsel %vm472, %v5188, %v5190
      %5192 = vrot.lane.b32.xlu0 %v5119, 16
      %v5193 = vpop.permute.xlu0 %5192
      %5194 = vrot.lane.b32.xlu0 %v5121, 16
      %v5195 = vpop.permute.xlu0 %5194
      %5196 = vrot.lane.b32.xlu0 %v5124, 16
      %v5197 = vpop.permute.xlu0 %5196
      %5198 = vrot.lane.b32.xlu0 %v5126, 16
      %v5199 = vpop.permute.xlu0 %5198
      %5200 = vrot.lane.b32.xlu0 %v5129, 16
      %v5201 = vpop.permute.xlu0 %5200
      %5202 = vrot.lane.b32.xlu0 %v5131, 16
      %v5203 = vpop.permute.xlu0 %5202
      %5204 = vrot.lane.b32.xlu0 %v5134, 16
      %v5205 = vpop.permute.xlu0 %5204
      %5206 = vrot.lane.b32.xlu0 %v5136, 16
      %v5207 = vpop.permute.xlu0 %5206
      %5208 = vrot.lane.b32.xlu0 %v5139, 16
      %v5209 = vpop.permute.xlu0 %5208
      %5210 = vrot.lane.b32.xlu0 %v5141, 16
      %v5211 = vpop.permute.xlu0 %5210
      %5212 = vrot.lane.b32.xlu0 %v5144, 16
      %v5213 = vpop.permute.xlu0 %5212
      %5214 = vrot.lane.b32.xlu0 %v5146, 16
      %v5215 = vpop.permute.xlu0 %5214
      %5216 = vrot.lane.b32.xlu0 %v5149, 16
      %v5217 = vpop.permute.xlu0 %5216
      %5218 = vrot.lane.b32.xlu0 %v5151, 16
      %v5219 = vpop.permute.xlu0 %5218
      %5220 = vrot.lane.b32.xlu0 %v5154, 16
      %v5221 = vpop.permute.xlu0 %5220
      %5222 = vrot.lane.b32.xlu0 %v5156, 16
      %v5223 = vpop.permute.xlu0 %5222
      %5224 = vrot.lane.b32.xlu0 %v5159, 16
      %v5225 = vpop.permute.xlu0 %5224
      %5226 = vrot.lane.b32.xlu0 %v5161, 16
      %v5227 = vpop.permute.xlu0 %5226
      %5228 = vrot.lane.b32.xlu0 %v5164, 16
      %v5229 = vpop.permute.xlu0 %5228
      %5230 = vrot.lane.b32.xlu0 %v5166, 16
      %v5231 = vpop.permute.xlu0 %5230
      %5232 = vrot.lane.b32.xlu0 %v5169, 16
      %v5233 = vpop.permute.xlu0 %5232
      %5234 = vrot.lane.b32.xlu0 %v5171, 16
      %v5235 = vpop.permute.xlu0 %5234
      %5236 = vrot.lane.b32.xlu0 %v5174, 16
      %v5237 = vpop.permute.xlu0 %5236
      %5238 = vrot.lane.b32.xlu0 %v5176, 16
      %v5239 = vpop.permute.xlu0 %5238
      %5240 = vrot.lane.b32.xlu0 %v5179, 16
      %v5241 = vpop.permute.xlu0 %5240
      %5242 = vrot.lane.b32.xlu0 %v5181, 16
      %v5243 = vpop.permute.xlu0 %5242
      %5244 = vrot.lane.b32.xlu0 %v5184, 16
      %v5245 = vpop.permute.xlu0 %5244
      %5246 = vrot.lane.b32.xlu0 %v5186, 16
      %v5247 = vpop.permute.xlu0 %5246
      %5248 = vrot.lane.b32.xlu0 %v5189, 16
      %v5249 = vpop.permute.xlu0 %5248
      %5250 = vrot.lane.b32.xlu0 %v5191, 16
      %v5251 = vpop.permute.xlu0 %5250
      %v5282 = vrot.slane %v5055, 2
      %v5283 = vrot.slane %v4962, 2
      %v5284 = vsel %vm520, %v5282, %v5283
      %v5285 = vrot.slane %v5071, 2
      %v5286 = vsel %vm520, %v5283, %v5285
      %v5287 = vrot.slane %v5056, 2
      %v5288 = vrot.slane %v4965, 2
      %v5289 = vsel %vm520, %v5287, %v5288
      %v5290 = vrot.slane %v5072, 2
      %v5291 = vsel %vm520, %v5288, %v5290
      %v5292 = vrot.slane %v5057, 2
      %v5293 = vrot.slane %v4968, 2
      %v5294 = vsel %vm520, %v5292, %v5293
      %v5295 = vrot.slane %v5073, 2
      %v5296 = vsel %vm520, %v5293, %v5295
      %v5297 = vrot.slane %v5058, 2
      %v5298 = vrot.slane %v4971, 2
      %v5299 = vsel %vm520, %v5297, %v5298
      %v5300 = vrot.slane %v5074, 2
      %v5301 = vsel %vm520, %v5298, %v5300
      %v5302 = vrot.slane %v5059, 2
      %v5303 = vrot.slane %v4974, 2
      %v5304 = vsel %vm520, %v5302, %v5303
      %v5305 = vrot.slane %v5075, 2
      %v5306 = vsel %vm520, %v5303, %v5305
      %v5307 = vrot.slane %v5060, 2
      %v5308 = vrot.slane %v4977, 2
      %v5309 = vsel %vm520, %v5307, %v5308
      %v5310 = vrot.slane %v5076, 2
      %v5311 = vsel %vm520, %v5308, %v5310
      %v5312 = vrot.slane %v5061, 2
      %v5313 = vrot.slane %v4980, 2
      %v5314 = vsel %vm520, %v5312, %v5313
      %v5315 = vrot.slane %v5077, 2
      %v5316 = vsel %vm520, %v5313, %v5315
      %v5317 = vrot.slane %v5062, 2
      %v5318 = vrot.slane %v4983, 2
      %v5319 = vsel %vm520, %v5317, %v5318
      %v5320 = vrot.slane %v5078, 2
      %v5321 = vsel %vm520, %v5318, %v5320
      %v5322 = vrot.slane %v5063, 2
      %v5323 = vrot.slane %v4986, 2
      %v5324 = vsel %vm520, %v5322, %v5323
      %v5325 = vrot.slane %v5079, 2
      %v5326 = vsel %vm520, %v5323, %v5325
      %v5327 = vrot.slane %v5064, 2
      %v5328 = vrot.slane %v4989, 2
      %v5329 = vsel %vm520, %v5327, %v5328
      %v5330 = vrot.slane %v5080, 2
      %v5331 = vsel %vm520, %v5328, %v5330
      %v5332 = vrot.slane %v5065, 2
      %v5333 = vrot.slane %v4992, 2
      %v5334 = vsel %vm520, %v5332, %v5333
      %v5335 = vrot.slane %v5081, 2
      %v5336 = vsel %vm520, %v5333, %v5335
      %v5337 = vrot.slane %v5066, 2
      %v5338 = vrot.slane %v4995, 2
      %v5339 = vsel %vm520, %v5337, %v5338
      %v5340 = vrot.slane %v5082, 2
      %v5341 = vsel %vm520, %v5338, %v5340
      %v5342 = vrot.slane %v5067, 2
      %v5343 = vrot.slane %v4998, 2
      %v5344 = vsel %vm520, %v5342, %v5343
      %v5345 = vrot.slane %v5083, 2
      %v5346 = vsel %vm520, %v5343, %v5345
      %v5347 = vrot.slane %v5068, 2
      %v5348 = vrot.slane %v5001, 2
      %v5349 = vsel %vm520, %v5347, %v5348
      %v5350 = vrot.slane %v5084, 2
      %v5351 = vsel %vm520, %v5348, %v5350
      %v5352 = vrot.slane %v5069, 2
      %v5353 = vrot.slane %v5004, 2
      %v5354 = vsel %vm520, %v5352, %v5353
      %v5355 = vrot.slane %v5085, 2
      %v5356 = vsel %vm520, %v5353, %v5355
      %5357 = vrot.lane.b32.xlu0 %v5284, 32
      %v5358 = vpop.permute.xlu0 %5357
      %5359 = vrot.lane.b32.xlu0 %v5286, 32
      %v5360 = vpop.permute.xlu0 %5359
      %5361 = vrot.lane.b32.xlu0 %v5289, 32
      %v5362 = vpop.permute.xlu0 %5361
      %5363 = vrot.lane.b32.xlu0 %v5291, 32
      %v5364 = vpop.permute.xlu0 %5363
      %5365 = vrot.lane.b32.xlu0 %v5294, 32
      %v5366 = vpop.permute.xlu0 %5365
      %5367 = vrot.lane.b32.xlu0 %v5296, 32
      %v5368 = vpop.permute.xlu0 %5367
      %5369 = vrot.lane.b32.xlu0 %v5299, 32
      %v5370 = vpop.permute.xlu0 %5369
      %5371 = vrot.lane.b32.xlu0 %v5301, 32
      %v5372 = vpop.permute.xlu0 %5371
      %5373 = vrot.lane.b32.xlu0 %v5304, 32
      %v5374 = vpop.permute.xlu0 %5373
      %5375 = vrot.lane.b32.xlu0 %v5306, 32
      %v5376 = vpop.permute.xlu0 %5375
      %5377 = vrot.lane.b32.xlu0 %v5309, 32
      %v5378 = vpop.permute.xlu0 %5377
      %5379 = vrot.lane.b32.xlu0 %v5311, 32
      %v5380 = vpop.permute.xlu0 %5379
      %5381 = vrot.lane.b32.xlu0 %v5314, 32
      %v5382 = vpop.permute.xlu0 %5381
      %5383 = vrot.lane.b32.xlu0 %v5316, 32
      %v5384 = vpop.permute.xlu0 %5383
      %5385 = vrot.lane.b32.xlu0 %v5319, 32
      %v5386 = vpop.permute.xlu0 %5385
      %5387 = vrot.lane.b32.xlu0 %v5321, 32
      %v5388 = vpop.permute.xlu0 %5387
      %5389 = vrot.lane.b32.xlu0 %v5324, 32
      %v5390 = vpop.permute.xlu0 %5389
      %5391 = vrot.lane.b32.xlu0 %v5326, 32
      %v5392 = vpop.permute.xlu0 %5391
      %5393 = vrot.lane.b32.xlu0 %v5329, 32
      %v5394 = vpop.permute.xlu0 %5393
      %5395 = vrot.lane.b32.xlu0 %v5331, 32
      %v5396 = vpop.permute.xlu0 %5395
      %5397 = vrot.lane.b32.xlu0 %v5334, 32
      %v5398 = vpop.permute.xlu0 %5397
      %5399 = vrot.lane.b32.xlu0 %v5336, 32
      %v5400 = vpop.permute.xlu0 %5399
      %5401 = vrot.lane.b32.xlu0 %v5339, 32
      %v5402 = vpop.permute.xlu0 %5401
      %5403 = vrot.lane.b32.xlu0 %v5341, 32
      %v5404 = vpop.permute.xlu0 %5403
      %5405 = vrot.lane.b32.xlu0 %v5344, 32
      %v5406 = vpop.permute.xlu0 %5405
      %5407 = vrot.lane.b32.xlu0 %v5346, 32
      %v5408 = vpop.permute.xlu0 %5407
      %5409 = vrot.lane.b32.xlu0 %v5349, 32
      %v5410 = vpop.permute.xlu0 %5409
      %5411 = vrot.lane.b32.xlu0 %v5351, 32
      %v5412 = vpop.permute.xlu0 %5411
      %5413 = vrot.lane.b32.xlu0 %v5354, 32
      %v5414 = vpop.permute.xlu0 %5413
      %5415 = vrot.lane.b32.xlu0 %v5356, 32
      %v5416 = vpop.permute.xlu0 %5415
      %5448 = vrot.lane.b32.xlu0 %v5055, 48
      %v5449 = vpop.permute.xlu0 %5448
      %5450 = vrot.lane.b32.xlu0 %v4962, 48
      %v5451 = vpop.permute.xlu0 %5450
      %5452 = vrot.lane.b32.xlu0 %v5056, 48
      %v5453 = vpop.permute.xlu0 %5452
      %5454 = vrot.lane.b32.xlu0 %v4965, 48
      %v5455 = vpop.permute.xlu0 %5454
      %5456 = vrot.lane.b32.xlu0 %v5057, 48
      %v5457 = vpop.permute.xlu0 %5456
      %5458 = vrot.lane.b32.xlu0 %v4968, 48
      %v5459 = vpop.permute.xlu0 %5458
      %5460 = vrot.lane.b32.xlu0 %v5058, 48
      %v5461 = vpop.permute.xlu0 %5460
      %5462 = vrot.lane.b32.xlu0 %v4971, 48
      %v5463 = vpop.permute.xlu0 %5462
      %5464 = vrot.lane.b32.xlu0 %v5059, 48
      %v5465 = vpop.permute.xlu0 %5464
      %5466 = vrot.lane.b32.xlu0 %v4974, 48
      %v5467 = vpop.permute.xlu0 %5466
      %5468 = vrot.lane.b32.xlu0 %v5060, 48
      %v5469 = vpop.permute.xlu0 %5468
      %5470 = vrot.lane.b32.xlu0 %v4977, 48
      %v5471 = vpop.permute.xlu0 %5470
      %5472 = vrot.lane.b32.xlu0 %v5061, 48
      %v5473 = vpop.permute.xlu0 %5472
      %5474 = vrot.lane.b32.xlu0 %v4980, 48
      %v5475 = vpop.permute.xlu0 %5474
      %5476 = vrot.lane.b32.xlu0 %v5062, 48
      %v5477 = vpop.permute.xlu0 %5476
      %5478 = vrot.lane.b32.xlu0 %v4983, 48
      %v5479 = vpop.permute.xlu0 %5478
      %5480 = vrot.lane.b32.xlu0 %v5063, 48
      %v5481 = vpop.permute.xlu0 %5480
      %5482 = vrot.lane.b32.xlu0 %v4986, 48
      %v5483 = vpop.permute.xlu0 %5482
      %5484 = vrot.lane.b32.xlu0 %v5064, 48
      %v5485 = vpop.permute.xlu0 %5484
      %5486 = vrot.lane.b32.xlu0 %v4989, 48
      %v5487 = vpop.permute.xlu0 %5486
      %5488 = vrot.lane.b32.xlu0 %v5065, 48
      %v5489 = vpop.permute.xlu0 %5488
      %5490 = vrot.lane.b32.xlu0 %v4992, 48
      %v5491 = vpop.permute.xlu0 %5490
      %5492 = vrot.lane.b32.xlu0 %v5066, 48
      %v5493 = vpop.permute.xlu0 %5492
      %5494 = vrot.lane.b32.xlu0 %v4995, 48
      %v5495 = vpop.permute.xlu0 %5494
      %5496 = vrot.lane.b32.xlu0 %v5067, 48
      %v5497 = vpop.permute.xlu0 %5496
      %5498 = vrot.lane.b32.xlu0 %v4998, 48
      %v5499 = vpop.permute.xlu0 %5498
      %5500 = vrot.lane.b32.xlu0 %v5068, 48
      %v5501 = vpop.permute.xlu0 %5500
      %5502 = vrot.lane.b32.xlu0 %v5001, 48
      %v5503 = vpop.permute.xlu0 %5502
      %5504 = vrot.lane.b32.xlu0 %v5069, 48
      %v5505 = vpop.permute.xlu0 %5504
      %5506 = vrot.lane.b32.xlu0 %v5004, 48
      %v5507 = vpop.permute.xlu0 %5506
      %5508 = vrot.lane.b32.xlu0 %v5070, 48
      %v5509 = vpop.permute.xlu0 %5508
      %5510 = vrot.lane.b32.xlu0 %v5007, 48
      %v5511 = vpop.permute.xlu0 %5510
      %v5545 = vrot.slane %v5070, 1
      %v5546 = vrot.slane %v5007, 1
      %v5547 = vsel %vm472, %v5545, %v5546
      %v5548 = vrot.slane %v5086, 1
      %v5549 = vsel %vm472, %v5546, %v5548
      %5550 = vrot.lane.b32.xlu0 %v5119, 64
      %v5551 = vpop.permute.xlu0 %5550
      %5552 = vrot.lane.b32.xlu0 %v5121, 64
      %v5553 = vpop.permute.xlu0 %5552
      %5554 = vrot.lane.b32.xlu0 %v5124, 64
      %v5555 = vpop.permute.xlu0 %5554
      %5556 = vrot.lane.b32.xlu0 %v5126, 64
      %v5557 = vpop.permute.xlu0 %5556
      %5558 = vrot.lane.b32.xlu0 %v5129, 64
      %v5559 = vpop.permute.xlu0 %5558
      %5560 = vrot.lane.b32.xlu0 %v5131, 64
      %v5561 = vpop.permute.xlu0 %5560
      %5562 = vrot.lane.b32.xlu0 %v5134, 64
      %v5563 = vpop.permute.xlu0 %5562
      %5564 = vrot.lane.b32.xlu0 %v5136, 64
      %v5565 = vpop.permute.xlu0 %5564
      %5566 = vrot.lane.b32.xlu0 %v5139, 64
      %v5567 = vpop.permute.xlu0 %5566
      %5568 = vrot.lane.b32.xlu0 %v5141, 64
      %v5569 = vpop.permute.xlu0 %5568
      %5570 = vrot.lane.b32.xlu0 %v5144, 64
      %v5571 = vpop.permute.xlu0 %5570
      %5572 = vrot.lane.b32.xlu0 %v5146, 64
      %v5573 = vpop.permute.xlu0 %5572
      %5574 = vrot.lane.b32.xlu0 %v5149, 64
      %v5575 = vpop.permute.xlu0 %5574
      %5576 = vrot.lane.b32.xlu0 %v5151, 64
      %v5577 = vpop.permute.xlu0 %5576
      %5578 = vrot.lane.b32.xlu0 %v5154, 64
      %v5579 = vpop.permute.xlu0 %5578
      %5580 = vrot.lane.b32.xlu0 %v5156, 64
      %v5581 = vpop.permute.xlu0 %5580
      %5582 = vrot.lane.b32.xlu0 %v5159, 64
      %v5583 = vpop.permute.xlu0 %5582
      %5584 = vrot.lane.b32.xlu0 %v5161, 64
      %v5585 = vpop.permute.xlu0 %5584
      %5586 = vrot.lane.b32.xlu0 %v5164, 64
      %v5587 = vpop.permute.xlu0 %5586
      %5588 = vrot.lane.b32.xlu0 %v5166, 64
      %v5589 = vpop.permute.xlu0 %5588
      %5590 = vrot.lane.b32.xlu0 %v5169, 64
      %v5591 = vpop.permute.xlu0 %5590
      %5592 = vrot.lane.b32.xlu0 %v5171, 64
      %v5593 = vpop.permute.xlu0 %5592
      %5594 = vrot.lane.b32.xlu0 %v5174, 64
      %v5595 = vpop.permute.xlu0 %5594
      %5596 = vrot.lane.b32.xlu0 %v5176, 64
      %v5597 = vpop.permute.xlu0 %5596
      %5598 = vrot.lane.b32.xlu0 %v5179, 64
      %v5599 = vpop.permute.xlu0 %5598
      %5600 = vrot.lane.b32.xlu0 %v5181, 64
      %v5601 = vpop.permute.xlu0 %5600
      %5602 = vrot.lane.b32.xlu0 %v5184, 64
      %v5603 = vpop.permute.xlu0 %5602
      %5604 = vrot.lane.b32.xlu0 %v5186, 64
      %v5605 = vpop.permute.xlu0 %5604
      %5606 = vrot.lane.b32.xlu0 %v5189, 64
      %v5607 = vpop.permute.xlu0 %5606
      %5608 = vrot.lane.b32.xlu0 %v5191, 64
      %v5609 = vpop.permute.xlu0 %5608
      %5610 = vrot.lane.b32.xlu0 %v5547, 64
      %v5611 = vpop.permute.xlu0 %5610
      %5612 = vrot.lane.b32.xlu0 %v5549, 64
      %v5613 = vpop.permute.xlu0 %5612
      %v5646 = vrot.slane %v5070, 2
      %v5647 = vrot.slane %v5007, 2
      %v5648 = vsel %vm520, %v5646, %v5647
      %v5649 = vrot.slane %v5086, 2
      %v5650 = vsel %vm520, %v5647, %v5649
      %5651 = vrot.lane.b32.xlu0 %v5284, 80
      %v5652 = vpop.permute.xlu0 %5651
      %5653 = vrot.lane.b32.xlu0 %v5286, 80
      %v5654 = vpop.permute.xlu0 %5653
      %5655 = vrot.lane.b32.xlu0 %v5289, 80
      %v5656 = vpop.permute.xlu0 %5655
      %5657 = vrot.lane.b32.xlu0 %v5291, 80
      %v5658 = vpop.permute.xlu0 %5657
      %5659 = vrot.lane.b32.xlu0 %v5294, 80
      %v5660 = vpop.permute.xlu0 %5659
      %5661 = vrot.lane.b32.xlu0 %v5296, 80
      %v5662 = vpop.permute.xlu0 %5661
      %5663 = vrot.lane.b32.xlu0 %v5299, 80
      %v5664 = vpop.permute.xlu0 %5663
      %5665 = vrot.lane.b32.xlu0 %v5301, 80
      %v5666 = vpop.permute.xlu0 %5665
      %5667 = vrot.lane.b32.xlu0 %v5304, 80
      %v5668 = vpop.permute.xlu0 %5667
      %5669 = vrot.lane.b32.xlu0 %v5306, 80
      %v5670 = vpop.permute.xlu0 %5669
      %5671 = vrot.lane.b32.xlu0 %v5309, 80
      %v5672 = vpop.permute.xlu0 %5671
      %5673 = vrot.lane.b32.xlu0 %v5311, 80
      %v5674 = vpop.permute.xlu0 %5673
      %5675 = vrot.lane.b32.xlu0 %v5314, 80
      %v5676 = vpop.permute.xlu0 %5675
      %5677 = vrot.lane.b32.xlu0 %v5316, 80
      %v5678 = vpop.permute.xlu0 %5677
      %5679 = vrot.lane.b32.xlu0 %v5319, 80
      %v5680 = vpop.permute.xlu0 %5679
      %5681 = vrot.lane.b32.xlu0 %v5321, 80
      %v5682 = vpop.permute.xlu0 %5681
      %5683 = vrot.lane.b32.xlu0 %v5324, 80
      %v5684 = vpop.permute.xlu0 %5683
      %5685 = vrot.lane.b32.xlu0 %v5326, 80
      %v5686 = vpop.permute.xlu0 %5685
      %5687 = vrot.lane.b32.xlu0 %v5329, 80
      %v5688 = vpop.permute.xlu0 %5687
      %5689 = vrot.lane.b32.xlu0 %v5331, 80
      %v5690 = vpop.permute.xlu0 %5689
      %5691 = vrot.lane.b32.xlu0 %v5334, 80
      %v5692 = vpop.permute.xlu0 %5691
      %5693 = vrot.lane.b32.xlu0 %v5336, 80
      %v5694 = vpop.permute.xlu0 %5693
      %5695 = vrot.lane.b32.xlu0 %v5339, 80
      %v5696 = vpop.permute.xlu0 %5695
      %5697 = vrot.lane.b32.xlu0 %v5341, 80
      %v5698 = vpop.permute.xlu0 %5697
      %5699 = vrot.lane.b32.xlu0 %v5344, 80
      %v5700 = vpop.permute.xlu0 %5699
      %5701 = vrot.lane.b32.xlu0 %v5346, 80
      %v5702 = vpop.permute.xlu0 %5701
      %5703 = vrot.lane.b32.xlu0 %v5349, 80
      %v5704 = vpop.permute.xlu0 %5703
      %5705 = vrot.lane.b32.xlu0 %v5351, 80
      %v5706 = vpop.permute.xlu0 %5705
      %5707 = vrot.lane.b32.xlu0 %v5354, 80
      %v5708 = vpop.permute.xlu0 %5707
      %5709 = vrot.lane.b32.xlu0 %v5356, 80
      %v5710 = vpop.permute.xlu0 %5709
      %5711 = vrot.lane.b32.xlu0 %v5648, 80
      %v5712 = vpop.permute.xlu0 %5711
      %5713 = vrot.lane.b32.xlu0 %v5650, 80
      %v5714 = vpop.permute.xlu0 %5713
      %5747 = vrot.lane.b32.xlu0 %v5056, 96
      %v5748 = vpop.permute.xlu0 %5747
      %5749 = vrot.lane.b32.xlu0 %v4965, 96
      %v5750 = vpop.permute.xlu0 %5749
      %5751 = vrot.lane.b32.xlu0 %v5057, 96
      %v5752 = vpop.permute.xlu0 %5751
      %5753 = vrot.lane.b32.xlu0 %v4968, 96
      %v5754 = vpop.permute.xlu0 %5753
      %5755 = vrot.lane.b32.xlu0 %v5058, 96
      %v5756 = vpop.permute.xlu0 %5755
      %5757 = vrot.lane.b32.xlu0 %v4971, 96
      %v5758 = vpop.permute.xlu0 %5757
      %5759 = vrot.lane.b32.xlu0 %v5059, 96
      %v5760 = vpop.permute.xlu0 %5759
      %5761 = vrot.lane.b32.xlu0 %v4974, 96
      %v5762 = vpop.permute.xlu0 %5761
      %5763 = vrot.lane.b32.xlu0 %v5060, 96
      %v5764 = vpop.permute.xlu0 %5763
      %5765 = vrot.lane.b32.xlu0 %v4977, 96
      %v5766 = vpop.permute.xlu0 %5765
      %5767 = vrot.lane.b32.xlu0 %v5061, 96
      %v5768 = vpop.permute.xlu0 %5767
      %5769 = vrot.lane.b32.xlu0 %v4980, 96
      %v5770 = vpop.permute.xlu0 %5769
      %5771 = vrot.lane.b32.xlu0 %v5062, 96
      %v5772 = vpop.permute.xlu0 %5771
      %5773 = vrot.lane.b32.xlu0 %v4983, 96
      %v5774 = vpop.permute.xlu0 %5773
      %5775 = vrot.lane.b32.xlu0 %v5063, 96
      %v5776 = vpop.permute.xlu0 %5775
      %5777 = vrot.lane.b32.xlu0 %v4986, 96
      %v5778 = vpop.permute.xlu0 %5777
      %5779 = vrot.lane.b32.xlu0 %v5064, 96
      %v5780 = vpop.permute.xlu0 %5779
      %5781 = vrot.lane.b32.xlu0 %v4989, 96
      %v5782 = vpop.permute.xlu0 %5781
      %5783 = vrot.lane.b32.xlu0 %v5065, 96
      %v5784 = vpop.permute.xlu0 %5783
      %5785 = vrot.lane.b32.xlu0 %v4992, 96
      %v5786 = vpop.permute.xlu0 %5785
      %5787 = vrot.lane.b32.xlu0 %v5066, 96
      %v5788 = vpop.permute.xlu0 %5787
      %5789 = vrot.lane.b32.xlu0 %v4995, 96
      %v5790 = vpop.permute.xlu0 %5789
      %5791 = vrot.lane.b32.xlu0 %v5067, 96
      %v5792 = vpop.permute.xlu0 %5791
      %5793 = vrot.lane.b32.xlu0 %v4998, 96
      %v5794 = vpop.permute.xlu0 %5793
      %5795 = vrot.lane.b32.xlu0 %v5068, 96
      %v5796 = vpop.permute.xlu0 %5795
      %5797 = vrot.lane.b32.xlu0 %v5001, 96
      %v5798 = vpop.permute.xlu0 %5797
      %5799 = vrot.lane.b32.xlu0 %v5069, 96
      %v5800 = vpop.permute.xlu0 %5799
      %5801 = vrot.lane.b32.xlu0 %v5004, 96
      %v5802 = vpop.permute.xlu0 %5801
      %5803 = vrot.lane.b32.xlu0 %v5070, 96
      %v5804 = vpop.permute.xlu0 %5803
      %5805 = vrot.lane.b32.xlu0 %v5007, 96
      %v5806 = vpop.permute.xlu0 %5805
      %5837 = vrot.lane.b32.xlu0 %v5124, 112
      %v5838 = vpop.permute.xlu0 %5837
      %5839 = vrot.lane.b32.xlu0 %v5126, 112
      %v5840 = vpop.permute.xlu0 %5839
      %5841 = vrot.lane.b32.xlu0 %v5129, 112
      %v5842 = vpop.permute.xlu0 %5841
      %5843 = vrot.lane.b32.xlu0 %v5131, 112
      %v5844 = vpop.permute.xlu0 %5843
      %5845 = vrot.lane.b32.xlu0 %v5134, 112
      %v5846 = vpop.permute.xlu0 %5845
      %5847 = vrot.lane.b32.xlu0 %v5136, 112
      %v5848 = vpop.permute.xlu0 %5847
      %5849 = vrot.lane.b32.xlu0 %v5139, 112
      %v5850 = vpop.permute.xlu0 %5849
      %5851 = vrot.lane.b32.xlu0 %v5141, 112
      %v5852 = vpop.permute.xlu0 %5851
      %5853 = vrot.lane.b32.xlu0 %v5144, 112
      %v5854 = vpop.permute.xlu0 %5853
      %5855 = vrot.lane.b32.xlu0 %v5146, 112
      %v5856 = vpop.permute.xlu0 %5855
      %5857 = vrot.lane.b32.xlu0 %v5149, 112
      %v5858 = vpop.permute.xlu0 %5857
      %5859 = vrot.lane.b32.xlu0 %v5151, 112
      %v5860 = vpop.permute.xlu0 %5859
      %5861 = vrot.lane.b32.xlu0 %v5154, 112
      %v5862 = vpop.permute.xlu0 %5861
      %5863 = vrot.lane.b32.xlu0 %v5156, 112
      %v5864 = vpop.permute.xlu0 %5863
      %5865 = vrot.lane.b32.xlu0 %v5159, 112
      %v5866 = vpop.permute.xlu0 %5865
      %5867 = vrot.lane.b32.xlu0 %v5161, 112
      %v5868 = vpop.permute.xlu0 %5867
      %5869 = vrot.lane.b32.xlu0 %v5164, 112
      %v5870 = vpop.permute.xlu0 %5869
      %5871 = vrot.lane.b32.xlu0 %v5166, 112
      %v5872 = vpop.permute.xlu0 %5871
      %5873 = vrot.lane.b32.xlu0 %v5169, 112
      %v5874 = vpop.permute.xlu0 %5873
      %5875 = vrot.lane.b32.xlu0 %v5171, 112
      %v5876 = vpop.permute.xlu0 %5875
      %5877 = vrot.lane.b32.xlu0 %v5174, 112
      %v5878 = vpop.permute.xlu0 %5877
      %5879 = vrot.lane.b32.xlu0 %v5176, 112
      %v5880 = vpop.permute.xlu0 %5879
      %5881 = vrot.lane.b32.xlu0 %v5179, 112
      %v5882 = vpop.permute.xlu0 %5881
      %5883 = vrot.lane.b32.xlu0 %v5181, 112
      %v5884 = vpop.permute.xlu0 %5883
      %5885 = vrot.lane.b32.xlu0 %v5184, 112
      %v5886 = vpop.permute.xlu0 %5885
      %5887 = vrot.lane.b32.xlu0 %v5186, 112
      %v5888 = vpop.permute.xlu0 %5887
      %5889 = vrot.lane.b32.xlu0 %v5189, 112
      %v5890 = vpop.permute.xlu0 %5889
      %5891 = vrot.lane.b32.xlu0 %v5191, 112
      %v5892 = vpop.permute.xlu0 %5891
      %5893 = vrot.lane.b32.xlu0 %v5547, 112
      %v5894 = vpop.permute.xlu0 %5893
      %5895 = vrot.lane.b32.xlu0 %v5549, 112
      %v5896 = vpop.permute.xlu0 %5895
      %v5957 = vsel %vm729, %v5055, %v5193
      %v5958 = vsel %vm729, %v4962, %v5195
      %v5959 = vsel %vm729, %v5056, %v5197
      %v5960 = vsel %vm729, %v4965, %v5199
      %v5961 = vsel %vm729, %v5057, %v5201
      %v5962 = vsel %vm729, %v4968, %v5203
      %v5963 = vsel %vm729, %v5058, %v5205
      %v5964 = vsel %vm729, %v4971, %v5207
      %v5965 = vsel %vm729, %v5059, %v5209
      %v5966 = vsel %vm729, %v4974, %v5211
      %v5967 = vsel %vm729, %v5060, %v5213
      %v5968 = vsel %vm729, %v4977, %v5215
      %v5969 = vsel %vm729, %v5061, %v5217
      %v5970 = vsel %vm729, %v4980, %v5219
      %v5971 = vsel %vm729, %v5062, %v5221
      %v5972 = vsel %vm729, %v4983, %v5223
      %v5973 = vsel %vm729, %v5063, %v5225
      %v5974 = vsel %vm729, %v4986, %v5227
      %v5975 = vsel %vm729, %v5064, %v5229
      %v5976 = vsel %vm729, %v4989, %v5231
      %v5977 = vsel %vm729, %v5065, %v5233
      %v5978 = vsel %vm729, %v4992, %v5235
      %v5979 = vsel %vm729, %v5066, %v5237
      %v5980 = vsel %vm729, %v4995, %v5239
      %v5981 = vsel %vm729, %v5067, %v5241
      %v5982 = vsel %vm729, %v4998, %v5243
      %v5983 = vsel %vm729, %v5068, %v5245
      %v5984 = vsel %vm729, %v5001, %v5247
      %v5985 = vsel %vm729, %v5069, %v5249
      %v5986 = vsel %vm729, %v5004, %v5251
      %v5987 = vsel %vm747, %v5957, %v5358
      %v5988 = vsel %vm747, %v5958, %v5360
      %v5989 = vsel %vm747, %v5959, %v5362
      %v5990 = vsel %vm747, %v5960, %v5364
      %v5991 = vsel %vm747, %v5961, %v5366
      %v5992 = vsel %vm747, %v5962, %v5368
      %v5993 = vsel %vm747, %v5963, %v5370
      %v5994 = vsel %vm747, %v5964, %v5372
      %v5995 = vsel %vm747, %v5965, %v5374
      %v5996 = vsel %vm747, %v5966, %v5376
      %v5997 = vsel %vm747, %v5967, %v5378
      %v5998 = vsel %vm747, %v5968, %v5380
      %v5999 = vsel %vm747, %v5969, %v5382
      %v6000 = vsel %vm747, %v5970, %v5384
      %v6001 = vsel %vm747, %v5971, %v5386
      %v6002 = vsel %vm747, %v5972, %v5388
      %v6003 = vsel %vm747, %v5973, %v5390
      %v6004 = vsel %vm747, %v5974, %v5392
      %v6005 = vsel %vm747, %v5975, %v5394
      %v6006 = vsel %vm747, %v5976, %v5396
      %v6007 = vsel %vm747, %v5977, %v5398
      %v6008 = vsel %vm747, %v5978, %v5400
      %v6009 = vsel %vm747, %v5979, %v5402
      %v6010 = vsel %vm747, %v5980, %v5404
      %v6011 = vsel %vm747, %v5981, %v5406
      %v6012 = vsel %vm747, %v5982, %v5408
      %v6013 = vsel %vm747, %v5983, %v5410
      %v6014 = vsel %vm747, %v5984, %v5412
      %v6015 = vsel %vm747, %v5985, %v5414
      %v6016 = vsel %vm747, %v5986, %v5416
      %v6017 = vsel %vm765, %v4305, %v5449
      %v6018 = vsel %vm765, %v4305, %v5451
      %v6019 = vsel %vm765, %v5987, %v5453
      %v6020 = vsel %vm765, %v5988, %v5455
      %v6021 = vsel %vm765, %v5989, %v5457
      %v6022 = vsel %vm765, %v5990, %v5459
      %v6023 = vsel %vm765, %v5991, %v5461
      %v6024 = vsel %vm765, %v5992, %v5463
      %v6025 = vsel %vm765, %v5993, %v5465
      %v6026 = vsel %vm765, %v5994, %v5467
      %v6027 = vsel %vm765, %v5995, %v5469
      %v6028 = vsel %vm765, %v5996, %v5471
      %v6029 = vsel %vm765, %v5997, %v5473
      %v6030 = vsel %vm765, %v5998, %v5475
      %v6031 = vsel %vm765, %v5999, %v5477
      %v6032 = vsel %vm765, %v6000, %v5479
      %v6033 = vsel %vm765, %v6001, %v5481
      %v6034 = vsel %vm765, %v6002, %v5483
      %v6035 = vsel %vm765, %v6003, %v5485
      %v6036 = vsel %vm765, %v6004, %v5487
      %v6037 = vsel %vm765, %v6005, %v5489
      %v6038 = vsel %vm765, %v6006, %v5491
      %v6039 = vsel %vm765, %v6007, %v5493
      %v6040 = vsel %vm765, %v6008, %v5495
      %v6041 = vsel %vm765, %v6009, %v5497
      %v6042 = vsel %vm765, %v6010, %v5499
      %v6043 = vsel %vm765, %v6011, %v5501
      %v6044 = vsel %vm765, %v6012, %v5503
      %v6045 = vsel %vm765, %v6013, %v5505
      %v6046 = vsel %vm765, %v6014, %v5507
      %v6047 = vsel %vm765, %v6015, %v5509
      %v6048 = vsel %vm765, %v6016, %v5511
      %v6049 = vsel %vm783, %v6017, %v5551
      %v6050 = vsel %vm783, %v6018, %v5553
      %v6051 = vsel %vm783, %v6019, %v5555
      %v6052 = vsel %vm783, %v6020, %v5557
      %v6053 = vsel %vm783, %v6021, %v5559
      %v6054 = vsel %vm783, %v6022, %v5561
      %v6055 = vsel %vm783, %v6023, %v5563
      %v6056 = vsel %vm783, %v6024, %v5565
      %v6057 = vsel %vm783, %v6025, %v5567
      %v6058 = vsel %vm783, %v6026, %v5569
      %v6059 = vsel %vm783, %v6027, %v5571
      %v6060 = vsel %vm783, %v6028, %v5573
      %v6061 = vsel %vm783, %v6029, %v5575
      %v6062 = vsel %vm783, %v6030, %v5577
      %v6063 = vsel %vm783, %v6031, %v5579
      %v6064 = vsel %vm783, %v6032, %v5581
      %v6065 = vsel %vm783, %v6033, %v5583
      %v6066 = vsel %vm783, %v6034, %v5585
      %v6067 = vsel %vm783, %v6035, %v5587
      %v6068 = vsel %vm783, %v6036, %v5589
      %v6069 = vsel %vm783, %v6037, %v5591
      %v6070 = vsel %vm783, %v6038, %v5593
      %v6071 = vsel %vm783, %v6039, %v5595
      %v6072 = vsel %vm783, %v6040, %v5597
      %v6073 = vsel %vm783, %v6041, %v5599
      %v6074 = vsel %vm783, %v6042, %v5601
      %v6075 = vsel %vm783, %v6043, %v5603
      %v6076 = vsel %vm783, %v6044, %v5605
      %v6077 = vsel %vm783, %v6045, %v5607
      %v6078 = vsel %vm783, %v6046, %v5609
      %v6079 = vsel %vm783, %v6047, %v5611
      %v6080 = vsel %vm783, %v6048, %v5613
      %v6081 = vsel %vm4400, %v6049, %v5652
      %v6082 = vsel %vm4400, %v6050, %v5654
      %v6083 = vsel %vm4400, %v6051, %v5656
      %v6084 = vsel %vm4400, %v6052, %v5658
      %v6085 = vsel %vm4400, %v6053, %v5660
      %v6086 = vsel %vm4400, %v6054, %v5662
      %v6087 = vsel %vm4400, %v6055, %v5664
      %v6088 = vsel %vm4400, %v6056, %v5666
      %v6089 = vsel %vm4400, %v6057, %v5668
      %v6090 = vsel %vm4400, %v6058, %v5670
      %v6091 = vsel %vm4400, %v6059, %v5672
      %v6092 = vsel %vm4400, %v6060, %v5674
      %v6093 = vsel %vm4400, %v6061, %v5676
      %v6094 = vsel %vm4400, %v6062, %v5678
      %v6095 = vsel %vm4400, %v6063, %v5680
      %v6096 = vsel %vm4400, %v6064, %v5682
      %v6097 = vsel %vm4400, %v6065, %v5684
      %v6098 = vsel %vm4400, %v6066, %v5686
      %v6099 = vsel %vm4400, %v6067, %v5688
      %v6100 = vsel %vm4400, %v6068, %v5690
      %v6101 = vsel %vm4400, %v6069, %v5692
      %v6102 = vsel %vm4400, %v6070, %v5694
      %v6103 = vsel %vm4400, %v6071, %v5696
      %v6104 = vsel %vm4400, %v6072, %v5698
      %v6105 = vsel %vm4400, %v6073, %v5700
      %v6106 = vsel %vm4400, %v6074, %v5702
      %v6107 = vsel %vm4400, %v6075, %v5704
      %v6108 = vsel %vm4400, %v6076, %v5706
      %v6109 = vsel %vm4400, %v6077, %v5708
      %v6110 = vsel %vm4400, %v6078, %v5710
      %v6111 = vsel %vm4400, %v6079, %v5712
      %v6112 = vsel %vm4400, %v6080, %v5714
      %v6113 = vsel %vm2600, %v6081, %v5748
      %v6114 = vsel %vm2600, %v6082, %v5750
      %v6115 = vsel %vm2600, %v6083, %v5752
      %v6116 = vsel %vm2600, %v6084, %v5754
      %v6117 = vsel %vm2600, %v6085, %v5756
      %v6118 = vsel %vm2600, %v6086, %v5758
      %v6119 = vsel %vm2600, %v6087, %v5760
      %v6120 = vsel %vm2600, %v6088, %v5762
      %v6121 = vsel %vm2600, %v6089, %v5764
      %v6122 = vsel %vm2600, %v6090, %v5766
      %v6123 = vsel %vm2600, %v6091, %v5768
      %v6124 = vsel %vm2600, %v6092, %v5770
      %v6125 = vsel %vm2600, %v6093, %v5772
      %v6126 = vsel %vm2600, %v6094, %v5774
      %v6127 = vsel %vm2600, %v6095, %v5776
      %v6128 = vsel %vm2600, %v6096, %v5778
      %v6129 = vsel %vm2600, %v6097, %v5780
      %v6130 = vsel %vm2600, %v6098, %v5782
      %v6131 = vsel %vm2600, %v6099, %v5784
      %v6132 = vsel %vm2600, %v6100, %v5786
      %v6133 = vsel %vm2600, %v6101, %v5788
      %v6134 = vsel %vm2600, %v6102, %v5790
      %v6135 = vsel %vm2600, %v6103, %v5792
      %v6136 = vsel %vm2600, %v6104, %v5794
      %v6137 = vsel %vm2600, %v6105, %v5796
      %v6138 = vsel %vm2600, %v6106, %v5798
      %v6139 = vsel %vm2600, %v6107, %v5800
      %v6140 = vsel %vm2600, %v6108, %v5802
      %v6141 = vsel %vm2600, %v6109, %v5804
      %v6142 = vsel %vm2600, %v6110, %v5806
      %v6143 = vsel %vm2600, %v6111, %v4118
      %v6144 = vsel %vm2600, %v6112, %v4118
      %v6145 = vsel %vm4465, %v6113, %v5838
      %v6146 = vsel %vm4465, %v6114, %v5840
      %v6147 = vsel %vm4465, %v6115, %v5842
      %v6148 = vsel %vm4465, %v6116, %v5844
      %v6149 = vsel %vm4465, %v6117, %v5846
      %v6150 = vsel %vm4465, %v6118, %v5848
      %v6151 = vsel %vm4465, %v6119, %v5850
      %v6152 = vsel %vm4465, %v6120, %v5852
      %v6153 = vsel %vm4465, %v6121, %v5854
      %v6154 = vsel %vm4465, %v6122, %v5856
      %v6155 = vsel %vm4465, %v6123, %v5858
      %v6156 = vsel %vm4465, %v6124, %v5860
      %v6157 = vsel %vm4465, %v6125, %v5862
      %v6158 = vsel %vm4465, %v6126, %v5864
      %v6159 = vsel %vm4465, %v6127, %v5866
      %v6160 = vsel %vm4465, %v6128, %v5868
      %v6161 = vsel %vm4465, %v6129, %v5870
      %v6162 = vsel %vm4465, %v6130, %v5872
      %v6163 = vsel %vm4465, %v6131, %v5874
      %v6164 = vsel %vm4465, %v6132, %v5876
      %v6165 = vsel %vm4465, %v6133, %v5878
      %v6166 = vsel %vm4465, %v6134, %v5880
      %v6167 = vsel %vm4465, %v6135, %v5882
      %v6168 = vsel %vm4465, %v6136, %v5884
      %v6169 = vsel %vm4465, %v6137, %v5886
      %v6170 = vsel %vm4465, %v6138, %v5888
      %v6171 = vsel %vm4465, %v6139, %v5890
      %v6172 = vsel %vm4465, %v6140, %v5892
      %v6173 = vsel %vm4465, %v6141, %v5894
      %v6174 = vsel %vm4465, %v6142, %v5896
      %v6175 = vsel %vm4465, %v6143, %v4211
      %v6176 = vsel %vm4465, %v6144, %v4211
      %v6177 = vpack.c.bf16 %v6146, %v6145
      %v6178 = vpack.c.bf16 %v5291, %v5289
      %v6179 = vpack.c.bf16 %v6148, %v6147
      %v6180 = vpack.c.bf16 %v5296, %v5294
      %v6181 = vpack.c.bf16 %v6150, %v6149
      %v6182 = vpack.c.bf16 %v5301, %v5299
      %v6183 = vpack.c.bf16 %v6152, %v6151
      %v6184 = vpack.c.bf16 %v5306, %v5304
      %v6185 = vpack.c.bf16 %v6154, %v6153
      %v6186 = vpack.c.bf16 %v5311, %v5309
      %v6187 = vpack.c.bf16 %v6156, %v6155
      %v6188 = vpack.c.bf16 %v5316, %v5314
      %v6189 = vpack.c.bf16 %v6158, %v6157
      %v6190 = vpack.c.bf16 %v5321, %v5319
      %v6191 = vpack.c.bf16 %v6160, %v6159
      %v6192 = vpack.c.bf16 %v5326, %v5324
      %v6193 = vpack.c.bf16 %v6162, %v6161
      %v6194 = vpack.c.bf16 %v5331, %v5329
      %v6195 = vpack.c.bf16 %v6164, %v6163
      %v6196 = vpack.c.bf16 %v5336, %v5334
      %v6197 = vpack.c.bf16 %v6166, %v6165
      %v6198 = vpack.c.bf16 %v5341, %v5339
      %v6199 = vpack.c.bf16 %v6168, %v6167
      %v6200 = vpack.c.bf16 %v5346, %v5344
      %v6201 = vpack.c.bf16 %v6170, %v6169
      %v6202 = vpack.c.bf16 %v5351, %v5349
      %v6203 = vpack.c.bf16 %v6172, %v6171
      %v6204 = vpack.c.bf16 %v5356, %v5354
      %v6205 = vpack.c.bf16 %v6174, %v6173
      %v6206 = vpack.c.bf16 %v5650, %v5648
      %v6207 = vpack.c.bf16 %v6176, %v6175
      %v6208 = vld [vmem:[%s9] sm:$0xf]
      %v6209 = vld [vmem:[%s9 + $0x4] sm:$0xf]
      %v6210 = vld [vmem:[%s9 + $0x8] sm:$0xf]
      %v6211 = vld [vmem:[%s9 + $0xc] sm:$0xf]
      %v6212 = vld [vmem:[%s9 + $0x10] sm:$0xf]
      %v6213 = vld [vmem:[%s9 + $0x14] sm:$0xf]
      %v6214 = vld [vmem:[%s9 + $0x18] sm:$0xf]
      %v6215 = vld [vmem:[%s9 + $0x1c] sm:$0xf]
      %v6216 = vld [vmem:[%s9 + $0x20] sm:$0xf]
      %v6217 = vld [vmem:[%s9 + $0x24] sm:$0xf]
      %v6218 = vld [vmem:[%s9 + $0x28] sm:$0xf]
      %v6219 = vld [vmem:[%s9 + $0x2c] sm:$0xf]
      %v6220 = vld [vmem:[%s9 + $0x30] sm:$0xf]
      %v6221 = vld [vmem:[%s9 + $0x34] sm:$0xf]
      %v6222 = vld [vmem:[%s9 + $0x38] sm:$0xf]
      %v6223 = vld [vmem:[%s9 + $0x3c] sm:$0xf]
      %v6224 = vld [vmem:[%s9 + $0x40] sm:$0xf]
      %v6225 = vld [vmem:[%s9 + $0x44] sm:$0xf]
      %v6226 = vld [vmem:[%s10] sm:$0x1]
      %v6228 = vperm.slane %v6226, 0
      %v6248 = vunpack.c.l.b16 %v6208
      %v6249 = vunpack.c.l.b16 %v6209
      %v6250 = vunpack.c.l.b16 %v6210
      %v6251 = vunpack.c.l.b16 %v6211
      %v6252 = vunpack.c.l.b16 %v6212
      %v6253 = vunpack.c.l.b16 %v6213
      %v6254 = vunpack.c.l.b16 %v6214
      %v6255 = vunpack.c.l.b16 %v6215
      %v6256 = vunpack.c.l.b16 %v6216
      %v6257 = vunpack.c.l.b16 %v6217
      %v6258 = vunpack.c.l.b16 %v6218
      %v6259 = vunpack.c.l.b16 %v6219
      %v6260 = vunpack.c.l.b16 %v6220
      %v6261 = vunpack.c.l.b16 %v6221
      %v6262 = vunpack.c.l.b16 %v6222
      %v6263 = vunpack.c.l.b16 %v6223
      %v6264 = vunpack.c.l.b16 %v6224
      %v6265 = vunpack.c.l.b16 %v6225
      %v6266 = vpack.c.b16 %v6249, %v6248
      %v6267 = vpack.c.b16 %v6251, %v6250
      %v6268 = vpack.c.b16 %v6253, %v6252
      %v6269 = vpack.c.b16 %v6255, %v6254
      %v6270 = vpack.c.b16 %v6257, %v6256
      %v6271 = vpack.c.b16 %v6259, %v6258
      %v6272 = vpack.c.b16 %v6261, %v6260
      %v6273 = vpack.c.b16 %v6263, %v6262
      %v6274 = vpack.c.b16 %v6265, %v6264
      %v6285 = vsel %vm729, %v6178, 0
      %v6288 = vsel %vm729, %v6180, 0
      %v6291 = vsel %vm729, %v6182, 0
      %v6294 = vsel %vm729, %v6184, 0
      %v6297 = vsel %vm729, %v6186, 0
      %v6300 = vsel %vm729, %v6188, 0
      %v6303 = vsel %vm729, %v6190, 0
      %v6306 = vsel %vm729, %v6192, 0
      %v6309 = vsel %vm729, %v6194, 0
      %v6312 = vsel %vm729, %v6196, 0
      %v6315 = vsel %vm729, %v6198, 0
      %v6318 = vsel %vm729, %v6200, 0
      %v6321 = vsel %vm729, %v6202, 0
      %v6324 = vsel %vm729, %v6204, 0
      %v6327 = vsel %vm729, %v6206, 0
      %6329 = vmatpush.bf16.msra.mxu0 %v6273
      %6330 = vmatpush.bf16.msra.mxu0 %v6272
      %6331 = vmatpush.bf16.msra.mxu0 %v6271
      %6332 = vmatpush.bf16.msra.mxu0 %v6270
      %6333 = vmatpush.bf16.msra.mxu0 %v6269
      %6334 = vmatpush.bf16.msra.mxu0 %v6268
      %6335 = vmatpush.bf16.msra.mxu0 %v6267
      %6336 = vmatpush.bf16.msra.mxu0 %v6266
      %6337 = vmatmul.bf16.gmra.mxu0 %v6177
      %v6338 = vpop.f32.mrf.mxu0
      %v6339 = vadd.f32 %v6228, %v6338
      %v6340 = vpop.f32.mrf.mxu0
      %v6341 = vadd.f32 %v6228, %v6340
      %6342 = vmatmul.bf16.gmra.mxu0 %v6179
      %v6343 = vpop.f32.mrf.mxu0
      %v6344 = vadd.f32 %v6228, %v6343
      %v6345 = vpop.f32.mrf.mxu0
      %v6346 = vadd.f32 %v6228, %v6345
      %6347 = vmatmul.bf16.gmra.mxu0 %v6181
      %v6348 = vpop.f32.mrf.mxu0
      %v6349 = vadd.f32 %v6228, %v6348
      %v6350 = vpop.f32.mrf.mxu0
      %v6351 = vadd.f32 %v6228, %v6350
      %6352 = vmatmul.bf16.gmra.mxu0 %v6183
      %v6353 = vpop.f32.mrf.mxu0
      %v6354 = vadd.f32 %v6228, %v6353
      %v6355 = vpop.f32.mrf.mxu0
      %v6356 = vadd.f32 %v6228, %v6355
      %6357 = vmatmul.bf16.gmra.mxu0 %v6185
      %v6358 = vpop.f32.mrf.mxu0
      %v6359 = vadd.f32 %v6228, %v6358
      %v6360 = vpop.f32.mrf.mxu0
      %v6361 = vadd.f32 %v6228, %v6360
      %6362 = vmatmul.bf16.gmra.mxu0 %v6187
      %v6363 = vpop.f32.mrf.mxu0
      %v6364 = vadd.f32 %v6228, %v6363
      %v6365 = vpop.f32.mrf.mxu0
      %v6366 = vadd.f32 %v6228, %v6365
      %6367 = vmatmul.bf16.gmra.mxu0 %v6189
      %v6368 = vpop.f32.mrf.mxu0
      %v6369 = vadd.f32 %v6228, %v6368
      %v6370 = vpop.f32.mrf.mxu0
      %v6371 = vadd.f32 %v6228, %v6370
      %6372 = vmatmul.bf16.gmra.mxu0 %v6191
      %v6373 = vpop.f32.mrf.mxu0
      %v6374 = vadd.f32 %v6228, %v6373
      %v6375 = vpop.f32.mrf.mxu0
      %v6376 = vadd.f32 %v6228, %v6375
      %6377 = vmatmul.bf16.gmra.mxu0 %v6193
      %v6378 = vpop.f32.mrf.mxu0
      %v6379 = vadd.f32 %v6228, %v6378
      %v6380 = vpop.f32.mrf.mxu0
      %v6381 = vadd.f32 %v6228, %v6380
      %6382 = vmatmul.bf16.gmra.mxu0 %v6195
      %v6383 = vpop.f32.mrf.mxu0
      %v6384 = vadd.f32 %v6228, %v6383
      %v6385 = vpop.f32.mrf.mxu0
      %v6386 = vadd.f32 %v6228, %v6385
      %6387 = vmatmul.bf16.gmra.mxu0 %v6197
      %v6388 = vpop.f32.mrf.mxu0
      %v6389 = vadd.f32 %v6228, %v6388
      %v6390 = vpop.f32.mrf.mxu0
      %v6391 = vadd.f32 %v6228, %v6390
      %6392 = vmatmul.bf16.gmra.mxu0 %v6199
      %v6393 = vpop.f32.mrf.mxu0
      %v6394 = vadd.f32 %v6228, %v6393
      %v6395 = vpop.f32.mrf.mxu0
      %v6396 = vadd.f32 %v6228, %v6395
      %6397 = vmatmul.bf16.gmra.mxu0 %v6201
      %v6398 = vpop.f32.mrf.mxu0
      %v6399 = vadd.f32 %v6228, %v6398
      %v6400 = vpop.f32.mrf.mxu0
      %v6401 = vadd.f32 %v6228, %v6400
      %6402 = vmatmul.bf16.gmra.mxu0 %v6203
      %v6403 = vpop.f32.mrf.mxu0
      %v6404 = vadd.f32 %v6228, %v6403
      %v6405 = vpop.f32.mrf.mxu0
      %v6406 = vadd.f32 %v6228, %v6405
      %6407 = vmatmul.bf16.gmra.mxu0 %v6205
      %v6408 = vpop.f32.mrf.mxu0
      %v6409 = vadd.f32 %v6228, %v6408
      %v6410 = vpop.f32.mrf.mxu0
      %v6411 = vadd.f32 %v6228, %v6410
      %6412 = vmatmul.bf16.gmra.mxu0 %v6207
      %v6413 = vpop.f32.mrf.mxu0
      %v6414 = vadd.f32 %v6228, %v6413
      %v6415 = vpop.f32.mrf.mxu0
      %v6416 = vadd.f32 %v6228, %v6415
      %6417 = vdwg.mxu0
      %6418 = vmatpush.bf16.msra.mxu0 0
      %6419 = vmatpush.bf16.msra.mxu0 0
      %6420 = vmatpush.bf16.msra.mxu0 0
      %6421 = vmatpush.bf16.msra.mxu0 0
      %6422 = vmatpush.bf16.msra.mxu0 0
      %6423 = vmatpush.bf16.msra.mxu0 0
      %6424 = vmatpush.bf16.msra.mxu0 0
      %6425 = vmatpush.bf16.msra.mxu0 %v6274
      %6426 = vmatmul.bf16.gmra.mxu0 %v6285
      %v6427 = vpop.f32.mrf.mxu0
      %v6428 = vadd.f32 %v6339, %v6427
      %v6429 = vpop.f32.mrf.mxu0
      %v6430 = vadd.f32 %v6341, %v6429
      %6431 = vmatmul.bf16.gmra.mxu0 %v6288
      %v6432 = vpop.f32.mrf.mxu0
      %v6433 = vadd.f32 %v6344, %v6432
      %v6434 = vpop.f32.mrf.mxu0
      %v6435 = vadd.f32 %v6346, %v6434
      %6436 = vmatmul.bf16.gmra.mxu0 %v6291
      %v6437 = vpop.f32.mrf.mxu0
      %v6438 = vadd.f32 %v6349, %v6437
      %v6439 = vpop.f32.mrf.mxu0
      %v6440 = vadd.f32 %v6351, %v6439
      %6441 = vmatmul.bf16.gmra.mxu0 %v6294
      %v6442 = vpop.f32.mrf.mxu0
      %v6443 = vadd.f32 %v6354, %v6442
      %v6444 = vpop.f32.mrf.mxu0
      %v6445 = vadd.f32 %v6356, %v6444
      %6446 = vmatmul.bf16.gmra.mxu0 %v6297
      %v6447 = vpop.f32.mrf.mxu0
      %v6448 = vadd.f32 %v6359, %v6447
      %v6449 = vpop.f32.mrf.mxu0
      %v6450 = vadd.f32 %v6361, %v6449
      %6451 = vmatmul.bf16.gmra.mxu0 %v6300
      %v6452 = vpop.f32.mrf.mxu0
      %v6453 = vadd.f32 %v6364, %v6452
      %v6454 = vpop.f32.mrf.mxu0
      %v6455 = vadd.f32 %v6366, %v6454
      %6456 = vmatmul.bf16.gmra.mxu0 %v6303
      %v6457 = vpop.f32.mrf.mxu0
      %v6458 = vadd.f32 %v6369, %v6457
      %v6459 = vpop.f32.mrf.mxu0
      %v6460 = vadd.f32 %v6371, %v6459
      %6461 = vmatmul.bf16.gmra.mxu0 %v6306
      %v6462 = vpop.f32.mrf.mxu0
      %v6463 = vadd.f32 %v6374, %v6462
      %v6464 = vpop.f32.mrf.mxu0
      %v6465 = vadd.f32 %v6376, %v6464
      %6466 = vmatmul.bf16.gmra.mxu0 %v6309
      %v6467 = vpop.f32.mrf.mxu0
      %v6468 = vadd.f32 %v6379, %v6467
      %v6469 = vpop.f32.mrf.mxu0
      %v6470 = vadd.f32 %v6381, %v6469
      %6471 = vmatmul.bf16.gmra.mxu0 %v6312
      %v6472 = vpop.f32.mrf.mxu0
      %v6473 = vadd.f32 %v6384, %v6472
      %v6474 = vpop.f32.mrf.mxu0
      %v6475 = vadd.f32 %v6386, %v6474
      %6476 = vmatmul.bf16.gmra.mxu0 %v6315
      %v6477 = vpop.f32.mrf.mxu0
      %v6478 = vadd.f32 %v6389, %v6477
      %v6479 = vpop.f32.mrf.mxu0
      %v6480 = vadd.f32 %v6391, %v6479
      %6481 = vmatmul.bf16.gmra.mxu0 %v6318
      %v6482 = vpop.f32.mrf.mxu0
      %v6483 = vadd.f32 %v6394, %v6482
      %v6484 = vpop.f32.mrf.mxu0
      %v6485 = vadd.f32 %v6396, %v6484
      %6486 = vmatmul.bf16.gmra.mxu0 %v6321
      %v6487 = vpop.f32.mrf.mxu0
      %v6488 = vadd.f32 %v6399, %v6487
      %v6489 = vpop.f32.mrf.mxu0
      %v6490 = vadd.f32 %v6401, %v6489
      %6491 = vmatmul.bf16.gmra.mxu0 %v6324
      %v6492 = vpop.f32.mrf.mxu0
      %v6493 = vadd.f32 %v6404, %v6492
      %v6494 = vpop.f32.mrf.mxu0
      %v6495 = vadd.f32 %v6406, %v6494
      %6496 = vmatmul.bf16.gmra.mxu0 %v6327
      %v6497 = vpop.f32.mrf.mxu0
      %v6498 = vadd.f32 %v6409, %v6497
      %v6499 = vpop.f32.mrf.mxu0
      %v6500 = vadd.f32 %v6411, %v6499
      %6501 = vmatmul.bf16.gmra.mxu0 %v4652
      %v6502 = vpop.f32.mrf.mxu0
      %v6503 = vadd.f32 %v6414, %v6502
      %v6504 = vpop.f32.mrf.mxu0
      %v6505 = vadd.f32 %v6416, %v6504
      %6506 = vdwg.mxu0
      %v6507 = vadd.f32 %v3200, %v6428
      %v6508 = vadd.f32 %v3201, %v6430
      %v6509 = vadd.f32 %v3202, %v6433
      %v6510 = vadd.f32 %v3203, %v6435
      %v6511 = vadd.f32 %v3204, %v6438
      %v6512 = vadd.f32 %v3205, %v6440
      %v6513 = vadd.f32 %v3206, %v6443
      %v6514 = vadd.f32 %v3207, %v6445
      %v6515 = vadd.f32 %v3208, %v6448
      %v6516 = vadd.f32 %v3209, %v6450
      %v6517 = vadd.f32 %v3210, %v6453
      %v6518 = vadd.f32 %v3211, %v6455
      %v6519 = vadd.f32 %v3212, %v6458
      %v6520 = vadd.f32 %v3213, %v6460
      %v6521 = vadd.f32 %v3214, %v6463
      %v6522 = vadd.f32 %v3215, %v6465
      %v6523 = vadd.f32 %v3216, %v6468
      %v6524 = vadd.f32 %v3217, %v6470
      %v6525 = vadd.f32 %v3218, %v6473
      %v6526 = vadd.f32 %v3219, %v6475
      %v6527 = vadd.f32 %v3220, %v6478
      %v6528 = vadd.f32 %v3221, %v6480
      %v6529 = vadd.f32 %v3222, %v6483
      %v6530 = vadd.f32 %v3223, %v6485
      %v6531 = vadd.f32 %v3224, %v6488
      %v6532 = vadd.f32 %v3225, %v6490
      %v6533 = vadd.f32 %v3226, %v6493
      %v6534 = vadd.f32 %v3227, %v6495
      %v6535 = vadd.f32 %v3228, %v6498
      %v6536 = vadd.f32 %v3229, %v6500
      %v6537 = vadd.f32 %v3230, %v6503
      %v6538 = vadd.f32 %v3231, %v6505
      %6539 = vst.msk [vmem:[%s406] sm:$0xff] %vm729, %v6507
      %6540 = vst.msk [vmem:[%s406 + $0x8] sm:$0xff] %vm729, %v6508
      %6541 = vst.msk [vmem:[%s406 + $0x10] sm:$0xff] %vm729, %v6509
      %6542 = vst.msk [vmem:[%s406 + $0x18] sm:$0xff] %vm729, %v6510
      %6543 = vst.msk [vmem:[%s406 + $0x20] sm:$0xff] %vm729, %v6511
      %6544 = vst.msk [vmem:[%s406 + $0x28] sm:$0xff] %vm729, %v6512
      %6545 = vst.msk [vmem:[%s406 + $0x30] sm:$0xff] %vm729, %v6513
      %6546 = vst.msk [vmem:[%s406 + $0x38] sm:$0xff] %vm729, %v6514
      %6547 = vst.msk [vmem:[%s406 + $0x40] sm:$0xff] %vm729, %v6515
      %6548 = vst.msk [vmem:[%s406 + $0x48] sm:$0xff] %vm729, %v6516
      %6549 = vst.msk [vmem:[%s406 + $0x50] sm:$0xff] %vm729, %v6517
      %6550 = vst.msk [vmem:[%s406 + $0x58] sm:$0xff] %vm729, %v6518
      %6551 = vst.msk [vmem:[%s406 + $0x60] sm:$0xff] %vm729, %v6519
      %6552 = vst.msk [vmem:[%s406 + $0x68] sm:$0xff] %vm729, %v6520
      %6553 = vst.msk [vmem:[%s406 + $0x70] sm:$0xff] %vm729, %v6521
      %6554 = vst.msk [vmem:[%s406 + $0x78] sm:$0xff] %vm729, %v6522
      %6555 = vst.msk [vmem:[%s406 + $0x80] sm:$0xff] %vm729, %v6523
      %6556 = vst.msk [vmem:[%s406 + $0x88] sm:$0xff] %vm729, %v6524
      %6557 = vst.msk [vmem:[%s406 + $0x90] sm:$0xff] %vm729, %v6525
      %6558 = vst.msk [vmem:[%s406 + $0x98] sm:$0xff] %vm729, %v6526
      %6559 = vst.msk [vmem:[%s406 + $0xa0] sm:$0xff] %vm729, %v6527
      %6560 = vst.msk [vmem:[%s406 + $0xa8] sm:$0xff] %vm729, %v6528
      %6561 = vst.msk [vmem:[%s406 + $0xb0] sm:$0xff] %vm729, %v6529
      %6562 = vst.msk [vmem:[%s406 + $0xb8] sm:$0xff] %vm729, %v6530
      %6563 = vst.msk [vmem:[%s406 + $0xc0] sm:$0xff] %vm729, %v6531
      %6564 = vst.msk [vmem:[%s406 + $0xc8] sm:$0xff] %vm729, %v6532
      %6565 = vst.msk [vmem:[%s406 + $0xd0] sm:$0xff] %vm729, %v6533
      %6566 = vst.msk [vmem:[%s406 + $0xd8] sm:$0xff] %vm729, %v6534
      %6567 = vst.msk [vmem:[%s406 + $0xe0] sm:$0xff] %vm729, %v6535
      %6568 = vst.msk [vmem:[%s406 + $0xe8] sm:$0xff] %vm729, %v6536
      %6569 = vst.msk [vmem:[%s406 + $0xf0] sm:$0xff] %vm729, %v6537
      %6570 = vst.msk [vmem:[%s406 + $0xf8] sm:$0xff] %vm729, %v6538
      %p6571 = scmp.lt.s32.totalorder %s22, 1
      %s6572 = scalar_select %p6571, %s22, 1
      %s6573 = smul.addr %s6572, 32
      %s6574 = smul.addr %s6573, 8
      %s6575 = scalar_lea.vmem %s11, %s6574
      // Predicated region
      $region65: #{kernel_upblock_forward.1} parent=63 // pred_check
        %p6576 = pneg %p281
      $region66: #{kernel_upblock_forward.1} parent=63 // pred_check_branch
        %6578 = sbr.rel (%p6576) target = $region68
      $region67: #{kernel_upblock_forward.1} parent=63 // pred_region
        _
      $region68: #{kernel_upblock_forward.1} parent=63 // pred_fallthru
        _
    $region64: #{kernel_upblock_forward.1} parent=5 // pred_fallthru
      _
    %p6579 = scmp.le.s32.totalorder 2, %s17
    // Predicated region
    $region69: #{kernel_upblock_forward.1} parent=5 // pred_check
      %p6580 = pneg %p6579
    $region70: #{kernel_upblock_forward.1} parent=5 // pred_check_branch
      %6582 = sbr.rel (%p6580) target = $region72
    $region71: #{kernel_upblock_forward.1} parent=5 // pred_region
      %s6583 = ssub.s32 %s17, 2
      // Predicated region
      $region73: #{kernel_upblock_forward.1} parent=71 // pred_check
        %p6584 = pneg %p287
      $region74: #{kernel_upblock_forward.1} parent=71 // pred_check_branch
        %6586 = sbr.rel (%p6584) target = $region76
      $region75: #{kernel_upblock_forward.1} parent=71 // pred_region
        %p6587 = scmp.lt.s32.totalorder %s23, 1
        %s6588 = scalar_select %p6587, %s23, 1
        %s6589 = smul.addr %s6588, 32
        %s6590 = smul.addr %s6589, 8
        %s6591 = scalar_lea.vmem %s11, %s6590
      $region76: #{kernel_upblock_forward.1} parent=71 // pred_fallthru
        _
    $region72: #{kernel_upblock_forward.1} parent=5 // pred_fallthru
      _
  $region6: #{kernel_upblock_forward.1} parent=0 // loop_footer
    %s21 = sadd.s32 1, %s17
  $region7: #{kernel_upblock_forward.1} parent=0 // loop_footer_branch
    %16 = sbr.rel target = $region3
  $region8: #{kernel_upblock_forward.1} parent=0 // loop_exit
    _

</llo_original>
